<compile_context>
chip_gen: v5e
topology: v5e:2x2
jax: 0.10.0
libtpu: 0.0.40
codegen_flags: <defaults>
</compile_context>

<pallas_src>
import functools

import jax
import jax.numpy as jnp
from jax.experimental import pallas as pl
from jax.experimental.pallas import tpu as pltpu

# Keep reference (XLA) and in-kernel matmuls both at full f32 precision.
jax.config.update("jax_default_matmul_precision", "highest")

_EPS = 1e-5          # nn.BatchNorm2d default eps
_NEG_SLOPE = 0.01    # F.leaky_relu default negative slope

_PARALLEL = pltpu.CompilerParams(dimension_semantics=("parallel",))
_ARBITRARY = pltpu.CompilerParams(dimension_semantics=("arbitrary",))


# ----------------------------------------------------------------------------
# helpers
# ----------------------------------------------------------------------------
def _pick_tile(n, target, mult):
    """Largest multiple of `mult` <= target that divides n, else n (ungridded)."""
    if n <= target:
        return n
    t = (target // mult) * mult
    while t >= mult:
        if n % t == 0:
            return t
        t -= mult
    return n


def _full_spec(arr):
    return pl.BlockSpec(arr.shape, lambda i: (0, 0))


def _leaky(y):
    return jnp.where(y >= 0, y, _NEG_SLOPE * y)


# ----------------------------------------------------------------------------
# Pallas kernels
# ----------------------------------------------------------------------------
def _encoder_kernel(w1, b1, w2, b2, w3, b3, w4, b4, x_ref, o_ref):
    """Fused 4x 1x1-conv: leaky_relu on first three layers, clamp01 on last."""
    h = x_ref[...]
    h = _leaky(jnp.dot(w1[...], h, preferred_element_type=jnp.float32) + b1[...])
    h = _leaky(jnp.dot(w2[...], h, preferred_element_type=jnp.float32) + b2[...])
    h = _leaky(jnp.dot(w3[...], h, preferred_element_type=jnp.float32) + b3[...])
    y = jnp.dot(w4[...], h, preferred_element_type=jnp.float32) + b4[...]
    o_ref[...] = jnp.clip(y, 0.0, 1.0).astype(o_ref.dtype)


def _matmul_kernel(w_ref, x_ref, o_ref):
    """No-bias, no-activation 1x1 conv: o = w @ x."""
    o_ref[...] = jnp.dot(w_ref[...], x_ref[...],
                         preferred_element_type=jnp.float32).astype(o_ref.dtype)


def _psf_kernel(x_ref, s_ref, o_ref):
    """PSF as (TM, r*W) @ (r*W, Wh) against a precomputed selection matrix."""
    o_ref[...] = jnp.dot(x_ref[...], s_ref[...],
                         preferred_element_type=jnp.float32).astype(o_ref.dtype)


def _tail_stats_kernel(e_ref, srf_ref, a_ref, x_out, y_out, sum_ref, ssq_ref):
    """Fused X_ = E @ A, y = SRF_w @ X_, plus per-channel sum / sum-of-squares."""
    @pl.when(pl.program_id(0) == 0)
    def _():
        sum_ref[...] = jnp.zeros_like(sum_ref)
        ssq_ref[...] = jnp.zeros_like(ssq_ref)

    x = jnp.dot(e_ref[...], a_ref[...], preferred_element_type=jnp.float32)
    y = jnp.dot(srf_ref[...], x, preferred_element_type=jnp.float32)
    x_out[...] = x.astype(x_out.dtype)
    y_out[...] = y.astype(y_out.dtype)
    sum_ref[...] += jnp.sum(y, axis=1, keepdims=True)
    ssq_ref[...] += jnp.sum(y * y, axis=1, keepdims=True)


def _srf_stats_kernel(srf_ref, x_ref, y_out, sum_ref, ssq_ref):
    """y = SRF_w @ x plus per-channel sum / sum-of-squares (BN phase 1)."""
    @pl.when(pl.program_id(0) == 0)
    def _():
        sum_ref[...] = jnp.zeros_like(sum_ref)
        ssq_ref[...] = jnp.zeros_like(ssq_ref)

    y = jnp.dot(srf_ref[...], x_ref[...], preferred_element_type=jnp.float32)
    y_out[...] = y.astype(y_out.dtype)
    sum_ref[...] += jnp.sum(y, axis=1, keepdims=True)
    ssq_ref[...] += jnp.sum(y * y, axis=1, keepdims=True)


def _bn_finalize_kernel(sum_ref, ssq_ref, y_ref, o_ref, *, n_pixels):
    """BN phase 2: normalize with full-image batch stats, then clamp01."""
    mean = sum_ref[...] * (1.0 / n_pixels)
    var = ssq_ref[...] * (1.0 / n_pixels) - mean * mean   # biased var (BN)
    inv = jax.lax.rsqrt(var + _EPS)
    o_ref[...] = jnp.clip((y_ref[...] - mean) * inv, 0.0, 1.0).astype(o_ref.dtype)


# ----------------------------------------------------------------------------
# Wrappers (glue: free reshapes + pallas_call plumbing only)
# ----------------------------------------------------------------------------
def encoder(x_chw, layers, tile_p):
    c, h, w = x_chw.shape
    P = h * w
    T = _pick_tile(P, tile_p, 128)
    args, in_specs = [], []
    for wgt, b in layers:
        b2 = b.reshape(-1, 1)
        args += [wgt, b2]
        in_specs += [_full_spec(wgt), _full_spec(b2)]
    args.append(x_chw.reshape(c, P))
    in_specs.append(pl.BlockSpec((c, T), lambda i: (0, i)))
    cout = layers[-1][0].shape[0]
    out = pl.pallas_call(
        _encoder_kernel,
        grid=(P // T,),
        in_specs=in_specs,
        out_specs=pl.BlockSpec((cout, T), lambda i: (0, i)),
        out_shape=jax.ShapeDtypeStruct((cout, P), jnp.float32),
        compiler_params=_PARALLEL,
    )(*args)
    return out.reshape(cout, h, w)


def conv1x1_nobias(x_chw, w, tile_p):
    c, h, wd = x_chw.shape
    P = h * wd
    T = _pick_tile(P, tile_p, 128)
    cout = w.shape[0]
    out = pl.pallas_call(
        _matmul_kernel,
        grid=(P // T,),
        in_specs=[_full_spec(w), pl.BlockSpec((c, T), lambda i: (0, i))],
        out_specs=pl.BlockSpec((cout, T), lambda i: (0, i)),
        out_shape=jax.ShapeDtypeStruct((cout, P), jnp.float32),
        compiler_params=_PARALLEL,
    )(w, x_chw.reshape(c, P))
    return out.reshape(cout, h, wd)


def psf(x_chw, psf_k, tile_p):
    """Per-band r x r, stride-r conv with a shared kernel."""
    c, h, w = x_chw.shape
    r = psf_k.shape[0]
    hh, wh = h // r, w // r
    m, kd = c * hh, r * w
    # Row-major identity: x[c, i*r + a, w'] == x2[c*hh + i, a*w + w']  (free reshape)
    x2 = x_chw.reshape(m, kd)
    # Selection matrix: S[a*w + w', j] = k[a, w' - j*r] when 0 <= w' - j*r < r.
    aw = jnp.arange(kd)
    a_idx, w_idx = aw // w, aw % w
    b = w_idx[:, None] - jnp.arange(wh)[None, :] * r
    s = jnp.where((b >= 0) & (b < r),
                  psf_k[a_idx[:, None], jnp.clip(b, 0, r - 1)],
                  0.0).astype(jnp.float32)
    tm = _pick_tile(m, tile_p, 8)
    out = pl.pallas_call(
        _psf_kernel,
        grid=(m // tm,),
        in_specs=[pl.BlockSpec((tm, kd), lambda i: (i, 0)), _full_spec(s)],
        out_specs=pl.BlockSpec((tm, wh), lambda i: (i, 0)),
        out_shape=jax.ShapeDtypeStruct((m, wh), jnp.float32),
        compiler_params=_PARALLEL,
    )(x2, s)
    return out.reshape(c, hh, wh)


def _bn_finalize(y_num, s, ss, hw, tile_p):
    cout, P = y_num.shape
    T = _pick_tile(P, tile_p, 128)
    kernel = functools.partial(_bn_finalize_kernel, n_pixels=float(P))
    out = pl.pallas_call(
        kernel,
        grid=(P // T,),
        in_specs=[_full_spec(s), _full_spec(ss),
                  pl.BlockSpec((cout, T), lambda i: (0, i))],
        out_specs=pl.BlockSpec((cout, T), lambda i: (0, i)),
        out_shape=jax.ShapeDtypeStruct((cout, P), jnp.float32),
        compiler_params=_PARALLEL,
    )(s, ss, y_num)
    return out.reshape(cout, *hw)


def srf(x_chw, srf_w, tile_p):
    """SRF: 1x1 conv (no bias) + BatchNorm2d(affine=False, training) + clamp."""
    c, h, w = x_chw.shape
    P = h * w
    T = _pick_tile(P, tile_p, 128)
    cout = srf_w.shape[0]
    y_num, s, ss = pl.pallas_call(
        _srf_stats_kernel,
        grid=(P // T,),
        in_specs=[_full_spec(srf_w), pl.BlockSpec((c, T), lambda i: (0, i))],
        out_specs=(pl.BlockSpec((cout, T), lambda i: (0, i)),
                   pl.BlockSpec((cout, 1), lambda i: (0, 0)),
                   pl.BlockSpec((cout, 1), lambda i: (0, 0))),
        out_shape=(jax.ShapeDtypeStruct((cout, P), jnp.float32),
                   jax.ShapeDtypeStruct((cout, 1), jnp.float32),
                   jax.ShapeDtypeStruct((cout, 1), jnp.float32)),
        compiler_params=_ARBITRARY,
    )(srf_w, x_chw.reshape(c, P))
    return _bn_finalize(y_num, s, ss, (h, w), tile_p)


def endmember_srf_tail(a_chw, e_w, srf_w, tile_p):
    """Fused X_ = Econv(A) and phase-1 of Y_ = SRF(X_), then BN finalize."""
    cp, h, w = a_chw.shape
    P = h * w
    T = _pick_tile(P, tile_p, 128)
    n_sp = e_w.shape[0]
    cm = srf_w.shape[0]
    x_, y_num, s, ss = pl.pallas_call(
        _tail_stats_kernel,
        grid=(P // T,),
        in_specs=[_full_spec(e_w), _full_spec(srf_w),
                  pl.BlockSpec((cp, T), lambda i: (0, i))],
        out_specs=(pl.BlockSpec((n_sp, T), lambda i: (0, i)),
                   pl.BlockSpec((cm, T), lambda i: (0, i)),
                   pl.BlockSpec((cm, 1), lambda i: (0, 0)),
                   pl.BlockSpec((cm, 1), lambda i: (0, 0))),
        out_shape=(jax.ShapeDtypeStruct((n_sp, P), jnp.float32),
                   jax.ShapeDtypeStruct((cm, P), jnp.float32),
                   jax.ShapeDtypeStruct((cm, 1), jnp.float32),
                   jax.ShapeDtypeStruct((cm, 1), jnp.float32)),
        compiler_params=_ARBITRARY,
    )(e_w, srf_w, a_chw.reshape(cp, P))
    Y_ = _bn_finalize(y_num, s, ss, (h, w), tile_p)
    return x_.reshape(n_sp, h, w), Y_


# ----------------------------------------------------------------------------
# Model: parameters + forward
# ----------------------------------------------------------------------------
def init_params(key, n_spectral, msi_ch, p, gsd_ratio):
    h_int_lr = (p - n_spectral) // 4
    d1_lr = n_spectral + h_int_lr
    d2_lr = d1_lr + h_int_lr
    d3_lr = d2_lr + h_int_lr
    h_int_hr = (msi_ch - n_spectral) // 4
    d1_hr = n_spectral + h_int_hr
    d2_hr = d1_hr + h_int_hr
    d3_hr = d2_hr + h_int_hr

    def lin(k, cout, cin):
        kw, kb = jax.random.split(k)
        bound = 1.0 / jnp.sqrt(cin)
        w = jax.random.uniform(kw, (cout, cin), jnp.float32, -bound, bound)
        b = jax.random.uniform(kb, (cout,), jnp.float32, -bound, bound)
        return w, b

    keys = jax.random.split(key, 12)
    params = {}
    params["w1_lr"], params["b1_lr"] = lin(keys[0], d1_lr, n_spectral)
    params["w2_lr"], params["b2_lr"] = lin(keys[1], d2_lr, d1_lr)
    params["w3_lr"], params["b3_lr"] = lin(keys[2], d3_lr, d2_lr)
    params["w4_lr"], params["b4_lr"] = lin(keys[3], p, d3_lr)
    params["w1_hr"], params["b1_hr"] = lin(keys[4], d1_hr, msi_ch)
    params["w2_hr"], params["b2_hr"] = lin(keys[5], d2_hr, d1_hr)
    params["w3_hr"], params["b3_hr"] = lin(keys[6], d3_hr, d2_hr)
    params["w4_hr"], params["b4_hr"] = lin(keys[7], p, d3_hr)
    params["srf_w"], _ = lin(keys[8], msi_ch, n_spectral)            # no bias
    pk, _ = lin(keys[9], 1, gsd_ratio * gsd_ratio)                   # fan_in = r*r
    params["psf_k"] = pk.reshape(gsd_ratio, gsd_ratio)               # (r, r)
    params["e_w"], _ = lin(keys[10], n_spectral, p)                  # no bias
    return params


def forward(params, Z, Y, tile_p=2048):
    lr = [(params["w1_lr"], params["b1_lr"]), (params["w2_lr"], params["b2_lr"]),
          (params["w3_lr"], params["b3_lr"]), (params["w4_lr"], params["b4_lr"])]
    hr = [(params["w1_hr"], params["b1_hr"]), (params["w2_hr"], params["b2_hr"]),
          (params["w3_hr"], params["b3_hr"]), (params["w4_hr"], params["b4_hr"])]
    # encoders (fused 4-layer chains)
    Ah_a = encoder(Z, lr, tile_p)
    A = encoder(Y, hr, tile_p)
    # spatial degradation
    Ah_b = psf(A, params["psf_k"], tile_p)
    lrMSI_Y = psf(Y, params["psf_k"], tile_p)
    # endmembers (1x1 conv, no bias)
    Za = conv1x1_nobias(Ah_a, params["e_w"], tile_p)
    Zb = conv1x1_nobias(Ah_b, params["e_w"], tile_p)
    # fused endmembers + spectral degradation tail
    X_, Y_ = endmember_srf_tail(A, params["e_w"], params["srf_w"], tile_p)
    lrMSI_Z = srf(Z, params["srf_w"], tile_p)
    return (X_, Y_, Za, Zb, A, Ah_a, Ah_b, lrMSI_Z, lrMSI_Y)


# ----------------------------------------------------------------------------
# Pure-JAX reference (for correctness check)
# ----------------------------------------------------------------------------
def _ref_conv1x1(x, w, b, act):
    c, h, wd = x.shape
    y = w @ x.reshape(c, h * wd) + b.reshape(-1, 1)
    if act == "leaky_relu":
        y = jnp.where(y >= 0, y, 0.01 * y)
    elif act == "clamp01":
        y = jnp.clip(y, 0.0, 1.0)
    return y.reshape(w.shape[0], h, wd)


def _ref_psf(x, k):
    c, h, w = x.shape
    r = k.shape[0]
    xs = x.reshape(c, h // r, r, w // r, r)
    return jnp.einsum("chrws,rs->chw", xs, k)


def _ref_srf(x, w):
    c, h, wd = x.shape
    y = w @ x.reshape(c, h * wd)
    m = jnp.mean(y, axis=1, keepdims=True)
    v = jnp.mean((y - m) ** 2, axis=1, keepdims=True)
    y = (y - m) / jnp.sqrt(v + _EPS)
    return jnp.clip(y, 0.0, 1.0).reshape(w.shape[0], h, wd)


def forward_ref(params, Z, Y):
    h = _ref_conv1x1(Z, params["w1_lr"], params["b1_lr"], "leaky_relu")
    h = _ref_conv1x1(h, params["w2_lr"], params["b2_lr"], "leaky_relu")
    h = _ref_conv1x1(h, params["w3_lr"], params["b3_lr"], "leaky_relu")
    Ah_a = _ref_conv1x1(h, params["w4_lr"], params["b4_lr"], "clamp01")
    h = _ref_conv1x1(Y, params["w1_hr"], params["b1_hr"], "leaky_relu")
    h = _ref_conv1x1(h, params["w2_hr"], params["b2_hr"], "leaky_relu")
    h = _ref_conv1x1(h, params["w3_hr"], params["b3_hr"], "leaky_relu")
    A = _ref_conv1x1(h, params["w4_hr"], params["b4_hr"], "clamp01")
    Ah_b = _ref_psf(A, params["psf_k"])
    lrMSI_Y = _ref_psf(Y, params["psf_k"])
    zb = jnp.zeros((params["e_w"].shape[0],), jnp.float32)
    Za = _ref_conv1x1(Ah_a, params["e_w"], zb, "none")
    Zb = _ref_conv1x1(Ah_b, params["e_w"], zb, "none")
    X_ = _ref_conv1x1(A, params["e_w"], zb, "none")
    Y_ = _ref_srf(X_, params["srf_w"])
    lrMSI_Z = _ref_srf(Z, params["srf_w"])
    return (X_, Y_, Za, Zb, A, Ah_a, Ah_b, lrMSI_Z, lrMSI_Y)


# ----------------------------------------------------------------------------
if __name__ == "__main__":
    # Small, consistent shapes (CHW after the in-forward reshape):
    #   HSI Z: (n_spectral=8,  8,  8), MSI Y: (msi_ch=4, 16, 16)
    #   p (endmembers) = 16, GSD_ratio = 16 // 8 = 2
    n_spectral, msi_ch = 8, 4
    hsi_hw, msi_hw = 8, 16
    p = 16
    gsd_ratio = msi_hw // hsi_hw

    key = jax.random.PRNGKey(0)
    kp, kz, ky = jax.random.split(key, 3)
    params = init_params(kp, n_spectral, msi_ch, p, gsd_ratio)
    Z = jax.random.uniform(kz, (n_spectral, hsi_hw, hsi_hw), jnp.float32)
    Y = jax.random.uniform(ky, (msi_ch, msi_hw, msi_hw), jnp.float32)

    # tile_p=128 so the MSI-resolution path exercises a 2-tile grid (and the
    # two-phase BatchNorm reduction genuinely spans multiple tiles).
    fwd = jax.jit(functools.partial(forward, tile_p=128))
    outs = jax.block_until_ready(fwd(params, Z, Y))

    refs = forward_ref(params, Z, Y)
    names = ["X_", "Y_", "Za", "Zb", "A", "Ah_a", "Ah_b", "lrMSI_Z", "lrMSI_Y"]
    for name, o, r in zip(names, outs, refs):
        assert o.shape == r.shape, (name, o.shape, r.shape)
        err = float(jnp.max(jnp.abs(o - r)))
        assert jnp.allclose(o, r, atol=2e-4, rtol=2e-4), (name, err)

    print("KERNEL_OK")
</pallas_src>

<mosaic_0001>
module attributes {stable_mosaic.version = 11 : i64} {
  func.func @_tail_stats_kernel(%arg0: i32, %arg1: memref<8x16xf32, #tpu.memory_space<vmem>>, %arg2: memref<4x8xf32, #tpu.memory_space<vmem>>, %arg3: memref<16x128xf32, #tpu.memory_space<vmem>>, %arg4: memref<8x128xf32, #tpu.memory_space<vmem>>, %arg5: memref<4x128xf32, #tpu.memory_space<vmem>>, %arg6: memref<4x1xf32, #tpu.memory_space<vmem>>, %arg7: memref<4x1xf32, #tpu.memory_space<vmem>>) attributes {dimension_semantics = [#tpu.dimension_semantics<arbitrary>], iteration_bounds = array<i64: 2>, scalar_prefetch = 0 : i64, scratch_operands = 0 : i64, tpu.core_type = #tpu.core_type<tc>, window_params = [{pipeline_mode = #tpu.pipeline_mode<synchronous>, transform_indices = @transform_0, window_bounds = array<i64: 8, 16>}, {pipeline_mode = #tpu.pipeline_mode<synchronous>, transform_indices = @transform_1, window_bounds = array<i64: 4, 8>}, {transform_indices = @transform_2, window_bounds = array<i64: 16, 128>}, {transform_indices = @transform_3, window_bounds = array<i64: 8, 128>}, {transform_indices = @transform_4, window_bounds = array<i64: 4, 128>}, {pipeline_mode = #tpu.pipeline_mode<synchronous>, transform_indices = @transform_5, window_bounds = array<i64: 4, 1>}, {pipeline_mode = #tpu.pipeline_mode<synchronous>, transform_indices = @transform_6, window_bounds = array<i64: 4, 1>}]} {
    %c0_i32 = arith.constant 0 : i32
    %0 = arith.cmpi eq, %arg0, %c0_i32 : i32
    %1 = arith.extui %0 : i1 to i32
    %c0_i32_0 = arith.constant 0 : i32
    %2 = arith.cmpi ne, %1, %c0_i32_0 : i32
    scf.if %2 {
      %cst_21 = arith.constant 0.000000e+00 : f32
      %21 = vector.broadcast %cst_21 : f32 to vector<4x1xf32>
      %c0_22 = arith.constant 0 : index
      %c0_23 = arith.constant 0 : index
      %22 = vector.load %arg6[%c0_22, %c0_23] : memref<4x1xf32, #tpu.memory_space<vmem>>, vector<4x1xf32>
      tpu.vector_store %arg6[%c0_22, %c0_23], %21 {strides = array<i32>} : memref<4x1xf32, #tpu.memory_space<vmem>>, vector<4x1xf32>,
      %cst_24 = arith.constant 0.000000e+00 : f32
      %23 = vector.broadcast %cst_24 : f32 to vector<4x1xf32>
      %c0_25 = arith.constant 0 : index
      %c0_26 = arith.constant 0 : index
      %24 = vector.load %arg7[%c0_25, %c0_26] : memref<4x1xf32, #tpu.memory_space<vmem>>, vector<4x1xf32>
      tpu.vector_store %arg7[%c0_25, %c0_26], %23 {strides = array<i32>} : memref<4x1xf32, #tpu.memory_space<vmem>>, vector<4x1xf32>,
    } else {
    }
    %c0 = arith.constant 0 : index
    %c0_1 = arith.constant 0 : index
    %3 = vector.load %arg1[%c0, %c0_1] : memref<8x16xf32, #tpu.memory_space<vmem>>, vector<8x16xf32>
    %c0_2 = arith.constant 0 : index
    %c0_3 = arith.constant 0 : index
    %4 = vector.load %arg3[%c0_2, %c0_3] : memref<16x128xf32, #tpu.memory_space<vmem>>, vector<16x128xf32>
    %cst = arith.constant dense<0.000000e+00> : vector<8x128xf32>
    %5 = tpu.matmul %3, %4, %cst {dimension_numbers = #tpu.dot_dimension_numbers<[1], [0], [0], [1], [0, 0, 1, 1], [], []>, precision = #tpu.contract_precision<fp32>} : vector<8x16xf32>, vector<16x128xf32>, vector<8x128xf32> -> vector<8x128xf32>
    %c0_4 = arith.constant 0 : index
    %c0_5 = arith.constant 0 : index
    %6 = vector.load %arg2[%c0_4, %c0_5] : memref<4x8xf32, #tpu.memory_space<vmem>>, vector<4x8xf32>
    %cst_6 = arith.constant dense<0.000000e+00> : vector<4x128xf32>
    %7 = tpu.matmul %6, %5, %cst_6 {dimension_numbers = #tpu.dot_dimension_numbers<[1], [0], [0], [1], [0, 0, 1, 1], [], []>, precision = #tpu.contract_precision<fp32>} : vector<4x8xf32>, vector<8x128xf32>, vector<4x128xf32> -> vector<4x128xf32>
    %c0_7 = arith.constant 0 : index
    %c0_8 = arith.constant 0 : index
    %8 = vector.load %arg4[%c0_7, %c0_8] : memref<8x128xf32, #tpu.memory_space<vmem>>, vector<8x128xf32>
    tpu.vector_store %arg4[%c0_7, %c0_8], %5 {strides = array<i32>} : memref<8x128xf32, #tpu.memory_space<vmem>>, vector<8x128xf32>,
    %c0_9 = arith.constant 0 : index
    %c0_10 = arith.constant 0 : index
    %9 = vector.load %arg5[%c0_9, %c0_10] : memref<4x128xf32, #tpu.memory_space<vmem>>, vector<4x128xf32>
    tpu.vector_store %arg5[%c0_9, %c0_10], %7 {strides = array<i32>} : memref<4x128xf32, #tpu.memory_space<vmem>>, vector<4x128xf32>,
    %c0_11 = arith.constant 0 : index
    %c0_12 = arith.constant 0 : index
    %10 = vector.load %arg6[%c0_11, %c0_12] : memref<4x1xf32, #tpu.memory_space<vmem>>, vector<4x1xf32>
    %cst_13 = arith.constant dense<0.000000e+00> : vector<4xf32>
    %11 = vector.multi_reduction <add>, %7, %cst_13 [1] : vector<4x128xf32> to vector<4xf32>
    %12 = vector.shape_cast %11 : vector<4xf32> to vector<4x1xf32>
    %13 = arith.addf %10, %12 : vector<4x1xf32>
    %c0_14 = arith.constant 0 : index
    %c0_15 = arith.constant 0 : index
    %14 = vector.load %arg6[%c0_14, %c0_15] : memref<4x1xf32, #tpu.memory_space<vmem>>, vector<4x1xf32>
    tpu.vector_store %arg6[%c0_14, %c0_15], %13 {strides = array<i32>} : memref<4x1xf32, #tpu.memory_space<vmem>>, vector<4x1xf32>,
    %c0_16 = arith.constant 0 : index
    %c0_17 = arith.constant 0 : index
    %15 = vector.load %arg7[%c0_16, %c0_17] : memref<4x1xf32, #tpu.memory_space<vmem>>, vector<4x1xf32>
    %16 = arith.mulf %7, %7 : vector<4x128xf32>
    %cst_18 = arith.constant dense<0.000000e+00> : vector<4xf32>
    %17 = vector.multi_reduction <add>, %16, %cst_18 [1] : vector<4x128xf32> to vector<4xf32>
    %18 = vector.shape_cast %17 : vector<4xf32> to vector<4x1xf32>
    %19 = arith.addf %15, %18 : vector<4x1xf32>
    %c0_19 = arith.constant 0 : index
    %c0_20 = arith.constant 0 : index
    %20 = vector.load %arg7[%c0_19, %c0_20] : memref<4x1xf32, #tpu.memory_space<vmem>>, vector<4x1xf32>
    tpu.vector_store %arg7[%c0_19, %c0_20], %19 {strides = array<i32>} : memref<4x1xf32, #tpu.memory_space<vmem>>, vector<4x1xf32>,
    return
  }
  func.func @transform_0(%arg0: i32) -> (i32, i32) {
    %c0_i32 = arith.constant 0 : i32
    %c0_i32_0 = arith.constant 0 : i32
    %c0_i32_1 = arith.constant 0 : i32
    return %c0_i32, %c0_i32_0 : i32, i32
  }
  func.func @transform_1(%arg0: i32) -> (i32, i32) {
    %c0_i32 = arith.constant 0 : i32
    %c0_i32_0 = arith.constant 0 : i32
    %c0_i32_1 = arith.constant 0 : i32
    return %c0_i32, %c0_i32_0 : i32, i32
  }
  func.func @transform_2(%arg0: i32) -> (i32, i32) {
    %c0_i32 = arith.constant 0 : i32
    %c0_i32_0 = arith.constant 0 : i32
    return %c0_i32, %arg0 : i32, i32
  }
  func.func @transform_3(%arg0: i32) -> (i32, i32) {
    %c0_i32 = arith.constant 0 : i32
    %c0_i32_0 = arith.constant 0 : i32
    return %c0_i32, %arg0 : i32, i32
  }
  func.func @transform_4(%arg0: i32) -> (i32, i32) {
    %c0_i32 = arith.constant 0 : i32
    %c0_i32_0 = arith.constant 0 : i32
    return %c0_i32, %arg0 : i32, i32
  }
  func.func @transform_5(%arg0: i32) -> (i32, i32) {
    %c0_i32 = arith.constant 0 : i32
    %c0_i32_0 = arith.constant 0 : i32
    %c0_i32_1 = arith.constant 0 : i32
    return %c0_i32, %c0_i32_0 : i32, i32
  }
  func.func @transform_6(%arg0: i32) -> (i32, i32) {
    %c0_i32 = arith.constant 0 : i32
    %c0_i32_0 = arith.constant 0 : i32
    %c0_i32_1 = arith.constant 0 : i32
    return %c0_i32, %c0_i32_0 : i32, i32
  }
}

module attributes {stable_mosaic.version = 11 : i64} {
  func.func @_bn_finalize_kernel(%arg0: i32, %arg1: memref<4x1xf32, #tpu.memory_space<vmem>>, %arg2: memref<4x1xf32, #tpu.memory_space<vmem>>, %arg3: memref<4x128xf32, #tpu.memory_space<vmem>>, %arg4: memref<4x128xf32, #tpu.memory_space<vmem>>) attributes {dimension_semantics = [#tpu.dimension_semantics<parallel>], iteration_bounds = array<i64: 2>, scalar_prefetch = 0 : i64, scratch_operands = 0 : i64, tpu.core_type = #tpu.core_type<tc>, window_params = [{pipeline_mode = #tpu.pipeline_mode<synchronous>, transform_indices = @transform_0, window_bounds = array<i64: 4, 1>}, {pipeline_mode = #tpu.pipeline_mode<synchronous>, transform_indices = @transform_1, window_bounds = array<i64: 4, 1>}, {transform_indices = @transform_2, window_bounds = array<i64: 4, 128>}, {transform_indices = @transform_3, window_bounds = array<i64: 4, 128>}]} {
    %c0 = arith.constant 0 : index
    %c0_0 = arith.constant 0 : index
    %0 = vector.load %arg1[%c0, %c0_0] : memref<4x1xf32, #tpu.memory_space<vmem>>, vector<4x1xf32>
    %cst = arith.constant 3.906250e-03 : f32
    %1 = vector.broadcast %cst : f32 to vector<4x1xf32>
    %2 = arith.mulf %0, %1 : vector<4x1xf32>
    %c0_1 = arith.constant 0 : index
    %c0_2 = arith.constant 0 : index
    %3 = vector.load %arg2[%c0_1, %c0_2] : memref<4x1xf32, #tpu.memory_space<vmem>>, vector<4x1xf32>
    %cst_3 = arith.constant 3.906250e-03 : f32
    %4 = vector.broadcast %cst_3 : f32 to vector<4x1xf32>
    %5 = arith.mulf %3, %4 : vector<4x1xf32>
    %6 = arith.mulf %2, %2 : vector<4x1xf32>
    %7 = arith.subf %5, %6 : vector<4x1xf32>
    %cst_4 = arith.constant 9.99999974E-6 : f32
    %8 = vector.broadcast %cst_4 : f32 to vector<4x1xf32>
    %9 = arith.addf %7, %8 : vector<4x1xf32>
    %10 = math.rsqrt %9 : vector<4x1xf32>
    %c0_5 = arith.constant 0 : index
    %c0_6 = arith.constant 0 : index
    %11 = vector.load %arg3[%c0_5, %c0_6] : memref<4x128xf32, #tpu.memory_space<vmem>>, vector<4x128xf32>
    %12 = vector.broadcast %2 : vector<4x1xf32> to vector<4x128xf32>
    %13 = arith.subf %11, %12 : vector<4x128xf32>
    %14 = vector.broadcast %10 : vector<4x1xf32> to vector<4x128xf32>
    %15 = arith.mulf %13, %14 : vector<4x128xf32>
    %cst_7 = arith.constant 0.000000e+00 : f32
    %cst_8 = arith.constant 1.000000e+00 : f32
    %16 = vector.broadcast %cst_7 : f32 to vector<4x128xf32>
    %17 = arith.maximumf %16, %15 : vector<4x128xf32>
    %18 = vector.broadcast %cst_8 : f32 to vector<4x128xf32>
    %19 = arith.minimumf %18, %17 : vector<4x128xf32>
    %c0_9 = arith.constant 0 : index
    %c0_10 = arith.constant 0 : index
    %20 = vector.load %arg4[%c0_9, %c0_10] : memref<4x128xf32, #tpu.memory_space<vmem>>, vector<4x128xf32>
    tpu.vector_store %arg4[%c0_9, %c0_10], %19 {strides = array<i32>} : memref<4x128xf32, #tpu.memory_space<vmem>>, vector<4x128xf32>,
    return
  }
  func.func @transform_0(%arg0: i32) -> (i32, i32) {
    %c0_i32 = arith.constant 0 : i32
    %c0_i32_0 = arith.constant 0 : i32
    %c0_i32_1 = arith.constant 0 : i32
    return %c0_i32, %c0_i32_0 : i32, i32
  }
  func.func @transform_1(%arg0: i32) -> (i32, i32) {
    %c0_i32 = arith.constant 0 : i32
    %c0_i32_0 = arith.constant 0 : i32
    %c0_i32_1 = arith.constant 0 : i32
    return %c0_i32, %c0_i32_0 : i32, i32
  }
  func.func @transform_2(%arg0: i32) -> (i32, i32) {
    %c0_i32 = arith.constant 0 : i32
    %c0_i32_0 = arith.constant 0 : i32
    return %c0_i32, %arg0 : i32, i32
  }
  func.func @transform_3(%arg0: i32) -> (i32, i32) {
    %c0_i32 = arith.constant 0 : i32
    %c0_i32_0 = arith.constant 0 : i32
    return %c0_i32, %arg0 : i32, i32
  }
}

module attributes {stable_mosaic.version = 11 : i64} {
  func.func @_encoder_kernel(%arg0: i32, %arg1: memref<7x4xf32, #tpu.memory_space<vmem>>, %arg2: memref<7x1xf32, #tpu.memory_space<vmem>>, %arg3: memref<6x7xf32, #tpu.memory_space<vmem>>, %arg4: memref<6x1xf32, #tpu.memory_space<vmem>>, %arg5: memref<5x6xf32, #tpu.memory_space<vmem>>, %arg6: memref<5x1xf32, #tpu.memory_space<vmem>>, %arg7: memref<16x5xf32, #tpu.memory_space<vmem>>, %arg8: memref<16x1xf32, #tpu.memory_space<vmem>>, %arg9: memref<4x128xf32, #tpu.memory_space<vmem>>, %arg10: memref<16x128xf32, #tpu.memory_space<vmem>>) attributes {dimension_semantics = [#tpu.dimension_semantics<parallel>], iteration_bounds = array<i64: 2>, scalar_prefetch = 0 : i64, scratch_operands = 0 : i64, tpu.core_type = #tpu.core_type<tc>, window_params = [{pipeline_mode = #tpu.pipeline_mode<synchronous>, transform_indices = @transform_0, window_bounds = array<i64: 7, 4>}, {pipeline_mode = #tpu.pipeline_mode<synchronous>, transform_indices = @transform_1, window_bounds = array<i64: 7, 1>}, {pipeline_mode = #tpu.pipeline_mode<synchronous>, transform_indices = @transform_2, window_bounds = array<i64: 6, 7>}, {pipeline_mode = #tpu.pipeline_mode<synchronous>, transform_indices = @transform_3, window_bounds = array<i64: 6, 1>}, {pipeline_mode = #tpu.pipeline_mode<synchronous>, transform_indices = @transform_4, window_bounds = array<i64: 5, 6>}, {pipeline_mode = #tpu.pipeline_mode<synchronous>, transform_indices = @transform_5, window_bounds = array<i64: 5, 1>}, {pipeline_mode = #tpu.pipeline_mode<synchronous>, transform_indices = @transform_6, window_bounds = array<i64: 16, 5>}, {pipeline_mode = #tpu.pipeline_mode<synchronous>, transform_indices = @transform_7, window_bounds = array<i64: 16, 1>}, {transform_indices = @transform_8, window_bounds = array<i64: 4, 128>}, {transform_indices = @transform_9, window_bounds = array<i64: 16, 128>}]} {
    %c0 = arith.constant 0 : index
    %c0_0 = arith.constant 0 : index
    %0 = vector.load %arg9[%c0, %c0_0] : memref<4x128xf32, #tpu.memory_space<vmem>>, vector<4x128xf32>
    %c0_1 = arith.constant 0 : index
    %c0_2 = arith.constant 0 : index
    %1 = vector.load %arg1[%c0_1, %c0_2] : memref<7x4xf32, #tpu.memory_space<vmem>>, vector<7x4xf32>
    %cst = arith.constant dense<0.000000e+00> : vector<7x128xf32>
    %2 = tpu.matmul %1, %0, %cst {dimension_numbers = #tpu.dot_dimension_numbers<[1], [0], [0], [1], [0, 0, 1, 1], [], []>, precision = #tpu.contract_precision<fp32>} : vector<7x4xf32>, vector<4x128xf32>, vector<7x128xf32> -> vector<7x128xf32>
    %c0_3 = arith.constant 0 : index
    %c0_4 = arith.constant 0 : index
    %3 = vector.load %arg2[%c0_3, %c0_4] : memref<7x1xf32, #tpu.memory_space<vmem>>, vector<7x1xf32>
    %4 = vector.broadcast %3 : vector<7x1xf32> to vector<7x128xf32>
    %5 = arith.addf %2, %4 : vector<7x128xf32>
    %cst_5 = arith.constant 0.000000e+00 : f32
    %6 = vector.broadcast %cst_5 : f32 to vector<7x128xf32>
    %7 = arith.cmpf oge, %5, %6 : vector<7x128xf32>
    %cst_6 = arith.constant 0.00999999977 : f32
    %8 = vector.broadcast %cst_6 : f32 to vector<7x128xf32>
    %9 = arith.mulf %8, %5 : vector<7x128xf32>
    %10 = arith.select %7, %5, %9 : vector<7x128xi1>, vector<7x128xf32>
    %c0_7 = arith.constant 0 : index
    %c0_8 = arith.constant 0 : index
    %11 = vector.load %arg3[%c0_7, %c0_8] : memref<6x7xf32, #tpu.memory_space<vmem>>, vector<6x7xf32>
    %cst_9 = arith.constant dense<0.000000e+00> : vector<6x128xf32>
    %12 = tpu.matmul %11, %10, %cst_9 {dimension_numbers = #tpu.dot_dimension_numbers<[1], [0], [0], [1], [0, 0, 1, 1], [], []>, precision = #tpu.contract_precision<fp32>} : vector<6x7xf32>, vector<7x128xf32>, vector<6x128xf32> -> vector<6x128xf32>
    %c0_10 = arith.constant 0 : index
    %c0_11 = arith.constant 0 : index
    %13 = vector.load %arg4[%c0_10, %c0_11] : memref<6x1xf32, #tpu.memory_space<vmem>>, vector<6x1xf32>
    %14 = vector.broadcast %13 : vector<6x1xf32> to vector<6x128xf32>
    %15 = arith.addf %12, %14 : vector<6x128xf32>
    %cst_12 = arith.constant 0.000000e+00 : f32
    %16 = vector.broadcast %cst_12 : f32 to vector<6x128xf32>
    %17 = arith.cmpf oge, %15, %16 : vector<6x128xf32>
    %cst_13 = arith.constant 0.00999999977 : f32
    %18 = vector.broadcast %cst_13 : f32 to vector<6x128xf32>
    %19 = arith.mulf %18, %15 : vector<6x128xf32>
    %20 = arith.select %17, %15, %19 : vector<6x128xi1>, vector<6x128xf32>
    %c0_14 = arith.constant 0 : index
    %c0_15 = arith.constant 0 : index
    %21 = vector.load %arg5[%c0_14, %c0_15] : memref<5x6xf32, #tpu.memory_space<vmem>>, vector<5x6xf32>
    %cst_16 = arith.constant dense<0.000000e+00> : vector<5x128xf32>
    %22 = tpu.matmul %21, %20, %cst_16 {dimension_numbers = #tpu.dot_dimension_numbers<[1], [0], [0], [1], [0, 0, 1, 1], [], []>, precision = #tpu.contract_precision<fp32>} : vector<5x6xf32>, vector<6x128xf32>, vector<5x128xf32> -> vector<5x128xf32>
    %c0_17 = arith.constant 0 : index
    %c0_18 = arith.constant 0 : index
    %23 = vector.load %arg6[%c0_17, %c0_18] : memref<5x1xf32, #tpu.memory_space<vmem>>, vector<5x1xf32>
    %24 = vector.broadcast %23 : vector<5x1xf32> to vector<5x128xf32>
    %25 = arith.addf %22, %24 : vector<5x128xf32>
    %cst_19 = arith.constant 0.000000e+00 : f32
    %26 = vector.broadcast %cst_19 : f32 to vector<5x128xf32>
    %27 = arith.cmpf oge, %25, %26 : vector<5x128xf32>
    %cst_20 = arith.constant 0.00999999977 : f32
    %28 = vector.broadcast %cst_20 : f32 to vector<5x128xf32>
    %29 = arith.mulf %28, %25 : vector<5x128xf32>
    %30 = arith.select %27, %25, %29 : vector<5x128xi1>, vector<5x128xf32>
    %c0_21 = arith.constant 0 : index
    %c0_22 = arith.constant 0 : index
    %31 = vector.load %arg7[%c0_21, %c0_22] : memref<16x5xf32, #tpu.memory_space<vmem>>, vector<16x5xf32>
    %cst_23 = arith.constant dense<0.000000e+00> : vector<16x128xf32>
    %32 = tpu.matmul %31, %30, %cst_23 {dimension_numbers = #tpu.dot_dimension_numbers<[1], [0], [0], [1], [0, 0, 1, 1], [], []>, precision = #tpu.contract_precision<fp32>} : vector<16x5xf32>, vector<5x128xf32>, vector<16x128xf32> -> vector<16x128xf32>
    %c0_24 = arith.constant 0 : index
    %c0_25 = arith.constant 0 : index
    %33 = vector.load %arg8[%c0_24, %c0_25] : memref<16x1xf32, #tpu.memory_space<vmem>>, vector<16x1xf32>
    %34 = vector.broadcast %33 : vector<16x1xf32> to vector<16x128xf32>
    %35 = arith.addf %32, %34 : vector<16x128xf32>
    %cst_26 = arith.constant 0.000000e+00 : f32
    %cst_27 = arith.constant 1.000000e+00 : f32
    %36 = vector.broadcast %cst_26 : f32 to vector<16x128xf32>
    %37 = arith.maximumf %36, %35 : vector<16x128xf32>
    %38 = vector.broadcast %cst_27 : f32 to vector<16x128xf32>
    %39 = arith.minimumf %38, %37 : vector<16x128xf32>
    %c0_28 = arith.constant 0 : index
    %c0_29 = arith.constant 0 : index
    %40 = vector.load %arg10[%c0_28, %c0_29] : memref<16x128xf32, #tpu.memory_space<vmem>>, vector<16x128xf32>
    tpu.vector_store %arg10[%c0_28, %c0_29], %39 {strides = array<i32>} : memref<16x128xf32, #tpu.memory_space<vmem>>, vector<16x128xf32>,
    return
  }
  func.func @transform_0(%arg0: i32) -> (i32, i32) {
    %c0_i32 = arith.constant 0 : i32
    %c0_i32_0 = arith.constant 0 : i32
    %c0_i32_1 = arith.constant 0 : i32
    return %c0_i32, %c0_i32_0 : i32, i32
  }
  func.func @transform_1(%arg0: i32) -> (i32, i32) {
    %c0_i32 = arith.constant 0 : i32
    %c0_i32_0 = arith.constant 0 : i32
    %c0_i32_1 = arith.constant 0 : i32
    return %c0_i32, %c0_i32_0 : i32, i32
  }
  func.func @transform_2(%arg0: i32) -> (i32, i32) {
    %c0_i32 = arith.constant 0 : i32
    %c0_i32_0 = arith.constant 0 : i32
    %c0_i32_1 = arith.constant 0 : i32
    return %c0_i32, %c0_i32_0 : i32, i32
  }
  func.func @transform_3(%arg0: i32) -> (i32, i32) {
    %c0_i32 = arith.constant 0 : i32
    %c0_i32_0 = arith.constant 0 : i32
    %c0_i32_1 = arith.constant 0 : i32
    return %c0_i32, %c0_i32_0 : i32, i32
  }
  func.func @transform_4(%arg0: i32) -> (i32, i32) {
    %c0_i32 = arith.constant 0 : i32
    %c0_i32_0 = arith.constant 0 : i32
    %c0_i32_1 = arith.constant 0 : i32
    return %c0_i32, %c0_i32_0 : i32, i32
  }
  func.func @transform_5(%arg0: i32) -> (i32, i32) {
    %c0_i32 = arith.constant 0 : i32
    %c0_i32_0 = arith.constant 0 : i32
    %c0_i32_1 = arith.constant 0 : i32
    return %c0_i32, %c0_i32_0 : i32, i32
  }
  func.func @transform_6(%arg0: i32) -> (i32, i32) {
    %c0_i32 = arith.constant 0 : i32
    %c0_i32_0 = arith.constant 0 : i32
    %c0_i32_1 = arith.constant 0 : i32
    return %c0_i32, %c0_i32_0 : i32, i32
  }
  func.func @transform_7(%arg0: i32) -> (i32, i32) {
    %c0_i32 = arith.constant 0 : i32
    %c0_i32_0 = arith.constant 0 : i32
    %c0_i32_1 = arith.constant 0 : i32
    return %c0_i32, %c0_i32_0 : i32, i32
  }
  func.func @transform_8(%arg0: i32) -> (i32, i32) {
    %c0_i32 = arith.constant 0 : i32
    %c0_i32_0 = arith.constant 0 : i32
    return %c0_i32, %arg0 : i32, i32
  }
  func.func @transform_9(%arg0: i32) -> (i32, i32) {
    %c0_i32 = arith.constant 0 : i32
    %c0_i32_0 = arith.constant 0 : i32
    return %c0_i32, %arg0 : i32, i32
  }
}

module attributes {stable_mosaic.version = 11 : i64} {
  func.func @_srf_stats_kernel(%arg0: i32, %arg1: memref<4x8xf32, #tpu.memory_space<vmem>>, %arg2: memref<8x64xf32, #tpu.memory_space<vmem>>, %arg3: memref<4x64xf32, #tpu.memory_space<vmem>>, %arg4: memref<4x1xf32, #tpu.memory_space<vmem>>, %arg5: memref<4x1xf32, #tpu.memory_space<vmem>>) attributes {dimension_semantics = [#tpu.dimension_semantics<arbitrary>], iteration_bounds = array<i64: 1>, scalar_prefetch = 0 : i64, scratch_operands = 0 : i64, tpu.core_type = #tpu.core_type<tc>, window_params = [{pipeline_mode = #tpu.pipeline_mode<synchronous>, transform_indices = @transform_0, window_bounds = array<i64: 4, 8>}, {transform_indices = @transform_1, window_bounds = array<i64: 8, 64>}, {transform_indices = @transform_2, window_bounds = array<i64: 4, 64>}, {pipeline_mode = #tpu.pipeline_mode<synchronous>, transform_indices = @transform_3, window_bounds = array<i64: 4, 1>}, {pipeline_mode = #tpu.pipeline_mode<synchronous>, transform_indices = @transform_4, window_bounds = array<i64: 4, 1>}]} {
    %c0_i32 = arith.constant 0 : i32
    %0 = arith.cmpi eq, %arg0, %c0_i32 : i32
    %1 = arith.extui %0 : i1 to i32
    %c0_i32_0 = arith.constant 0 : i32
    %2 = arith.cmpi ne, %1, %c0_i32_0 : i32
    scf.if %2 {
      %cst_16 = arith.constant 0.000000e+00 : f32
      %18 = vector.broadcast %cst_16 : f32 to vector<4x1xf32>
      %c0_17 = arith.constant 0 : index
      %c0_18 = arith.constant 0 : index
      %19 = vector.load %arg4[%c0_17, %c0_18] : memref<4x1xf32, #tpu.memory_space<vmem>>, vector<4x1xf32>
      tpu.vector_store %arg4[%c0_17, %c0_18], %18 {strides = array<i32>} : memref<4x1xf32, #tpu.memory_space<vmem>>, vector<4x1xf32>,
      %cst_19 = arith.constant 0.000000e+00 : f32
      %20 = vector.broadcast %cst_19 : f32 to vector<4x1xf32>
      %c0_20 = arith.constant 0 : index
      %c0_21 = arith.constant 0 : index
      %21 = vector.load %arg5[%c0_20, %c0_21] : memref<4x1xf32, #tpu.memory_space<vmem>>, vector<4x1xf32>
      tpu.vector_store %arg5[%c0_20, %c0_21], %20 {strides = array<i32>} : memref<4x1xf32, #tpu.memory_space<vmem>>, vector<4x1xf32>,
    } else {
    }
    %c0 = arith.constant 0 : index
    %c0_1 = arith.constant 0 : index
    %3 = vector.load %arg1[%c0, %c0_1] : memref<4x8xf32, #tpu.memory_space<vmem>>, vector<4x8xf32>
    %c0_2 = arith.constant 0 : index
    %c0_3 = arith.constant 0 : index
    %4 = vector.load %arg2[%c0_2, %c0_3] : memref<8x64xf32, #tpu.memory_space<vmem>>, vector<8x64xf32>
    %cst = arith.constant dense<0.000000e+00> : vector<4x64xf32>
    %5 = tpu.matmul %3, %4, %cst {dimension_numbers = #tpu.dot_dimension_numbers<[1], [0], [0], [1], [0, 0, 1, 1], [], []>, precision = #tpu.contract_precision<fp32>} : vector<4x8xf32>, vector<8x64xf32>, vector<4x64xf32> -> vector<4x64xf32>
    %c0_4 = arith.constant 0 : index
    %c0_5 = arith.constant 0 : index
    %6 = vector.load %arg3[%c0_4, %c0_5] : memref<4x64xf32, #tpu.memory_space<vmem>>, vector<4x64xf32>
    tpu.vector_store %arg3[%c0_4, %c0_5], %5 {strides = array<i32>} : memref<4x64xf32, #tpu.memory_space<vmem>>, vector<4x64xf32>,
    %c0_6 = arith.constant 0 : index
    %c0_7 = arith.constant 0 : index
    %7 = vector.load %arg4[%c0_6, %c0_7] : memref<4x1xf32, #tpu.memory_space<vmem>>, vector<4x1xf32>
    %cst_8 = arith.constant dense<0.000000e+00> : vector<4xf32>
    %8 = vector.multi_reduction <add>, %5, %cst_8 [1] : vector<4x64xf32> to vector<4xf32>
    %9 = vector.shape_cast %8 : vector<4xf32> to vector<4x1xf32>
    %10 = arith.addf %7, %9 : vector<4x1xf32>
    %c0_9 = arith.constant 0 : index
    %c0_10 = arith.constant 0 : index
    %11 = vector.load %arg4[%c0_9, %c0_10] : memref<4x1xf32, #tpu.memory_space<vmem>>, vector<4x1xf32>
    tpu.vector_store %arg4[%c0_9, %c0_10], %10 {strides = array<i32>} : memref<4x1xf32, #tpu.memory_space<vmem>>, vector<4x1xf32>,
    %c0_11 = arith.constant 0 : index
    %c0_12 = arith.constant 0 : index
    %12 = vector.load %arg5[%c0_11, %c0_12] : memref<4x1xf32, #tpu.memory_space<vmem>>, vector<4x1xf32>
    %13 = arith.mulf %5, %5 : vector<4x64xf32>
    %cst_13 = arith.constant dense<0.000000e+00> : vector<4xf32>
    %14 = vector.multi_reduction <add>, %13, %cst_13 [1] : vector<4x64xf32> to vector<4xf32>
    %15 = vector.shape_cast %14 : vector<4xf32> to vector<4x1xf32>
    %16 = arith.addf %12, %15 : vector<4x1xf32>
    %c0_14 = arith.constant 0 : index
    %c0_15 = arith.constant 0 : index
    %17 = vector.load %arg5[%c0_14, %c0_15] : memref<4x1xf32, #tpu.memory_space<vmem>>, vector<4x1xf32>
    tpu.vector_store %arg5[%c0_14, %c0_15], %16 {strides = array<i32>} : memref<4x1xf32, #tpu.memory_space<vmem>>, vector<4x1xf32>,
    return
  }
  func.func @transform_0(%arg0: i32) -> (i32, i32) {
    %c0_i32 = arith.constant 0 : i32
    %c0_i32_0 = arith.constant 0 : i32
    %c0_i32_1 = arith.constant 0 : i32
    return %c0_i32, %c0_i32_0 : i32, i32
  }
  func.func @transform_1(%arg0: i32) -> (i32, i32) {
    %c0_i32 = arith.constant 0 : i32
    %c0_i32_0 = arith.constant 0 : i32
    return %c0_i32, %arg0 : i32, i32
  }
  func.func @transform_2(%arg0: i32) -> (i32, i32) {
    %c0_i32 = arith.constant 0 : i32
    %c0_i32_0 = arith.constant 0 : i32
    return %c0_i32, %arg0 : i32, i32
  }
  func.func @transform_3(%arg0: i32) -> (i32, i32) {
    %c0_i32 = arith.constant 0 : i32
    %c0_i32_0 = arith.constant 0 : i32
    %c0_i32_1 = arith.constant 0 : i32
    return %c0_i32, %c0_i32_0 : i32, i32
  }
  func.func @transform_4(%arg0: i32) -> (i32, i32) {
    %c0_i32 = arith.constant 0 : i32
    %c0_i32_0 = arith.constant 0 : i32
    %c0_i32_1 = arith.constant 0 : i32
    return %c0_i32, %c0_i32_0 : i32, i32
  }
}

module attributes {stable_mosaic.version = 11 : i64} {
  func.func @_bn_finalize_kernel(%arg0: i32, %arg1: memref<4x1xf32, #tpu.memory_space<vmem>>, %arg2: memref<4x1xf32, #tpu.memory_space<vmem>>, %arg3: memref<4x64xf32, #tpu.memory_space<vmem>>, %arg4: memref<4x64xf32, #tpu.memory_space<vmem>>) attributes {dimension_semantics = [#tpu.dimension_semantics<parallel>], iteration_bounds = array<i64: 1>, scalar_prefetch = 0 : i64, scratch_operands = 0 : i64, tpu.core_type = #tpu.core_type<tc>, window_params = [{pipeline_mode = #tpu.pipeline_mode<synchronous>, transform_indices = @transform_0, window_bounds = array<i64: 4, 1>}, {pipeline_mode = #tpu.pipeline_mode<synchronous>, transform_indices = @transform_1, window_bounds = array<i64: 4, 1>}, {transform_indices = @transform_2, window_bounds = array<i64: 4, 64>}, {transform_indices = @transform_3, window_bounds = array<i64: 4, 64>}]} {
    %c0 = arith.constant 0 : index
    %c0_0 = arith.constant 0 : index
    %0 = vector.load %arg1[%c0, %c0_0] : memref<4x1xf32, #tpu.memory_space<vmem>>, vector<4x1xf32>
    %cst = arith.constant 1.562500e-02 : f32
    %1 = vector.broadcast %cst : f32 to vector<4x1xf32>
    %2 = arith.mulf %0, %1 : vector<4x1xf32>
    %c0_1 = arith.constant 0 : index
    %c0_2 = arith.constant 0 : index
    %3 = vector.load %arg2[%c0_1, %c0_2] : memref<4x1xf32, #tpu.memory_space<vmem>>, vector<4x1xf32>
    %cst_3 = arith.constant 1.562500e-02 : f32
    %4 = vector.broadcast %cst_3 : f32 to vector<4x1xf32>
    %5 = arith.mulf %3, %4 : vector<4x1xf32>
    %6 = arith.mulf %2, %2 : vector<4x1xf32>
    %7 = arith.subf %5, %6 : vector<4x1xf32>
    %cst_4 = arith.constant 9.99999974E-6 : f32
    %8 = vector.broadcast %cst_4 : f32 to vector<4x1xf32>
    %9 = arith.addf %7, %8 : vector<4x1xf32>
    %10 = math.rsqrt %9 : vector<4x1xf32>
    %c0_5 = arith.constant 0 : index
    %c0_6 = arith.constant 0 : index
    %11 = vector.load %arg3[%c0_5, %c0_6] : memref<4x64xf32, #tpu.memory_space<vmem>>, vector<4x64xf32>
    %12 = vector.broadcast %2 : vector<4x1xf32> to vector<4x64xf32>
    %13 = arith.subf %11, %12 : vector<4x64xf32>
    %14 = vector.broadcast %10 : vector<4x1xf32> to vector<4x64xf32>
    %15 = arith.mulf %13, %14 : vector<4x64xf32>
    %cst_7 = arith.constant 0.000000e+00 : f32
    %cst_8 = arith.constant 1.000000e+00 : f32
    %16 = vector.broadcast %cst_7 : f32 to vector<4x64xf32>
    %17 = arith.maximumf %16, %15 : vector<4x64xf32>
    %18 = vector.broadcast %cst_8 : f32 to vector<4x64xf32>
    %19 = arith.minimumf %18, %17 : vector<4x64xf32>
    %c0_9 = arith.constant 0 : index
    %c0_10 = arith.constant 0 : index
    %20 = vector.load %arg4[%c0_9, %c0_10] : memref<4x64xf32, #tpu.memory_space<vmem>>, vector<4x64xf32>
    tpu.vector_store %arg4[%c0_9, %c0_10], %19 {strides = array<i32>} : memref<4x64xf32, #tpu.memory_space<vmem>>, vector<4x64xf32>,
    return
  }
  func.func @transform_0(%arg0: i32) -> (i32, i32) {
    %c0_i32 = arith.constant 0 : i32
    %c0_i32_0 = arith.constant 0 : i32
    %c0_i32_1 = arith.constant 0 : i32
    return %c0_i32, %c0_i32_0 : i32, i32
  }
  func.func @transform_1(%arg0: i32) -> (i32, i32) {
    %c0_i32 = arith.constant 0 : i32
    %c0_i32_0 = arith.constant 0 : i32
    %c0_i32_1 = arith.constant 0 : i32
    return %c0_i32, %c0_i32_0 : i32, i32
  }
  func.func @transform_2(%arg0: i32) -> (i32, i32) {
    %c0_i32 = arith.constant 0 : i32
    %c0_i32_0 = arith.constant 0 : i32
    return %c0_i32, %arg0 : i32, i32
  }
  func.func @transform_3(%arg0: i32) -> (i32, i32) {
    %c0_i32 = arith.constant 0 : i32
    %c0_i32_0 = arith.constant 0 : i32
    return %c0_i32, %arg0 : i32, i32
  }
}

module attributes {stable_mosaic.version = 11 : i64} {
  func.func @_matmul_kernel(%arg0: i32, %arg1: memref<8x16xf32, #tpu.memory_space<vmem>>, %arg2: memref<16x64xf32, #tpu.memory_space<vmem>>, %arg3: memref<8x64xf32, #tpu.memory_space<vmem>>) attributes {dimension_semantics = [#tpu.dimension_semantics<parallel>], iteration_bounds = array<i64: 1>, scalar_prefetch = 0 : i64, scratch_operands = 0 : i64, tpu.core_type = #tpu.core_type<tc>, window_params = [{pipeline_mode = #tpu.pipeline_mode<synchronous>, transform_indices = @transform_0, window_bounds = array<i64: 8, 16>}, {transform_indices = @transform_1, window_bounds = array<i64: 16, 64>}, {transform_indices = @transform_2, window_bounds = array<i64: 8, 64>}]} {
    %c0 = arith.constant 0 : index
    %c0_0 = arith.constant 0 : index
    %0 = vector.load %arg1[%c0, %c0_0] : memref<8x16xf32, #tpu.memory_space<vmem>>, vector<8x16xf32>
    %c0_1 = arith.constant 0 : index
    %c0_2 = arith.constant 0 : index
    %1 = vector.load %arg2[%c0_1, %c0_2] : memref<16x64xf32, #tpu.memory_space<vmem>>, vector<16x64xf32>
    %cst = arith.constant dense<0.000000e+00> : vector<8x64xf32>
    %2 = tpu.matmul %0, %1, %cst {dimension_numbers = #tpu.dot_dimension_numbers<[1], [0], [0], [1], [0, 0, 1, 1], [], []>, precision = #tpu.contract_precision<fp32>} : vector<8x16xf32>, vector<16x64xf32>, vector<8x64xf32> -> vector<8x64xf32>
    %c0_3 = arith.constant 0 : index
    %c0_4 = arith.constant 0 : index
    %3 = vector.load %arg3[%c0_3, %c0_4] : memref<8x64xf32, #tpu.memory_space<vmem>>, vector<8x64xf32>
    tpu.vector_store %arg3[%c0_3, %c0_4], %2 {strides = array<i32>} : memref<8x64xf32, #tpu.memory_space<vmem>>, vector<8x64xf32>,
    return
  }
  func.func @transform_0(%arg0: i32) -> (i32, i32) {
    %c0_i32 = arith.constant 0 : i32
    %c0_i32_0 = arith.constant 0 : i32
    %c0_i32_1 = arith.constant 0 : i32
    return %c0_i32, %c0_i32_0 : i32, i32
  }
  func.func @transform_1(%arg0: i32) -> (i32, i32) {
    %c0_i32 = arith.constant 0 : i32
    %c0_i32_0 = arith.constant 0 : i32
    return %c0_i32, %arg0 : i32, i32
  }
  func.func @transform_2(%arg0: i32) -> (i32, i32) {
    %c0_i32 = arith.constant 0 : i32
    %c0_i32_0 = arith.constant 0 : i32
    return %c0_i32, %arg0 : i32, i32
  }
}

module attributes {stable_mosaic.version = 11 : i64} {
  func.func @_psf_kernel(%arg0: i32, %arg1: memref<128x32xf32, #tpu.memory_space<vmem>>, %arg2: memref<32x8xf32, #tpu.memory_space<vmem>>, %arg3: memref<128x8xf32, #tpu.memory_space<vmem>>) attributes {dimension_semantics = [#tpu.dimension_semantics<parallel>], iteration_bounds = array<i64: 1>, scalar_prefetch = 0 : i64, scratch_operands = 0 : i64, tpu.core_type = #tpu.core_type<tc>, window_params = [{transform_indices = @transform_0, window_bounds = array<i64: 128, 32>}, {pipeline_mode = #tpu.pipeline_mode<synchronous>, transform_indices = @transform_1, window_bounds = array<i64: 32, 8>}, {transform_indices = @transform_2, window_bounds = array<i64: 128, 8>}]} {
    %c0 = arith.constant 0 : index
    %c0_0 = arith.constant 0 : index
    %0 = vector.load %arg1[%c0, %c0_0] : memref<128x32xf32, #tpu.memory_space<vmem>>, vector<128x32xf32>
    %c0_1 = arith.constant 0 : index
    %c0_2 = arith.constant 0 : index
    %1 = vector.load %arg2[%c0_1, %c0_2] : memref<32x8xf32, #tpu.memory_space<vmem>>, vector<32x8xf32>
    %cst = arith.constant dense<0.000000e+00> : vector<128x8xf32>
    %2 = tpu.matmul %0, %1, %cst {dimension_numbers = #tpu.dot_dimension_numbers<[1], [0], [0], [1], [0, 0, 1, 1], [], []>, precision = #tpu.contract_precision<fp32>} : vector<128x32xf32>, vector<32x8xf32>, vector<128x8xf32> -> vector<128x8xf32>
    %c0_3 = arith.constant 0 : index
    %c0_4 = arith.constant 0 : index
    %3 = vector.load %arg3[%c0_3, %c0_4] : memref<128x8xf32, #tpu.memory_space<vmem>>, vector<128x8xf32>
    tpu.vector_store %arg3[%c0_3, %c0_4], %2 {strides = array<i32>} : memref<128x8xf32, #tpu.memory_space<vmem>>, vector<128x8xf32>,
    return
  }
  func.func @transform_0(%arg0: i32) -> (i32, i32) {
    %c0_i32 = arith.constant 0 : i32
    %c0_i32_0 = arith.constant 0 : i32
    return %arg0, %c0_i32 : i32, i32
  }
  func.func @transform_1(%arg0: i32) -> (i32, i32) {
    %c0_i32 = arith.constant 0 : i32
    %c0_i32_0 = arith.constant 0 : i32
    %c0_i32_1 = arith.constant 0 : i32
    return %c0_i32, %c0_i32_0 : i32, i32
  }
  func.func @transform_2(%arg0: i32) -> (i32, i32) {
    %c0_i32 = arith.constant 0 : i32
    %c0_i32_0 = arith.constant 0 : i32
    return %arg0, %c0_i32 : i32, i32
  }
}

module attributes {stable_mosaic.version = 11 : i64} {
  func.func @_psf_kernel(%arg0: i32, %arg1: memref<32x32xf32, #tpu.memory_space<vmem>>, %arg2: memref<32x8xf32, #tpu.memory_space<vmem>>, %arg3: memref<32x8xf32, #tpu.memory_space<vmem>>) attributes {dimension_semantics = [#tpu.dimension_semantics<parallel>], iteration_bounds = array<i64: 1>, scalar_prefetch = 0 : i64, scratch_operands = 0 : i64, tpu.core_type = #tpu.core_type<tc>, window_params = [{transform_indices = @transform_0, window_bounds = array<i64: 32, 32>}, {pipeline_mode = #tpu.pipeline_mode<synchronous>, transform_indices = @transform_1, window_bounds = array<i64: 32, 8>}, {transform_indices = @transform_2, window_bounds = array<i64: 32, 8>}]} {
    %c0 = arith.constant 0 : index
    %c0_0 = arith.constant 0 : index
    %0 = vector.load %arg1[%c0, %c0_0] : memref<32x32xf32, #tpu.memory_space<vmem>>, vector<32x32xf32>
    %c0_1 = arith.constant 0 : index
    %c0_2 = arith.constant 0 : index
    %1 = vector.load %arg2[%c0_1, %c0_2] : memref<32x8xf32, #tpu.memory_space<vmem>>, vector<32x8xf32>
    %cst = arith.constant dense<0.000000e+00> : vector<32x8xf32>
    %2 = tpu.matmul %0, %1, %cst {dimension_numbers = #tpu.dot_dimension_numbers<[1], [0], [0], [1], [0, 0, 1, 1], [], []>, precision = #tpu.contract_precision<fp32>} : vector<32x32xf32>, vector<32x8xf32>, vector<32x8xf32> -> vector<32x8xf32>
    %c0_3 = arith.constant 0 : index
    %c0_4 = arith.constant 0 : index
    %3 = vector.load %arg3[%c0_3, %c0_4] : memref<32x8xf32, #tpu.memory_space<vmem>>, vector<32x8xf32>
    tpu.vector_store %arg3[%c0_3, %c0_4], %2 {strides = array<i32>} : memref<32x8xf32, #tpu.memory_space<vmem>>, vector<32x8xf32>,
    return
  }
  func.func @transform_0(%arg0: i32) -> (i32, i32) {
    %c0_i32 = arith.constant 0 : i32
    %c0_i32_0 = arith.constant 0 : i32
    return %arg0, %c0_i32 : i32, i32
  }
  func.func @transform_1(%arg0: i32) -> (i32, i32) {
    %c0_i32 = arith.constant 0 : i32
    %c0_i32_0 = arith.constant 0 : i32
    %c0_i32_1 = arith.constant 0 : i32
    return %c0_i32, %c0_i32_0 : i32, i32
  }
  func.func @transform_2(%arg0: i32) -> (i32, i32) {
    %c0_i32 = arith.constant 0 : i32
    %c0_i32_0 = arith.constant 0 : i32
    return %arg0, %c0_i32 : i32, i32
  }
}

module attributes {stable_mosaic.version = 11 : i64} {
  func.func @_encoder_kernel(%arg0: i32, %arg1: memref<10x8xf32, #tpu.memory_space<vmem>>, %arg2: memref<10x1xf32, #tpu.memory_space<vmem>>, %arg3: memref<12x10xf32, #tpu.memory_space<vmem>>, %arg4: memref<12x1xf32, #tpu.memory_space<vmem>>, %arg5: memref<14x12xf32, #tpu.memory_space<vmem>>, %arg6: memref<14x1xf32, #tpu.memory_space<vmem>>, %arg7: memref<16x14xf32, #tpu.memory_space<vmem>>, %arg8: memref<16x1xf32, #tpu.memory_space<vmem>>, %arg9: memref<8x64xf32, #tpu.memory_space<vmem>>, %arg10: memref<16x64xf32, #tpu.memory_space<vmem>>) attributes {dimension_semantics = [#tpu.dimension_semantics<parallel>], iteration_bounds = array<i64: 1>, scalar_prefetch = 0 : i64, scratch_operands = 0 : i64, tpu.core_type = #tpu.core_type<tc>, window_params = [{pipeline_mode = #tpu.pipeline_mode<synchronous>, transform_indices = @transform_0, window_bounds = array<i64: 10, 8>}, {pipeline_mode = #tpu.pipeline_mode<synchronous>, transform_indices = @transform_1, window_bounds = array<i64: 10, 1>}, {pipeline_mode = #tpu.pipeline_mode<synchronous>, transform_indices = @transform_2, window_bounds = array<i64: 12, 10>}, {pipeline_mode = #tpu.pipeline_mode<synchronous>, transform_indices = @transform_3, window_bounds = array<i64: 12, 1>}, {pipeline_mode = #tpu.pipeline_mode<synchronous>, transform_indices = @transform_4, window_bounds = array<i64: 14, 12>}, {pipeline_mode = #tpu.pipeline_mode<synchronous>, transform_indices = @transform_5, window_bounds = array<i64: 14, 1>}, {pipeline_mode = #tpu.pipeline_mode<synchronous>, transform_indices = @transform_6, window_bounds = array<i64: 16, 14>}, {pipeline_mode = #tpu.pipeline_mode<synchronous>, transform_indices = @transform_7, window_bounds = array<i64: 16, 1>}, {transform_indices = @transform_8, window_bounds = array<i64: 8, 64>}, {transform_indices = @transform_9, window_bounds = array<i64: 16, 64>}]} {
    %c0 = arith.constant 0 : index
    %c0_0 = arith.constant 0 : index
    %0 = vector.load %arg9[%c0, %c0_0] : memref<8x64xf32, #tpu.memory_space<vmem>>, vector<8x64xf32>
    %c0_1 = arith.constant 0 : index
    %c0_2 = arith.constant 0 : index
    %1 = vector.load %arg1[%c0_1, %c0_2] : memref<10x8xf32, #tpu.memory_space<vmem>>, vector<10x8xf32>
    %cst = arith.constant dense<0.000000e+00> : vector<10x64xf32>
    %2 = tpu.matmul %1, %0, %cst {dimension_numbers = #tpu.dot_dimension_numbers<[1], [0], [0], [1], [0, 0, 1, 1], [], []>, precision = #tpu.contract_precision<fp32>} : vector<10x8xf32>, vector<8x64xf32>, vector<10x64xf32> -> vector<10x64xf32>
    %c0_3 = arith.constant 0 : index
    %c0_4 = arith.constant 0 : index
    %3 = vector.load %arg2[%c0_3, %c0_4] : memref<10x1xf32, #tpu.memory_space<vmem>>, vector<10x1xf32>
    %4 = vector.broadcast %3 : vector<10x1xf32> to vector<10x64xf32>
    %5 = arith.addf %2, %4 : vector<10x64xf32>
    %cst_5 = arith.constant 0.000000e+00 : f32
    %6 = vector.broadcast %cst_5 : f32 to vector<10x64xf32>
    %7 = arith.cmpf oge, %5, %6 : vector<10x64xf32>
    %cst_6 = arith.constant 0.00999999977 : f32
    %8 = vector.broadcast %cst_6 : f32 to vector<10x64xf32>
    %9 = arith.mulf %8, %5 : vector<10x64xf32>
    %10 = arith.select %7, %5, %9 : vector<10x64xi1>, vector<10x64xf32>
    %c0_7 = arith.constant 0 : index
    %c0_8 = arith.constant 0 : index
    %11 = vector.load %arg3[%c0_7, %c0_8] : memref<12x10xf32, #tpu.memory_space<vmem>>, vector<12x10xf32>
    %cst_9 = arith.constant dense<0.000000e+00> : vector<12x64xf32>
    %12 = tpu.matmul %11, %10, %cst_9 {dimension_numbers = #tpu.dot_dimension_numbers<[1], [0], [0], [1], [0, 0, 1, 1], [], []>, precision = #tpu.contract_precision<fp32>} : vector<12x10xf32>, vector<10x64xf32>, vector<12x64xf32> -> vector<12x64xf32>
    %c0_10 = arith.constant 0 : index
    %c0_11 = arith.constant 0 : index
    %13 = vector.load %arg4[%c0_10, %c0_11] : memref<12x1xf32, #tpu.memory_space<vmem>>, vector<12x1xf32>
    %14 = vector.broadcast %13 : vector<12x1xf32> to vector<12x64xf32>
    %15 = arith.addf %12, %14 : vector<12x64xf32>
    %cst_12 = arith.constant 0.000000e+00 : f32
    %16 = vector.broadcast %cst_12 : f32 to vector<12x64xf32>
    %17 = arith.cmpf oge, %15, %16 : vector<12x64xf32>
    %cst_13 = arith.constant 0.00999999977 : f32
    %18 = vector.broadcast %cst_13 : f32 to vector<12x64xf32>
    %19 = arith.mulf %18, %15 : vector<12x64xf32>
    %20 = arith.select %17, %15, %19 : vector<12x64xi1>, vector<12x64xf32>
    %c0_14 = arith.constant 0 : index
    %c0_15 = arith.constant 0 : index
    %21 = vector.load %arg5[%c0_14, %c0_15] : memref<14x12xf32, #tpu.memory_space<vmem>>, vector<14x12xf32>
    %cst_16 = arith.constant dense<0.000000e+00> : vector<14x64xf32>
    %22 = tpu.matmul %21, %20, %cst_16 {dimension_numbers = #tpu.dot_dimension_numbers<[1], [0], [0], [1], [0, 0, 1, 1], [], []>, precision = #tpu.contract_precision<fp32>} : vector<14x12xf32>, vector<12x64xf32>, vector<14x64xf32> -> vector<14x64xf32>
    %c0_17 = arith.constant 0 : index
    %c0_18 = arith.constant 0 : index
    %23 = vector.load %arg6[%c0_17, %c0_18] : memref<14x1xf32, #tpu.memory_space<vmem>>, vector<14x1xf32>
    %24 = vector.broadcast %23 : vector<14x1xf32> to vector<14x64xf32>
    %25 = arith.addf %22, %24 : vector<14x64xf32>
    %cst_19 = arith.constant 0.000000e+00 : f32
    %26 = vector.broadcast %cst_19 : f32 to vector<14x64xf32>
    %27 = arith.cmpf oge, %25, %26 : vector<14x64xf32>
    %cst_20 = arith.constant 0.00999999977 : f32
    %28 = vector.broadcast %cst_20 : f32 to vector<14x64xf32>
    %29 = arith.mulf %28, %25 : vector<14x64xf32>
    %30 = arith.select %27, %25, %29 : vector<14x64xi1>, vector<14x64xf32>
    %c0_21 = arith.constant 0 : index
    %c0_22 = arith.constant 0 : index
    %31 = vector.load %arg7[%c0_21, %c0_22] : memref<16x14xf32, #tpu.memory_space<vmem>>, vector<16x14xf32>
    %cst_23 = arith.constant dense<0.000000e+00> : vector<16x64xf32>
    %32 = tpu.matmul %31, %30, %cst_23 {dimension_numbers = #tpu.dot_dimension_numbers<[1], [0], [0], [1], [0, 0, 1, 1], [], []>, precision = #tpu.contract_precision<fp32>} : vector<16x14xf32>, vector<14x64xf32>, vector<16x64xf32> -> vector<16x64xf32>
    %c0_24 = arith.constant 0 : index
    %c0_25 = arith.constant 0 : index
    %33 = vector.load %arg8[%c0_24, %c0_25] : memref<16x1xf32, #tpu.memory_space<vmem>>, vector<16x1xf32>
    %34 = vector.broadcast %33 : vector<16x1xf32> to vector<16x64xf32>
    %35 = arith.addf %32, %34 : vector<16x64xf32>
    %cst_26 = arith.constant 0.000000e+00 : f32
    %cst_27 = arith.constant 1.000000e+00 : f32
    %36 = vector.broadcast %cst_26 : f32 to vector<16x64xf32>
    %37 = arith.maximumf %36, %35 : vector<16x64xf32>
    %38 = vector.broadcast %cst_27 : f32 to vector<16x64xf32>
    %39 = arith.minimumf %38, %37 : vector<16x64xf32>
    %c0_28 = arith.constant 0 : index
    %c0_29 = arith.constant 0 : index
    %40 = vector.load %arg10[%c0_28, %c0_29] : memref<16x64xf32, #tpu.memory_space<vmem>>, vector<16x64xf32>
    tpu.vector_store %arg10[%c0_28, %c0_29], %39 {strides = array<i32>} : memref<16x64xf32, #tpu.memory_space<vmem>>, vector<16x64xf32>,
    return
  }
  func.func @transform_0(%arg0: i32) -> (i32, i32) {
    %c0_i32 = arith.constant 0 : i32
    %c0_i32_0 = arith.constant 0 : i32
    %c0_i32_1 = arith.constant 0 : i32
    return %c0_i32, %c0_i32_0 : i32, i32
  }
  func.func @transform_1(%arg0: i32) -> (i32, i32) {
    %c0_i32 = arith.constant 0 : i32
    %c0_i32_0 = arith.constant 0 : i32
    %c0_i32_1 = arith.constant 0 : i32
    return %c0_i32, %c0_i32_0 : i32, i32
  }
  func.func @transform_2(%arg0: i32) -> (i32, i32) {
    %c0_i32 = arith.constant 0 : i32
    %c0_i32_0 = arith.constant 0 : i32
    %c0_i32_1 = arith.constant 0 : i32
    return %c0_i32, %c0_i32_0 : i32, i32
  }
  func.func @transform_3(%arg0: i32) -> (i32, i32) {
    %c0_i32 = arith.constant 0 : i32
    %c0_i32_0 = arith.constant 0 : i32
    %c0_i32_1 = arith.constant 0 : i32
    return %c0_i32, %c0_i32_0 : i32, i32
  }
  func.func @transform_4(%arg0: i32) -> (i32, i32) {
    %c0_i32 = arith.constant 0 : i32
    %c0_i32_0 = arith.constant 0 : i32
    %c0_i32_1 = arith.constant 0 : i32
    return %c0_i32, %c0_i32_0 : i32, i32
  }
  func.func @transform_5(%arg0: i32) -> (i32, i32) {
    %c0_i32 = arith.constant 0 : i32
    %c0_i32_0 = arith.constant 0 : i32
    %c0_i32_1 = arith.constant 0 : i32
    return %c0_i32, %c0_i32_0 : i32, i32
  }
  func.func @transform_6(%arg0: i32) -> (i32, i32) {
    %c0_i32 = arith.constant 0 : i32
    %c0_i32_0 = arith.constant 0 : i32
    %c0_i32_1 = arith.constant 0 : i32
    return %c0_i32, %c0_i32_0 : i32, i32
  }
  func.func @transform_7(%arg0: i32) -> (i32, i32) {
    %c0_i32 = arith.constant 0 : i32
    %c0_i32_0 = arith.constant 0 : i32
    %c0_i32_1 = arith.constant 0 : i32
    return %c0_i32, %c0_i32_0 : i32, i32
  }
  func.func @transform_8(%arg0: i32) -> (i32, i32) {
    %c0_i32 = arith.constant 0 : i32
    %c0_i32_0 = arith.constant 0 : i32
    return %c0_i32, %arg0 : i32, i32
  }
  func.func @transform_9(%arg0: i32) -> (i32, i32) {
    %c0_i32 = arith.constant 0 : i32
    %c0_i32_0 = arith.constant 0 : i32
    return %c0_i32, %arg0 : i32, i32
  }
}

</mosaic_0001>

<llo_original>
// kernel: forward.16
$region0: #{forward.16}
  #allocation0 [shape = 'u32[]', space=smem, size = 0x4, offset = 0x4, fixed_abs, tag = 'smem constant byte address 0x4 - core index']
  #allocation1 [shape = 'u32[72,128]{1,0:T(1,128)}', space=vmem, size = 0x9000, scoped, tag = 'internal scratch']
  %s0 = inlined_call_operand.vmem [shape: f32[8,16], index: 0, kind: input, shape index: {}]
  %s1 = inlined_call_operand.vmem [shape: f32[4,8], index: 1, kind: input, shape index: {}]
  %s2 = inlined_call_operand.vmem [shape: f32[16,256], index: 2, kind: input, shape index: {}]
  %s3 = inlined_call_operand.vmem [shape: f32[8,256], index: 3, kind: output, shape index: {0}]
  %s4 = inlined_call_operand.vmem [shape: f32[4,256], index: 4, kind: output, shape index: {1}]
  %s5 = inlined_call_operand.vmem [shape: f32[4,1], index: 5, kind: output, shape index: {2}]
  %s6 = inlined_call_operand.vmem [shape: f32[4,1], index: 6, kind: output, shape index: {3}]
  %7 = xla_tuple %s3, %s4, %s5, %s6
  %s8 = sld [smem:[#allocation0]]
  $region111: #{forward.16} parent=0
    _
  %s10 = ssub.s32 1, %s8
  %s11 = scalar_select 0, %s10, %s8
  $region1: #{forward.16} parent=0
    #allocation2 [shape = 'u8[16384]{0}', space=vmem, size = 0x4000, scoped, tag = 'input window, operand 2']
    loop: start=0, step=1, limit=4
    $region2: #{forward.16} parent=1 // loop_pre_header
      _
    $region3: #{forward.16} parent=1 // loop_header
      %s13 = sphi 0, %s17
      %p14 = scmp.ge.s32.totalorder %s13, 4
      %s21 = sphi 0, %s21
      %s23 = sphi 0, %s21
      %s24 = sphi 0, %s23
      %s38 = sphi 0, %s24
      %s42 = sphi 0, %s42
      %s44 = sphi 0, %s42
      %s45 = sphi 0, %s44
      %s59 = sphi 0, %s45
      %s65 = sphi 0, %s67
      %s68 = sphi 0, %s65
      %s69 = sphi 0, %s68
      %s85 = sphi 0, %s69
      %s91 = sphi 0, %s93
      %s94 = sphi 0, %s91
      %s95 = sphi 0, %s94
      %s111 = sphi 0, %s95
      %s117 = sphi 0, %s119
      %s120 = sphi 0, %s117
      %s121 = sphi 0, %s120
      %s137 = sphi 0, %s121
      %s141 = sphi 0, %s141
      %s143 = sphi 0, %s141
      %s144 = sphi 0, %s143
      %s158 = sphi 0, %s144
      %s162 = sphi 0, %s162
      %s164 = sphi 0, %s162
      %s165 = sphi 0, %s164
      %s179 = sphi 0, %s165
    $region4: #{forward.16} parent=1 // loop_header_branch
      %16 = sbr.rel (%p14) target = $region8
    $region5: #{forward.16} parent=1 // loop_body
      %s18 = ssub.s32 %s13, 1
      %s19 = ssub.s32 %s13, 2
      %s20 = sadd.s32 %s13, 1
      %s22 = sadd.s32 %s21, 1
      %p25 = scmp.eq.s32.totalorder %s13, 1
      %p26 = scmp.ne.s32.totalorder %s21, %s23
      %p27 = scmp.eq.s32.totalorder %s13, 0
      %p28 = por %p26, %p27
      %p29 = scmp.ne.s32.totalorder %s21, %s23
      %p30 = scmp.eq.s32.totalorder %s18, 1
      %p31 = por %p29, %p30
      %p32 = scmp.ne.s32.totalorder %s23, %s24
      %p33 = scmp.eq.s32.totalorder %s18, 0
      %p34 = por %p32, %p33
      %p35 = scmp.ne.s32.totalorder %s23, %s24
      %p36 = scmp.eq.s32.totalorder %s19, 1
      %p37 = por %p35, %p36
      %p39 = scmp.ne.s32.totalorder %s24, %s38
      %p40 = scmp.eq.s32.totalorder %s19, 0
      %p41 = por %p39, %p40
      %s43 = sadd.s32 %s42, 1
      %p46 = scmp.eq.s32.totalorder %s13, 1
      %p47 = scmp.ne.s32.totalorder %s42, %s44
      %p48 = scmp.eq.s32.totalorder %s13, 0
      %p49 = por %p47, %p48
      %p50 = scmp.ne.s32.totalorder %s42, %s44
      %p51 = scmp.eq.s32.totalorder %s18, 1
      %p52 = por %p50, %p51
      %p53 = scmp.ne.s32.totalorder %s44, %s45
      %p54 = scmp.eq.s32.totalorder %s18, 0
      %p55 = por %p53, %p54
      %p56 = scmp.ne.s32.totalorder %s44, %s45
      %p57 = scmp.eq.s32.totalorder %s19, 1
      %p58 = por %p56, %p57
      %p60 = scmp.ne.s32.totalorder %s45, %s59
      %p61 = scmp.eq.s32.totalorder %s19, 0
      %p62 = por %p60, %p61
      %s63 = ssub.s32 %s13, %s20
      %p64 = scmp.eq.s32.totalorder %s63, 0
      %s66 = sadd.s32 %s65, 1
      %s67 = scalar_select %p64, %s65, %s66
      %p70 = pneg %p64
      %p71 = scmp.eq.s32.totalorder %s13, 1
      %p72 = por %p70, %p71
      %p73 = scmp.ne.s32.totalorder %s65, %s68
      %p74 = scmp.eq.s32.totalorder %s13, 0
      %p75 = por %p73, %p74
      %p76 = scmp.ne.s32.totalorder %s65, %s68
      %p77 = scmp.eq.s32.totalorder %s18, 1
      %p78 = por %p76, %p77
      %p79 = scmp.ne.s32.totalorder %s68, %s69
      %p80 = scmp.eq.s32.totalorder %s18, 0
      %p81 = por %p79, %p80
      %p82 = scmp.ne.s32.totalorder %s68, %s69
      %p83 = scmp.eq.s32.totalorder %s19, 1
      %p84 = por %p82, %p83
      %p86 = scmp.ne.s32.totalorder %s69, %s85
      %p87 = scmp.eq.s32.totalorder %s19, 0
      %p88 = por %p86, %p87
      %s89 = ssub.s32 %s13, %s20
      %p90 = scmp.eq.s32.totalorder %s89, 0
      %s92 = sadd.s32 %s91, 1
      %s93 = scalar_select %p90, %s91, %s92
      %p96 = pneg %p90
      %p97 = scmp.eq.s32.totalorder %s13, 1
      %p98 = por %p96, %p97
      %p99 = scmp.ne.s32.totalorder %s91, %s94
      %p100 = scmp.eq.s32.totalorder %s13, 0
      %p101 = por %p99, %p100
      %p102 = scmp.ne.s32.totalorder %s91, %s94
      %p103 = scmp.eq.s32.totalorder %s18, 1
      %p104 = por %p102, %p103
      %p105 = scmp.ne.s32.totalorder %s94, %s95
      %p106 = scmp.eq.s32.totalorder %s18, 0
      %p107 = por %p105, %p106
      %p108 = scmp.ne.s32.totalorder %s94, %s95
      %p109 = scmp.eq.s32.totalorder %s19, 1
      %p110 = por %p108, %p109
      %p112 = scmp.ne.s32.totalorder %s95, %s111
      %p113 = scmp.eq.s32.totalorder %s19, 0
      %p114 = por %p112, %p113
      %s115 = ssub.s32 %s13, %s20
      %p116 = scmp.eq.s32.totalorder %s115, 0
      %s118 = sadd.s32 %s117, 1
      %s119 = scalar_select %p116, %s117, %s118
      %p122 = pneg %p116
      %p123 = scmp.eq.s32.totalorder %s13, 1
      %p124 = por %p122, %p123
      %p125 = scmp.ne.s32.totalorder %s117, %s120
      %p126 = scmp.eq.s32.totalorder %s13, 0
      %p127 = por %p125, %p126
      %p128 = scmp.ne.s32.totalorder %s117, %s120
      %p129 = scmp.eq.s32.totalorder %s18, 1
      %p130 = por %p128, %p129
      %p131 = scmp.ne.s32.totalorder %s120, %s121
      %p132 = scmp.eq.s32.totalorder %s18, 0
      %p133 = por %p131, %p132
      %p134 = scmp.ne.s32.totalorder %s120, %s121
      %p135 = scmp.eq.s32.totalorder %s19, 1
      %p136 = por %p134, %p135
      %p138 = scmp.ne.s32.totalorder %s121, %s137
      %p139 = scmp.eq.s32.totalorder %s19, 0
      %p140 = por %p138, %p139
      %s142 = sadd.s32 %s141, 1
      %p145 = scmp.eq.s32.totalorder %s13, 1
      %p146 = scmp.ne.s32.totalorder %s141, %s143
      %p147 = scmp.eq.s32.totalorder %s13, 0
      %p148 = por %p146, %p147
      %p149 = scmp.ne.s32.totalorder %s141, %s143
      %p150 = scmp.eq.s32.totalorder %s18, 1
      %p151 = por %p149, %p150
      %p152 = scmp.ne.s32.totalorder %s143, %s144
      %p153 = scmp.eq.s32.totalorder %s18, 0
      %p154 = por %p152, %p153
      %p155 = scmp.ne.s32.totalorder %s143, %s144
      %p156 = scmp.eq.s32.totalorder %s19, 1
      %p157 = por %p155, %p156
      %p159 = scmp.ne.s32.totalorder %s144, %s158
      %p160 = scmp.eq.s32.totalorder %s19, 0
      %p161 = por %p159, %p160
      %s163 = sadd.s32 %s162, 1
      %p166 = scmp.eq.s32.totalorder %s13, 1
      %p167 = scmp.ne.s32.totalorder %s162, %s164
      %p168 = scmp.eq.s32.totalorder %s13, 0
      %p169 = por %p167, %p168
      %p170 = scmp.ne.s32.totalorder %s162, %s164
      %p171 = scmp.eq.s32.totalorder %s18, 1
      %p172 = por %p170, %p171
      %p173 = scmp.ne.s32.totalorder %s164, %s165
      %p174 = scmp.eq.s32.totalorder %s18, 0
      %p175 = por %p173, %p174
      %p176 = scmp.ne.s32.totalorder %s164, %s165
      %p177 = scmp.eq.s32.totalorder %s19, 1
      %p178 = por %p176, %p177
      %p180 = scmp.ne.s32.totalorder %s165, %s179
      %p181 = scmp.eq.s32.totalorder %s19, 0
      %p182 = por %p180, %p181
      %p183 = scmp.le.s32.totalorder 1, %s13
      %p184 = scmp.lt.s32.totalorder %s13, 3
      %p185 = pnand %p183, %p184
      %p186 = pneg %p185
      // Predicated region
      $region9: #{forward.16} parent=5 // pred_check
        _
      $region10: #{forward.16} parent=5 // pred_check_branch
        %188 = sbr.rel (%p185) target = $region12
      $region11: #{forward.16} parent=5 // pred_region
        %s189 = ssub.s32 %s13, 1
        // Predicated region
        $region13: #{forward.16} parent=11 // pred_check
          %p190 = pneg %p34
        $region14: #{forward.16} parent=11 // pred_check_branch
          %192 = sbr.rel (%p190) target = $region16
        $region15: #{forward.16} parent=11 // pred_region
          _
        $region16: #{forward.16} parent=11 // pred_fallthru
          _
        // Predicated region
        $region17: #{forward.16} parent=11 // pred_check
          %p193 = pneg %p55
        $region18: #{forward.16} parent=11 // pred_check_branch
          %195 = sbr.rel (%p193) target = $region20
        $region19: #{forward.16} parent=11 // pred_region
          _
        $region20: #{forward.16} parent=11 // pred_fallthru
          _
      $region12: #{forward.16} parent=5 // pred_fallthru
        _
      %p196 = scmp.lt.s32.totalorder %s13, 2
      // Predicated region
      $region21: #{forward.16} parent=5 // pred_check
        %p197 = pneg %p196
      $region22: #{forward.16} parent=5 // pred_check_branch
        %199 = sbr.rel (%p197) target = $region24
      $region23: #{forward.16} parent=5 // pred_region
        // Predicated region
        $region25: #{forward.16} parent=23 // pred_check
          %p200 = pneg %p75
        $region26: #{forward.16} parent=23 // pred_check_branch
          %202 = sbr.rel (%p200) target = $region28
        $region27: #{forward.16} parent=23 // pred_region
          %s203 = sand.u32 %s65, 1
          %s204 = sand.u32 %s65, 1
          %s205 = smul.addr %s204, 16
          %s206 = scalar_lea.vmem [#allocation2], %s205
          %s207 = smul.addr %s13, 8
          %s208 = scalar_lea.vmem %s2, %s207
          // Predicated region
          $region29: #{forward.16} parent=27 // pred_check
            _
          $region30: #{forward.16} parent=27 // pred_check_branch
            %210 = sbr.rel (0) target = $region32
          $region31: #{forward.16} parent=27 // pred_region
            // Predicated region
            $region33: #{forward.16} parent=31 // pred_check
              _
            $region34: #{forward.16} parent=31 // pred_check_branch
              %212 = sbr.rel (0) target = $region36
            $region35: #{forward.16} parent=31 // pred_region
              // Predicated region
              $region48: #{forward.16} parent=35 // pred_check
                _
              $region49: #{forward.16} parent=35 // pred_check_branch
                %230 = sbr.rel (0) target = $region51
              $region50: #{forward.16} parent=35 // pred_region
                loop: start=0, step=1, limit=1
                $region52: #{forward.16} parent=50 // loop_pre_header
                  _
                $region53: #{forward.16} parent=50 // loop_header
                  %s232 = sphi 0, %s236
                  %p233 = scmp.ge.s32.totalorder %s232, 1
                  %s237 = sphi %s208, %s208
                  %s238 = sphi %s206, %s206
                $region54: #{forward.16} parent=50 // loop_header_branch
                  %235 = sbr.rel (%p233) target = $region58
                $region55: #{forward.16} parent=50 // loop_body
                  %v239 = vld [vmem:[%s237] sm:$0xff]
                  %240 = vst [vmem:[%s238] sm:$0xff] %v239
                  %v241 = vld [vmem:[%s237 + $0x10] sm:$0xff]
                  %242 = vst [vmem:[%s238 + $0x8] sm:$0xff] %v241
                $region56: #{forward.16} parent=50 // loop_footer
                  %s236 = sadd.s32 1, %s232
                $region57: #{forward.16} parent=50 // loop_footer_branch
                  %231 = sbr.rel target = $region53
                $region58: #{forward.16} parent=50 // loop_exit
                  _
              $region51: #{forward.16} parent=35 // pred_fallthru
                _
              // Predicated region
              $region59: #{forward.16} parent=35 // pred_check
                _
              $region60: #{forward.16} parent=35 // pred_check_branch
                %244 = sbr.rel target = $region62
              $region61: #{forward.16} parent=35 // pred_region
                _
              $region62: #{forward.16} parent=35 // pred_fallthru
                _
            $region36: #{forward.16} parent=31 // pred_fallthru
              _
            // Predicated region
            $region37: #{forward.16} parent=31 // pred_check
              _
            $region38: #{forward.16} parent=31 // pred_check_branch
              %214 = sbr.rel target = $region40
            $region39: #{forward.16} parent=31 // pred_region
              %s216 = ssub.s32 256, 1
              loop: start=0, step=1, limit=1
              $region41: #{forward.16} parent=39 // loop_pre_header
                _
              $region42: #{forward.16} parent=39 // loop_header
                %s218 = sphi 0, %s222
                %p219 = scmp.ge.s32.totalorder %s218, 1
                %s223 = sphi %s208, %s208
                %s224 = sphi %s206, %s206
              $region43: #{forward.16} parent=39 // loop_header_branch
                %221 = sbr.rel (%p219) target = $region47
              $region44: #{forward.16} parent=39 // loop_body
                %v225 = vld [vmem:[%s223] sm:%s216]
                %226 = vst [vmem:[%s224] sm:%s216] %v225
                %v227 = vld [vmem:[%s223 + $0x10] sm:%s216]
                %228 = vst [vmem:[%s224 + $0x8] sm:%s216] %v227
              $region45: #{forward.16} parent=39 // loop_footer
                %s222 = sadd.s32 1, %s218
              $region46: #{forward.16} parent=39 // loop_footer_branch
                %217 = sbr.rel target = $region42
              $region47: #{forward.16} parent=39 // loop_exit
                _
            $region40: #{forward.16} parent=31 // pred_fallthru
              _
          $region32: #{forward.16} parent=27 // pred_fallthru
            _
          %245 = vnop
        $region28: #{forward.16} parent=23 // pred_fallthru
          _
      $region24: #{forward.16} parent=5 // pred_fallthru
        _
      %p246 = scmp.le.s32.totalorder 1, %s13
      %p247 = scmp.lt.s32.totalorder %s13, 3
      %p248 = pnand %p246, %p247
      %p249 = pneg %p248
      // Predicated region
      $region63: #{forward.16} parent=5 // pred_check
        _
      $region64: #{forward.16} parent=5 // pred_check_branch
        %251 = sbr.rel (%p248) target = $region66
      $region65: #{forward.16} parent=5 // pred_region
        %s252 = ssub.s32 %s13, 1
        %s253 = sand.u32 %s68, 1
        %s254 = sand.u32 %s68, 1
        %s255 = smul.addr %s254, 16
        %s256 = scalar_lea.vmem [#allocation2], %s255
        // Predicated region
        $region67: #{forward.16} parent=65 // pred_check
          %p257 = pneg %p81
        $region68: #{forward.16} parent=65 // pred_check_branch
          %259 = sbr.rel (%p257) target = $region70
        $region69: #{forward.16} parent=65 // pred_region
          _
        $region70: #{forward.16} parent=65 // pred_fallthru
          _
        %p260 = pneg %p34
        %p261 = pneg %p31
        %p262 = pneg %p55
        %p263 = pneg %p52
        %s264 = sand.u32 %s68, 1
        %s265 = sand.u32 %s68, 1
        %s266 = smul.addr %s265, 16
        %s267 = scalar_lea.vmem [#allocation2], %s266
        %p268 = pneg %p81
        %p269 = pneg %p78
        %p270 = pneg %p107
        %p271 = pneg %p104
        %p272 = scmp.lt.s32.totalorder %s18, 1
        %s273 = scalar_select %p272, %s18, 1
        %s274 = smul.addr %s273, 8
        %s275 = scalar_lea.vmem %s3, %s274
        %p276 = pneg %p133
        %p277 = pneg %p130
        %p278 = scmp.lt.s32.totalorder %s18, 1
        %s279 = scalar_select %p278, %s18, 1
        %s280 = smul.addr %s279, 4
        %s281 = scalar_lea.vmem %s4, %s280
        %p282 = pneg %p154
        %p283 = pneg %p151
        %p284 = pneg %p175
        %p285 = pneg %p172
        %p286 = scmp.lt.s32.totalorder %s18, 1
        %s287 = scalar_select %p286, %s18, 1
        %s288 = smul.addr %s287, 8
        %s289 = scalar_lea.vmem %s3, %s288
        %p290 = scmp.lt.s32.totalorder %s18, 1
        %s291 = scalar_select %p290, %s18, 1
        %s292 = smul.addr %s291, 4
        %s293 = scalar_lea.vmem %s4, %s292
        %p294 = scmp.eq.s32.totalorder %s18, 0
        // Predicated region
        $region71: #{forward.16} parent=65 // pred_check
          %p295 = pneg %p294
        $region72: #{forward.16} parent=65 // pred_check_branch
          %297 = sbr.rel (%p295) target = $region74
        $region73: #{forward.16} parent=65 // pred_region
          %vm298 = vcmask 3072
          %299 = vst.msk [vmem:[%s5] sm:$0xf] %vm298, 0.0
          %300 = vst.msk [vmem:[%s6] sm:$0xf] %vm298, 0.0
        $region74: #{forward.16} parent=65 // pred_fallthru
          _
        %v301 = vld [vmem:[%s0] sm:$0xff]
        %v302 = vld [vmem:[%s256] sm:$0xff]
        %v303 = vld [vmem:[%s256 + $0x8] sm:$0xff]
        %vm304 = vcmask 130048
        %v306 = vsel %vm304, %v301, 0
        %308 = vmatpush.msra.mxu0 0.0
        %309 = vmatpush.msra.mxu0 0.0
        %310 = vmatpush.msra.mxu0 0.0
        %311 = vmatpush.msra.mxu0 0.0
        %312 = vmatpush.msra.mxu0 0.0
        %313 = vmatpush.msra.mxu0 0.0
        %314 = vmatpush.msra.mxu0 0.0
        %315 = vmatpush.msra.mxu0 0.0
        %316 = vmatpush.msra.mxu0 0.0
        %317 = vmatpush.msra.mxu0 0.0
        %318 = vmatpush.msra.mxu0 0.0
        %319 = vmatpush.msra.mxu0 0.0
        %320 = vmatpush.msra.mxu0 0.0
        %321 = vmatpush.msra.mxu0 0.0
        %v322 = vand.u32 %v303, 4294901760
        %323 = vmatpush.msra.mxu0 %v322
        %v324 = vand.u32 %v302, 4294901760
        %325 = vmatpush.msra.mxu0 %v324
        %v326 = vand.u32 %v306, 4294901760
        %v327 = vsub.f32 %v306, %v326
        %v328 = vand.u32 %v327, 4294901760
        %v329 = vsub.f32 %v327, %v328
        %v330 = vand.u32 %v329, 4294901760
        %331 = vmatmul.f32.gmra.mxu0 %v330
        %v332 = vpop.f32.mrf.mxu0
        %v333 = vadd.f32 0.0, %v332
        %334 = vdwg.mxu0
        %335 = vmatpush.msra.mxu0 0.0
        %336 = vmatpush.msra.mxu0 0.0
        %337 = vmatpush.msra.mxu0 0.0
        %338 = vmatpush.msra.mxu0 0.0
        %339 = vmatpush.msra.mxu0 0.0
        %340 = vmatpush.msra.mxu0 0.0
        %341 = vmatpush.msra.mxu0 0.0
        %342 = vmatpush.msra.mxu0 0.0
        %343 = vmatpush.msra.mxu0 0.0
        %344 = vmatpush.msra.mxu0 0.0
        %345 = vmatpush.msra.mxu0 0.0
        %346 = vmatpush.msra.mxu0 0.0
        %347 = vmatpush.msra.mxu0 0.0
        %348 = vmatpush.msra.mxu0 0.0
        %v349 = vand.u32 %v303, 4294901760
        %v350 = vsub.f32 %v303, %v349
        %v351 = vand.u32 %v350, 4294901760
        %v352 = vsub.f32 %v350, %v351
        %v353 = vand.u32 %v352, 4294901760
        %354 = vmatpush.msra.mxu0 %v353
        %v355 = vand.u32 %v302, 4294901760
        %v356 = vsub.f32 %v302, %v355
        %v357 = vand.u32 %v356, 4294901760
        %v358 = vsub.f32 %v356, %v357
        %v359 = vand.u32 %v358, 4294901760
        %360 = vmatpush.msra.mxu0 %v359
        %v361 = vand.u32 %v306, 4294901760
        %362 = vmatmul.f32.gmra.mxu0 %v361
        %v363 = vpop.f32.mrf.mxu0
        %v364 = vadd.f32 %v333, %v363
        %365 = vdwg.mxu0
        %366 = vmatpush.msra.mxu0 0.0
        %367 = vmatpush.msra.mxu0 0.0
        %368 = vmatpush.msra.mxu0 0.0
        %369 = vmatpush.msra.mxu0 0.0
        %370 = vmatpush.msra.mxu0 0.0
        %371 = vmatpush.msra.mxu0 0.0
        %372 = vmatpush.msra.mxu0 0.0
        %373 = vmatpush.msra.mxu0 0.0
        %374 = vmatpush.msra.mxu0 0.0
        %375 = vmatpush.msra.mxu0 0.0
        %376 = vmatpush.msra.mxu0 0.0
        %377 = vmatpush.msra.mxu0 0.0
        %378 = vmatpush.msra.mxu0 0.0
        %379 = vmatpush.msra.mxu0 0.0
        %v380 = vand.u32 %v303, 4294901760
        %v381 = vsub.f32 %v303, %v380
        %382 = vmatpush.msra.mxu0 %v381
        %v383 = vand.u32 %v302, 4294901760
        %v384 = vsub.f32 %v302, %v383
        %385 = vmatpush.msra.mxu0 %v384
        %v386 = vand.u32 %v306, 4294901760
        %v387 = vsub.f32 %v306, %v386
        %388 = vmatmul.f32.gmra.mxu0 %v387
        %v389 = vpop.f32.mrf.mxu0
        %v390 = vadd.f32 %v364, %v389
        %391 = vdwg.mxu0
        %392 = vmatpush.msra.mxu0 0.0
        %393 = vmatpush.msra.mxu0 0.0
        %394 = vmatpush.msra.mxu0 0.0
        %395 = vmatpush.msra.mxu0 0.0
        %396 = vmatpush.msra.mxu0 0.0
        %397 = vmatpush.msra.mxu0 0.0
        %398 = vmatpush.msra.mxu0 0.0
        %399 = vmatpush.msra.mxu0 0.0
        %400 = vmatpush.msra.mxu0 0.0
        %401 = vmatpush.msra.mxu0 0.0
        %402 = vmatpush.msra.mxu0 0.0
        %403 = vmatpush.msra.mxu0 0.0
        %404 = vmatpush.msra.mxu0 0.0
        %405 = vmatpush.msra.mxu0 0.0
        %v406 = vand.u32 %v303, 4294901760
        %407 = vmatpush.msra.mxu0 %v406
        %v408 = vand.u32 %v302, 4294901760
        %409 = vmatpush.msra.mxu0 %v408
        %v410 = vand.u32 %v306, 4294901760
        %v411 = vsub.f32 %v306, %v410
        %v412 = vand.u32 %v411, 4294901760
        %413 = vmatmul.f32.gmra.mxu0 %v412
        %v414 = vpop.f32.mrf.mxu0
        %v415 = vadd.f32 %v390, %v414
        %416 = vdwg.mxu0
        %417 = vmatpush.msra.mxu0 0.0
        %418 = vmatpush.msra.mxu0 0.0
        %419 = vmatpush.msra.mxu0 0.0
        %420 = vmatpush.msra.mxu0 0.0
        %421 = vmatpush.msra.mxu0 0.0
        %422 = vmatpush.msra.mxu0 0.0
        %423 = vmatpush.msra.mxu0 0.0
        %424 = vmatpush.msra.mxu0 0.0
        %425 = vmatpush.msra.mxu0 0.0
        %426 = vmatpush.msra.mxu0 0.0
        %427 = vmatpush.msra.mxu0 0.0
        %428 = vmatpush.msra.mxu0 0.0
        %429 = vmatpush.msra.mxu0 0.0
        %430 = vmatpush.msra.mxu0 0.0
        %v431 = vand.u32 %v303, 4294901760
        %v432 = vsub.f32 %v303, %v431
        %v433 = vand.u32 %v432, 4294901760
        %434 = vmatpush.msra.mxu0 %v433
        %v435 = vand.u32 %v302, 4294901760
        %v436 = vsub.f32 %v302, %v435
        %v437 = vand.u32 %v436, 4294901760
        %438 = vmatpush.msra.mxu0 %v437
        %v439 = vand.u32 %v306, 4294901760
        %440 = vmatmul.f32.gmra.mxu0 %v439
        %v441 = vpop.f32.mrf.mxu0
        %v442 = vadd.f32 %v415, %v441
        %443 = vdwg.mxu0
        %444 = vmatpush.msra.mxu0 0.0
        %445 = vmatpush.msra.mxu0 0.0
        %446 = vmatpush.msra.mxu0 0.0
        %447 = vmatpush.msra.mxu0 0.0
        %448 = vmatpush.msra.mxu0 0.0
        %449 = vmatpush.msra.mxu0 0.0
        %450 = vmatpush.msra.mxu0 0.0
        %451 = vmatpush.msra.mxu0 0.0
        %452 = vmatpush.msra.mxu0 0.0
        %453 = vmatpush.msra.mxu0 0.0
        %454 = vmatpush.msra.mxu0 0.0
        %455 = vmatpush.msra.mxu0 0.0
        %456 = vmatpush.msra.mxu0 0.0
        %457 = vmatpush.msra.mxu0 0.0
        %v458 = vand.u32 %v303, 4294901760
        %459 = vmatpush.msra.mxu0 %v458
        %v460 = vand.u32 %v302, 4294901760
        %461 = vmatpush.msra.mxu0 %v460
        %v462 = vand.u32 %v306, 4294901760
        %463 = vmatmul.f32.gmra.mxu0 %v462
        %v464 = vpop.f32.mrf.mxu0
        %v465 = vadd.f32 %v442, %v464
        %466 = vdwg.mxu0
        %v467 = vld [vmem:[%s1] sm:$0xf]
        %vm468 = vcmask 64512
        %v470 = vsel %vm468, %v467, 0
        %472 = vmatpush.msra.mxu0 0.0
        %473 = vmatpush.msra.mxu0 0.0
        %474 = vmatpush.msra.mxu0 0.0
        %475 = vmatpush.msra.mxu0 0.0
        %476 = vmatpush.msra.mxu0 0.0
        %477 = vmatpush.msra.mxu0 0.0
        %478 = vmatpush.msra.mxu0 0.0
        %479 = vmatpush.msra.mxu0 0.0
        %480 = vmatpush.msra.mxu0 0.0
        %481 = vmatpush.msra.mxu0 0.0
        %482 = vmatpush.msra.mxu0 0.0
        %483 = vmatpush.msra.mxu0 0.0
        %484 = vmatpush.msra.mxu0 0.0
        %485 = vmatpush.msra.mxu0 0.0
        %486 = vmatpush.msra.mxu0 0.0
        %v487 = vand.u32 %v465, 4294901760
        %488 = vmatpush.msra.mxu0 %v487
        %v489 = vand.u32 %v470, 4294901760
        %v490 = vsub.f32 %v470, %v489
        %v491 = vand.u32 %v490, 4294901760
        %v492 = vsub.f32 %v490, %v491
        %v493 = vand.u32 %v492, 4294901760
        %494 = vmatmul.f32.gmra.mxu0 %v493
        %v495 = vpop.f32.mrf.mxu0
        %v496 = vadd.f32 0.0, %v495
        %497 = vdwg.mxu0
        %498 = vmatpush.msra.mxu0 0.0
        %499 = vmatpush.msra.mxu0 0.0
        %500 = vmatpush.msra.mxu0 0.0
        %501 = vmatpush.msra.mxu0 0.0
        %502 = vmatpush.msra.mxu0 0.0
        %503 = vmatpush.msra.mxu0 0.0
        %504 = vmatpush.msra.mxu0 0.0
        %505 = vmatpush.msra.mxu0 0.0
        %506 = vmatpush.msra.mxu0 0.0
        %507 = vmatpush.msra.mxu0 0.0
        %508 = vmatpush.msra.mxu0 0.0
        %509 = vmatpush.msra.mxu0 0.0
        %510 = vmatpush.msra.mxu0 0.0
        %511 = vmatpush.msra.mxu0 0.0
        %512 = vmatpush.msra.mxu0 0.0
        %v513 = vand.u32 %v465, 4294901760
        %v514 = vsub.f32 %v465, %v513
        %v515 = vand.u32 %v514, 4294901760
        %v516 = vsub.f32 %v514, %v515
        %v517 = vand.u32 %v516, 4294901760
        %518 = vmatpush.msra.mxu0 %v517
        %v519 = vand.u32 %v470, 4294901760
        %520 = vmatmul.f32.gmra.mxu0 %v519
        %v521 = vpop.f32.mrf.mxu0
        %v522 = vadd.f32 %v496, %v521
        %523 = vdwg.mxu0
        %524 = vmatpush.msra.mxu0 0.0
        %525 = vmatpush.msra.mxu0 0.0
        %526 = vmatpush.msra.mxu0 0.0
        %527 = vmatpush.msra.mxu0 0.0
        %528 = vmatpush.msra.mxu0 0.0
        %529 = vmatpush.msra.mxu0 0.0
        %530 = vmatpush.msra.mxu0 0.0
        %531 = vmatpush.msra.mxu0 0.0
        %532 = vmatpush.msra.mxu0 0.0
        %533 = vmatpush.msra.mxu0 0.0
        %534 = vmatpush.msra.mxu0 0.0
        %535 = vmatpush.msra.mxu0 0.0
        %536 = vmatpush.msra.mxu0 0.0
        %537 = vmatpush.msra.mxu0 0.0
        %538 = vmatpush.msra.mxu0 0.0
        %v539 = vand.u32 %v465, 4294901760
        %v540 = vsub.f32 %v465, %v539
        %541 = vmatpush.msra.mxu0 %v540
        %v542 = vand.u32 %v470, 4294901760
        %v543 = vsub.f32 %v470, %v542
        %544 = vmatmul.f32.gmra.mxu0 %v543
        %v545 = vpop.f32.mrf.mxu0
        %v546 = vadd.f32 %v522, %v545
        %547 = vdwg.mxu0
        %548 = vmatpush.msra.mxu0 0.0
        %549 = vmatpush.msra.mxu0 0.0
        %550 = vmatpush.msra.mxu0 0.0
        %551 = vmatpush.msra.mxu0 0.0
        %552 = vmatpush.msra.mxu0 0.0
        %553 = vmatpush.msra.mxu0 0.0
        %554 = vmatpush.msra.mxu0 0.0
        %555 = vmatpush.msra.mxu0 0.0
        %556 = vmatpush.msra.mxu0 0.0
        %557 = vmatpush.msra.mxu0 0.0
        %558 = vmatpush.msra.mxu0 0.0
        %559 = vmatpush.msra.mxu0 0.0
        %560 = vmatpush.msra.mxu0 0.0
        %561 = vmatpush.msra.mxu0 0.0
        %562 = vmatpush.msra.mxu0 0.0
        %v563 = vand.u32 %v465, 4294901760
        %564 = vmatpush.msra.mxu0 %v563
        %v565 = vand.u32 %v470, 4294901760
        %v566 = vsub.f32 %v470, %v565
        %v567 = vand.u32 %v566, 4294901760
        %568 = vmatmul.f32.gmra.mxu0 %v567
        %v569 = vpop.f32.mrf.mxu0
        %v570 = vadd.f32 %v546, %v569
        %571 = vdwg.mxu0
        %572 = vmatpush.msra.mxu0 0.0
        %573 = vmatpush.msra.mxu0 0.0
        %574 = vmatpush.msra.mxu0 0.0
        %575 = vmatpush.msra.mxu0 0.0
        %576 = vmatpush.msra.mxu0 0.0
        %577 = vmatpush.msra.mxu0 0.0
        %578 = vmatpush.msra.mxu0 0.0
        %579 = vmatpush.msra.mxu0 0.0
        %580 = vmatpush.msra.mxu0 0.0
        %581 = vmatpush.msra.mxu0 0.0
        %582 = vmatpush.msra.mxu0 0.0
        %583 = vmatpush.msra.mxu0 0.0
        %584 = vmatpush.msra.mxu0 0.0
        %585 = vmatpush.msra.mxu0 0.0
        %586 = vmatpush.msra.mxu0 0.0
        %v587 = vand.u32 %v465, 4294901760
        %v588 = vsub.f32 %v465, %v587
        %v589 = vand.u32 %v588, 4294901760
        %590 = vmatpush.msra.mxu0 %v589
        %v591 = vand.u32 %v470, 4294901760
        %592 = vmatmul.f32.gmra.mxu0 %v591
        %v593 = vpop.f32.mrf.mxu0
        %v594 = vadd.f32 %v570, %v593
        %595 = vdwg.mxu0
        %596 = vmatpush.msra.mxu0 0.0
        %597 = vmatpush.msra.mxu0 0.0
        %598 = vmatpush.msra.mxu0 0.0
        %599 = vmatpush.msra.mxu0 0.0
        %600 = vmatpush.msra.mxu0 0.0
        %601 = vmatpush.msra.mxu0 0.0
        %602 = vmatpush.msra.mxu0 0.0
        %603 = vmatpush.msra.mxu0 0.0
        %604 = vmatpush.msra.mxu0 0.0
        %605 = vmatpush.msra.mxu0 0.0
        %606 = vmatpush.msra.mxu0 0.0
        %607 = vmatpush.msra.mxu0 0.0
        %608 = vmatpush.msra.mxu0 0.0
        %609 = vmatpush.msra.mxu0 0.0
        %610 = vmatpush.msra.mxu0 0.0
        %v611 = vand.u32 %v465, 4294901760
        %612 = vmatpush.msra.mxu0 %v611
        %v613 = vand.u32 %v470, 4294901760
        %614 = vmatmul.f32.gmra.mxu0 %v613
        %v615 = vpop.f32.mrf.mxu0
        %v616 = vadd.f32 %v594, %v615
        %617 = vdwg.mxu0
        %618 = vst [vmem:[%s289] sm:$0xff] %v465
        %619 = vst [vmem:[%s293] sm:$0xf] %v616
        %v620 = vld [vmem:[%s5] sm:$0xf]
        %vm621 = vcmask 1043456
        %v622 = vsel %vm621, %v616, 0.0
        %623 = vadd.xlane.f32.xlu0 %v622
        %v624 = vpop.xlane.xlu0 %623
        %v625 = vadd.f32 %v620, %v624
        %vm626 = vcmask 3072
        %627 = vst.msk [vmem:[%s5] sm:$0xf] %vm626, %v625
        %v628 = vld [vmem:[%s6] sm:$0xf]
        %v629 = vmul.f32 %v616, %v616
        %v630 = vsel %vm621, %v629, 0.0
        %631 = vadd.xlane.f32.xlu0 %v630
        %v632 = vpop.xlane.xlu0 %631
        %v633 = vadd.f32 %v628, %v632
        %634 = vst.msk [vmem:[%s6] sm:$0xf] %vm626, %v633
        %p635 = scmp.lt.s32.totalorder %s18, 1
        %s636 = scalar_select %p635, %s18, 1
        %s637 = smul.addr %s636, 8
        %s638 = scalar_lea.vmem %s3, %s637
        %p639 = scmp.lt.s32.totalorder %s18, 1
        %s640 = scalar_select %p639, %s18, 1
        %s641 = smul.addr %s640, 4
        %s642 = scalar_lea.vmem %s4, %s641
        // Predicated region
        $region75: #{forward.16} parent=65 // pred_check
          %p643 = pneg %p104
        $region76: #{forward.16} parent=65 // pred_check_branch
          %645 = sbr.rel (%p643) target = $region78
        $region77: #{forward.16} parent=65 // pred_region
          _
        $region78: #{forward.16} parent=65 // pred_fallthru
          _
        // Predicated region
        $region79: #{forward.16} parent=65 // pred_check
          %p646 = pneg %p130
        $region80: #{forward.16} parent=65 // pred_check_branch
          %648 = sbr.rel (%p646) target = $region82
        $region81: #{forward.16} parent=65 // pred_region
          _
        $region82: #{forward.16} parent=65 // pred_fallthru
          _
        // Predicated region
        $region83: #{forward.16} parent=65 // pred_check
          %p649 = pneg %p151
        $region84: #{forward.16} parent=65 // pred_check_branch
          %651 = sbr.rel (%p649) target = $region86
        $region85: #{forward.16} parent=65 // pred_region
          _
        $region86: #{forward.16} parent=65 // pred_fallthru
          _
        // Predicated region
        $region87: #{forward.16} parent=65 // pred_check
          %p652 = pneg %p172
        $region88: #{forward.16} parent=65 // pred_check_branch
          %654 = sbr.rel (%p652) target = $region90
        $region89: #{forward.16} parent=65 // pred_region
          _
        $region90: #{forward.16} parent=65 // pred_fallthru
          _
        // Predicated region
        $region91: #{forward.16} parent=65 // pred_check
          %p655 = pneg %p151
        $region92: #{forward.16} parent=65 // pred_check_branch
          %657 = sbr.rel (%p655) target = $region94
        $region93: #{forward.16} parent=65 // pred_region
          _
        $region94: #{forward.16} parent=65 // pred_fallthru
          _
        // Predicated region
        $region95: #{forward.16} parent=65 // pred_check
          %p658 = pneg %p172
        $region96: #{forward.16} parent=65 // pred_check_branch
          %660 = sbr.rel (%p658) target = $region98
        $region97: #{forward.16} parent=65 // pred_region
          _
        $region98: #{forward.16} parent=65 // pred_fallthru
          _
      $region66: #{forward.16} parent=5 // pred_fallthru
        _
      %p661 = scmp.le.s32.totalorder 2, %s13
      // Predicated region
      $region99: #{forward.16} parent=5 // pred_check
        %p662 = pneg %p661
      $region100: #{forward.16} parent=5 // pred_check_branch
        %664 = sbr.rel (%p662) target = $region102
      $region101: #{forward.16} parent=5 // pred_region
        %s665 = ssub.s32 %s13, 2
        // Predicated region
        $region103: #{forward.16} parent=101 // pred_check
          %p666 = pneg %p110
        $region104: #{forward.16} parent=101 // pred_check_branch
          %668 = sbr.rel (%p666) target = $region106
        $region105: #{forward.16} parent=101 // pred_region
          %p669 = scmp.lt.s32.totalorder %s19, 1
          %s670 = scalar_select %p669, %s19, 1
          %s671 = smul.addr %s670, 8
          %s672 = scalar_lea.vmem %s3, %s671
        $region106: #{forward.16} parent=101 // pred_fallthru
          _
        // Predicated region
        $region107: #{forward.16} parent=101 // pred_check
          %p673 = pneg %p136
        $region108: #{forward.16} parent=101 // pred_check_branch
          %675 = sbr.rel (%p673) target = $region110
        $region109: #{forward.16} parent=101 // pred_region
          %p676 = scmp.lt.s32.totalorder %s19, 1
          %s677 = scalar_select %p676, %s19, 1
          %s678 = smul.addr %s677, 4
          %s679 = scalar_lea.vmem %s4, %s678
        $region110: #{forward.16} parent=101 // pred_fallthru
          _
      $region102: #{forward.16} parent=5 // pred_fallthru
        _
    $region6: #{forward.16} parent=1 // loop_footer
      %s17 = sadd.s32 1, %s13
    $region7: #{forward.16} parent=1 // loop_footer_branch
      %12 = sbr.rel target = $region3
    $region8: #{forward.16} parent=1 // loop_exit
      _

// kernel: forward.17
$region0: #{forward.17}
  #allocation0 [shape = 'u32[]', space=smem, size = 0x4, offset = 0x4, fixed_abs, tag = 'smem constant byte address 0x4 - core index']
  #allocation1 [shape = 'u32[72,128]{1,0:T(1,128)}', space=vmem, size = 0x9000, scoped, tag = 'internal scratch']
  %s0 = inlined_call_operand.vmem [shape: f32[4,1], index: 0, kind: input, shape index: {}]
  %s1 = inlined_call_operand.vmem [shape: f32[4,1], index: 1, kind: input, shape index: {}]
  %s2 = inlined_call_operand.vmem [shape: f32[4,256], index: 2, kind: input, shape index: {}]
  %s3 = inlined_call_operand.vmem [shape: f32[4,256], index: 3, kind: output, shape index: {}]
  %s4 = sld [smem:[#allocation0]]
  $region45: #{forward.17} parent=0
    _
  %s6 = ssub.s32 1, %s4
  %s7 = scalar_select 0, %s6, %s4
  loop: start=0, step=1, limit=4
  $region2: #{forward.17} parent=0 // loop_pre_header
    _
  $region3: #{forward.17} parent=0 // loop_header
    %s9 = sphi 0, %s13
    %p10 = scmp.ge.s32.totalorder %s9, 4
    %s17 = sphi 0, %s17
    %s19 = sphi 0, %s17
    %s20 = sphi 0, %s19
    %s34 = sphi 0, %s20
    %s38 = sphi 0, %s38
    %s40 = sphi 0, %s38
    %s41 = sphi 0, %s40
    %s55 = sphi 0, %s41
    %s61 = sphi 0, %s63
    %s64 = sphi 0, %s61
    %s65 = sphi 0, %s64
    %s81 = sphi 0, %s65
    %s87 = sphi 0, %s89
    %s90 = sphi 0, %s87
    %s91 = sphi 0, %s90
    %s107 = sphi 0, %s91
  $region4: #{forward.17} parent=0 // loop_header_branch
    %12 = sbr.rel (%p10) target = $region8
  $region5: #{forward.17} parent=0 // loop_body
    %s14 = ssub.s32 %s9, 1
    %s15 = ssub.s32 %s9, 2
    %s16 = sadd.s32 %s9, 1
    %s18 = sadd.s32 %s17, 1
    %p21 = scmp.eq.s32.totalorder %s9, 1
    %p22 = scmp.ne.s32.totalorder %s17, %s19
    %p23 = scmp.eq.s32.totalorder %s9, 0
    %p24 = por %p22, %p23
    %p25 = scmp.ne.s32.totalorder %s17, %s19
    %p26 = scmp.eq.s32.totalorder %s14, 1
    %p27 = por %p25, %p26
    %p28 = scmp.ne.s32.totalorder %s19, %s20
    %p29 = scmp.eq.s32.totalorder %s14, 0
    %p30 = por %p28, %p29
    %p31 = scmp.ne.s32.totalorder %s19, %s20
    %p32 = scmp.eq.s32.totalorder %s15, 1
    %p33 = por %p31, %p32
    %p35 = scmp.ne.s32.totalorder %s20, %s34
    %p36 = scmp.eq.s32.totalorder %s15, 0
    %p37 = por %p35, %p36
    %s39 = sadd.s32 %s38, 1
    %p42 = scmp.eq.s32.totalorder %s9, 1
    %p43 = scmp.ne.s32.totalorder %s38, %s40
    %p44 = scmp.eq.s32.totalorder %s9, 0
    %p45 = por %p43, %p44
    %p46 = scmp.ne.s32.totalorder %s38, %s40
    %p47 = scmp.eq.s32.totalorder %s14, 1
    %p48 = por %p46, %p47
    %p49 = scmp.ne.s32.totalorder %s40, %s41
    %p50 = scmp.eq.s32.totalorder %s14, 0
    %p51 = por %p49, %p50
    %p52 = scmp.ne.s32.totalorder %s40, %s41
    %p53 = scmp.eq.s32.totalorder %s15, 1
    %p54 = por %p52, %p53
    %p56 = scmp.ne.s32.totalorder %s41, %s55
    %p57 = scmp.eq.s32.totalorder %s15, 0
    %p58 = por %p56, %p57
    %s59 = ssub.s32 %s9, %s16
    %p60 = scmp.eq.s32.totalorder %s59, 0
    %s62 = sadd.s32 %s61, 1
    %s63 = scalar_select %p60, %s61, %s62
    %p66 = pneg %p60
    %p67 = scmp.eq.s32.totalorder %s9, 1
    %p68 = por %p66, %p67
    %p69 = scmp.ne.s32.totalorder %s61, %s64
    %p70 = scmp.eq.s32.totalorder %s9, 0
    %p71 = por %p69, %p70
    %p72 = scmp.ne.s32.totalorder %s61, %s64
    %p73 = scmp.eq.s32.totalorder %s14, 1
    %p74 = por %p72, %p73
    %p75 = scmp.ne.s32.totalorder %s64, %s65
    %p76 = scmp.eq.s32.totalorder %s14, 0
    %p77 = por %p75, %p76
    %p78 = scmp.ne.s32.totalorder %s64, %s65
    %p79 = scmp.eq.s32.totalorder %s15, 1
    %p80 = por %p78, %p79
    %p82 = scmp.ne.s32.totalorder %s65, %s81
    %p83 = scmp.eq.s32.totalorder %s15, 0
    %p84 = por %p82, %p83
    %s85 = ssub.s32 %s9, %s16
    %p86 = scmp.eq.s32.totalorder %s85, 0
    %s88 = sadd.s32 %s87, 1
    %s89 = scalar_select %p86, %s87, %s88
    %p92 = pneg %p86
    %p93 = scmp.eq.s32.totalorder %s9, 1
    %p94 = por %p92, %p93
    %p95 = scmp.ne.s32.totalorder %s87, %s90
    %p96 = scmp.eq.s32.totalorder %s9, 0
    %p97 = por %p95, %p96
    %p98 = scmp.ne.s32.totalorder %s87, %s90
    %p99 = scmp.eq.s32.totalorder %s14, 1
    %p100 = por %p98, %p99
    %p101 = scmp.ne.s32.totalorder %s90, %s91
    %p102 = scmp.eq.s32.totalorder %s14, 0
    %p103 = por %p101, %p102
    %p104 = scmp.ne.s32.totalorder %s90, %s91
    %p105 = scmp.eq.s32.totalorder %s15, 1
    %p106 = por %p104, %p105
    %p108 = scmp.ne.s32.totalorder %s91, %s107
    %p109 = scmp.eq.s32.totalorder %s15, 0
    %p110 = por %p108, %p109
    %p111 = scmp.le.s32.totalorder 1, %s9
    %p112 = scmp.lt.s32.totalorder %s9, 3
    %p113 = pnand %p111, %p112
    %p114 = pneg %p113
    // Predicated region
    $region9: #{forward.17} parent=5 // pred_check
      _
    $region10: #{forward.17} parent=5 // pred_check_branch
      %116 = sbr.rel (%p113) target = $region12
    $region11: #{forward.17} parent=5 // pred_region
      %s117 = ssub.s32 %s9, 1
      // Predicated region
      $region13: #{forward.17} parent=11 // pred_check
        %p118 = pneg %p30
      $region14: #{forward.17} parent=11 // pred_check_branch
        %120 = sbr.rel (%p118) target = $region16
      $region15: #{forward.17} parent=11 // pred_region
        _
      $region16: #{forward.17} parent=11 // pred_fallthru
        _
      // Predicated region
      $region17: #{forward.17} parent=11 // pred_check
        %p121 = pneg %p51
      $region18: #{forward.17} parent=11 // pred_check_branch
        %123 = sbr.rel (%p121) target = $region20
      $region19: #{forward.17} parent=11 // pred_region
        _
      $region20: #{forward.17} parent=11 // pred_fallthru
        _
    $region12: #{forward.17} parent=5 // pred_fallthru
      _
    %p124 = scmp.lt.s32.totalorder %s9, 2
    // Predicated region
    $region21: #{forward.17} parent=5 // pred_check
      %p125 = pneg %p124
    $region22: #{forward.17} parent=5 // pred_check_branch
      %127 = sbr.rel (%p125) target = $region24
    $region23: #{forward.17} parent=5 // pred_region
      // Predicated region
      $region25: #{forward.17} parent=23 // pred_check
        %p128 = pneg %p71
      $region26: #{forward.17} parent=23 // pred_check_branch
        %130 = sbr.rel (%p128) target = $region28
      $region27: #{forward.17} parent=23 // pred_region
        %p131 = scmp.lt.s32.totalorder %s9, 1
        %s132 = scalar_select %p131, %s9, 1
        %s133 = smul.addr %s132, 4
        %s134 = scalar_lea.vmem %s2, %s133
      $region28: #{forward.17} parent=23 // pred_fallthru
        _
    $region24: #{forward.17} parent=5 // pred_fallthru
      _
    %p135 = scmp.le.s32.totalorder 1, %s9
    %p136 = scmp.lt.s32.totalorder %s9, 3
    %p137 = pnand %p135, %p136
    %p138 = pneg %p137
    // Predicated region
    $region29: #{forward.17} parent=5 // pred_check
      _
    $region30: #{forward.17} parent=5 // pred_check_branch
      %140 = sbr.rel (%p137) target = $region32
    $region31: #{forward.17} parent=5 // pred_region
      %s141 = ssub.s32 %s9, 1
      %p142 = pneg %p30
      %p143 = pneg %p27
      %p144 = pneg %p51
      %p145 = pneg %p48
      %p146 = scmp.lt.s32.totalorder %s14, 1
      %s147 = scalar_select %p146, %s14, 1
      %s148 = smul.addr %s147, 4
      %s149 = scalar_lea.vmem %s2, %s148
      %p150 = pneg %p77
      %p151 = pneg %p74
      %p152 = pneg %p103
      %p153 = pneg %p100
      %p154 = scmp.lt.s32.totalorder %s14, 1
      %s155 = scalar_select %p154, %s14, 1
      %s156 = smul.addr %s155, 4
      %s157 = scalar_lea.vmem %s3, %s156
      %p158 = scmp.lt.s32.totalorder %s14, 1
      %s159 = scalar_select %p158, %s14, 1
      %s160 = smul.addr %s159, 4
      %s161 = scalar_lea.vmem %s2, %s160
      %p162 = scmp.lt.s32.totalorder %s14, 1
      %s163 = scalar_select %p162, %s14, 1
      %s164 = smul.addr %s163, 4
      %s165 = scalar_lea.vmem %s3, %s164
      %v166 = vld [vmem:[%s0] sm:$0xf]
      %v167 = vmul.f32 %v166, 0.00390625
      %v168 = vld [vmem:[%s1] sm:$0xf]
      %v169 = vmul.f32 %v168, 0.00390625
      %v170 = vmul.f32 %v167, %v167
      %v171 = vsub.f32 %v169, %v170
      %v172 = vadd.f32 %v171, 1e-05
      %v173 = vrsqrt.pop %v172
      %v174 = vmul.f32 %v173, %v172
      %v175 = vmul.f32 %v174, %v173
      %v176 = vmul.f32 0.5, %v175
      %v177 = vsub.f32 1.5, %v176
      %v178 = vmul.f32 %v173, %v177
      %vm179 = vweird.f32 %v172
      %vm180 = vweird.f32 %v173
      %vm181 = vmor %vm179, %vm180
      %v182 = vsel %vm181, %v173, %v178
      %v183 = vld [vmem:[%s161] sm:$0xf]
      %185 = vset.pattern.permute.xlu0 0
      %186 = vperm.xlu0 %185, %v167
      %v187 = vpop.permute.xlu0 %186
      %v189 = vsub.f32 %v183, %v187
      %191 = vset.pattern.permute.xlu0 0
      %192 = vperm.xlu0 %191, %v182
      %v193 = vpop.permute.xlu0 %192
      %v195 = vmul.f32 %v189, %v193
      %v196 = vmax.f32 %v195, 0.0
      %v197 = vmin.f32 %v196, 1.0
      %198 = vst [vmem:[%s165] sm:$0xf] %v197
      %p199 = scmp.lt.s32.totalorder %s14, 1
      %s200 = scalar_select %p199, %s14, 1
      %s201 = smul.addr %s200, 4
      %s202 = scalar_lea.vmem %s3, %s201
      // Predicated region
      $region33: #{forward.17} parent=31 // pred_check
        %p203 = pneg %p100
      $region34: #{forward.17} parent=31 // pred_check_branch
        %205 = sbr.rel (%p203) target = $region36
      $region35: #{forward.17} parent=31 // pred_region
        _
      $region36: #{forward.17} parent=31 // pred_fallthru
        _
    $region32: #{forward.17} parent=5 // pred_fallthru
      _
    %p206 = scmp.le.s32.totalorder 2, %s9
    // Predicated region
    $region37: #{forward.17} parent=5 // pred_check
      %p207 = pneg %p206
    $region38: #{forward.17} parent=5 // pred_check_branch
      %209 = sbr.rel (%p207) target = $region40
    $region39: #{forward.17} parent=5 // pred_region
      %s210 = ssub.s32 %s9, 2
      // Predicated region
      $region41: #{forward.17} parent=39 // pred_check
        %p211 = pneg %p106
      $region42: #{forward.17} parent=39 // pred_check_branch
        %213 = sbr.rel (%p211) target = $region44
      $region43: #{forward.17} parent=39 // pred_region
        %p214 = scmp.lt.s32.totalorder %s15, 1
        %s215 = scalar_select %p214, %s15, 1
        %s216 = smul.addr %s215, 4
        %s217 = scalar_lea.vmem %s3, %s216
      $region44: #{forward.17} parent=39 // pred_fallthru
        _
    $region40: #{forward.17} parent=5 // pred_fallthru
      _
  $region6: #{forward.17} parent=0 // loop_footer
    %s13 = sadd.s32 1, %s9
  $region7: #{forward.17} parent=0 // loop_footer_branch
    %8 = sbr.rel target = $region3
  $region8: #{forward.17} parent=0 // loop_exit
    _

// kernel: forward.11
$region0: #{forward.11}
  #allocation0 [shape = 'u32[]', space=smem, size = 0x4, offset = 0x4, fixed_abs, tag = 'smem constant byte address 0x4 - core index']
  #allocation1 [shape = 'u32[72,128]{1,0:T(1,128)}', space=vmem, size = 0x9000, scoped, tag = 'internal scratch']
  %s0 = inlined_call_operand.vmem [shape: f32[7,4], index: 0, kind: input, shape index: {}]
  %s1 = inlined_call_operand.vmem [shape: f32[7,1], index: 1, kind: input, shape index: {}]
  %s2 = inlined_call_operand.vmem [shape: f32[6,7], index: 2, kind: input, shape index: {}]
  %s3 = inlined_call_operand.vmem [shape: f32[6,1], index: 3, kind: input, shape index: {}]
  %s4 = inlined_call_operand.vmem [shape: f32[5,6], index: 4, kind: input, shape index: {}]
  %s5 = inlined_call_operand.vmem [shape: f32[5,1], index: 5, kind: input, shape index: {}]
  %s6 = inlined_call_operand.vmem [shape: f32[16,5], index: 6, kind: input, shape index: {}]
  %s7 = inlined_call_operand.vmem [shape: f32[16,1], index: 7, kind: input, shape index: {}]
  %s8 = inlined_call_operand.vmem [shape: f32[4,256], index: 8, kind: input, shape index: {}]
  %s9 = inlined_call_operand.vmem [shape: f32[16,256], index: 9, kind: output, shape index: {}]
  %s10 = sld [smem:[#allocation0]]
  $region103: #{forward.11} parent=0
    _
  %s12 = ssub.s32 1, %s10
  %s13 = scalar_select 0, %s12, %s10
  $region1: #{forward.11} parent=0
    #allocation2 [shape = 'u8[16384]{0}', space=vmem, size = 0x4000, scoped, tag = 'output window, operand 0']
    loop: start=0, step=1, limit=4
    $region2: #{forward.11} parent=1 // loop_pre_header
      _
    $region3: #{forward.11} parent=1 // loop_header
      %s15 = sphi 0, %s19
      %p16 = scmp.ge.s32.totalorder %s15, 4
      %s23 = sphi 0, %s23
      %s25 = sphi 0, %s23
      %s26 = sphi 0, %s25
      %s40 = sphi 0, %s26
      %s44 = sphi 0, %s44
      %s46 = sphi 0, %s44
      %s47 = sphi 0, %s46
      %s61 = sphi 0, %s47
      %s65 = sphi 0, %s65
      %s67 = sphi 0, %s65
      %s68 = sphi 0, %s67
      %s82 = sphi 0, %s68
      %s86 = sphi 0, %s86
      %s88 = sphi 0, %s86
      %s89 = sphi 0, %s88
      %s103 = sphi 0, %s89
      %s107 = sphi 0, %s107
      %s109 = sphi 0, %s107
      %s110 = sphi 0, %s109
      %s124 = sphi 0, %s110
      %s128 = sphi 0, %s128
      %s130 = sphi 0, %s128
      %s131 = sphi 0, %s130
      %s145 = sphi 0, %s131
      %s149 = sphi 0, %s149
      %s151 = sphi 0, %s149
      %s152 = sphi 0, %s151
      %s166 = sphi 0, %s152
      %s170 = sphi 0, %s170
      %s172 = sphi 0, %s170
      %s173 = sphi 0, %s172
      %s187 = sphi 0, %s173
      %s193 = sphi 0, %s195
      %s196 = sphi 0, %s193
      %s197 = sphi 0, %s196
      %s213 = sphi 0, %s197
      %s219 = sphi 0, %s221
      %s222 = sphi 0, %s219
      %s223 = sphi 0, %s222
      %s239 = sphi 0, %s223
    $region4: #{forward.11} parent=1 // loop_header_branch
      %18 = sbr.rel (%p16) target = $region8
    $region5: #{forward.11} parent=1 // loop_body
      %s20 = ssub.s32 %s15, 1
      %s21 = ssub.s32 %s15, 2
      %s22 = sadd.s32 %s15, 1
      %s24 = sadd.s32 %s23, 1
      %p27 = scmp.eq.s32.totalorder %s15, 1
      %p28 = scmp.ne.s32.totalorder %s23, %s25
      %p29 = scmp.eq.s32.totalorder %s15, 0
      %p30 = por %p28, %p29
      %p31 = scmp.ne.s32.totalorder %s23, %s25
      %p32 = scmp.eq.s32.totalorder %s20, 1
      %p33 = por %p31, %p32
      %p34 = scmp.ne.s32.totalorder %s25, %s26
      %p35 = scmp.eq.s32.totalorder %s20, 0
      %p36 = por %p34, %p35
      %p37 = scmp.ne.s32.totalorder %s25, %s26
      %p38 = scmp.eq.s32.totalorder %s21, 1
      %p39 = por %p37, %p38
      %p41 = scmp.ne.s32.totalorder %s26, %s40
      %p42 = scmp.eq.s32.totalorder %s21, 0
      %p43 = por %p41, %p42
      %s45 = sadd.s32 %s44, 1
      %p48 = scmp.eq.s32.totalorder %s15, 1
      %p49 = scmp.ne.s32.totalorder %s44, %s46
      %p50 = scmp.eq.s32.totalorder %s15, 0
      %p51 = por %p49, %p50
      %p52 = scmp.ne.s32.totalorder %s44, %s46
      %p53 = scmp.eq.s32.totalorder %s20, 1
      %p54 = por %p52, %p53
      %p55 = scmp.ne.s32.totalorder %s46, %s47
      %p56 = scmp.eq.s32.totalorder %s20, 0
      %p57 = por %p55, %p56
      %p58 = scmp.ne.s32.totalorder %s46, %s47
      %p59 = scmp.eq.s32.totalorder %s21, 1
      %p60 = por %p58, %p59
      %p62 = scmp.ne.s32.totalorder %s47, %s61
      %p63 = scmp.eq.s32.totalorder %s21, 0
      %p64 = por %p62, %p63
      %s66 = sadd.s32 %s65, 1
      %p69 = scmp.eq.s32.totalorder %s15, 1
      %p70 = scmp.ne.s32.totalorder %s65, %s67
      %p71 = scmp.eq.s32.totalorder %s15, 0
      %p72 = por %p70, %p71
      %p73 = scmp.ne.s32.totalorder %s65, %s67
      %p74 = scmp.eq.s32.totalorder %s20, 1
      %p75 = por %p73, %p74
      %p76 = scmp.ne.s32.totalorder %s67, %s68
      %p77 = scmp.eq.s32.totalorder %s20, 0
      %p78 = por %p76, %p77
      %p79 = scmp.ne.s32.totalorder %s67, %s68
      %p80 = scmp.eq.s32.totalorder %s21, 1
      %p81 = por %p79, %p80
      %p83 = scmp.ne.s32.totalorder %s68, %s82
      %p84 = scmp.eq.s32.totalorder %s21, 0
      %p85 = por %p83, %p84
      %s87 = sadd.s32 %s86, 1
      %p90 = scmp.eq.s32.totalorder %s15, 1
      %p91 = scmp.ne.s32.totalorder %s86, %s88
      %p92 = scmp.eq.s32.totalorder %s15, 0
      %p93 = por %p91, %p92
      %p94 = scmp.ne.s32.totalorder %s86, %s88
      %p95 = scmp.eq.s32.totalorder %s20, 1
      %p96 = por %p94, %p95
      %p97 = scmp.ne.s32.totalorder %s88, %s89
      %p98 = scmp.eq.s32.totalorder %s20, 0
      %p99 = por %p97, %p98
      %p100 = scmp.ne.s32.totalorder %s88, %s89
      %p101 = scmp.eq.s32.totalorder %s21, 1
      %p102 = por %p100, %p101
      %p104 = scmp.ne.s32.totalorder %s89, %s103
      %p105 = scmp.eq.s32.totalorder %s21, 0
      %p106 = por %p104, %p105
      %s108 = sadd.s32 %s107, 1
      %p111 = scmp.eq.s32.totalorder %s15, 1
      %p112 = scmp.ne.s32.totalorder %s107, %s109
      %p113 = scmp.eq.s32.totalorder %s15, 0
      %p114 = por %p112, %p113
      %p115 = scmp.ne.s32.totalorder %s107, %s109
      %p116 = scmp.eq.s32.totalorder %s20, 1
      %p117 = por %p115, %p116
      %p118 = scmp.ne.s32.totalorder %s109, %s110
      %p119 = scmp.eq.s32.totalorder %s20, 0
      %p120 = por %p118, %p119
      %p121 = scmp.ne.s32.totalorder %s109, %s110
      %p122 = scmp.eq.s32.totalorder %s21, 1
      %p123 = por %p121, %p122
      %p125 = scmp.ne.s32.totalorder %s110, %s124
      %p126 = scmp.eq.s32.totalorder %s21, 0
      %p127 = por %p125, %p126
      %s129 = sadd.s32 %s128, 1
      %p132 = scmp.eq.s32.totalorder %s15, 1
      %p133 = scmp.ne.s32.totalorder %s128, %s130
      %p134 = scmp.eq.s32.totalorder %s15, 0
      %p135 = por %p133, %p134
      %p136 = scmp.ne.s32.totalorder %s128, %s130
      %p137 = scmp.eq.s32.totalorder %s20, 1
      %p138 = por %p136, %p137
      %p139 = scmp.ne.s32.totalorder %s130, %s131
      %p140 = scmp.eq.s32.totalorder %s20, 0
      %p141 = por %p139, %p140
      %p142 = scmp.ne.s32.totalorder %s130, %s131
      %p143 = scmp.eq.s32.totalorder %s21, 1
      %p144 = por %p142, %p143
      %p146 = scmp.ne.s32.totalorder %s131, %s145
      %p147 = scmp.eq.s32.totalorder %s21, 0
      %p148 = por %p146, %p147
      %s150 = sadd.s32 %s149, 1
      %p153 = scmp.eq.s32.totalorder %s15, 1
      %p154 = scmp.ne.s32.totalorder %s149, %s151
      %p155 = scmp.eq.s32.totalorder %s15, 0
      %p156 = por %p154, %p155
      %p157 = scmp.ne.s32.totalorder %s149, %s151
      %p158 = scmp.eq.s32.totalorder %s20, 1
      %p159 = por %p157, %p158
      %p160 = scmp.ne.s32.totalorder %s151, %s152
      %p161 = scmp.eq.s32.totalorder %s20, 0
      %p162 = por %p160, %p161
      %p163 = scmp.ne.s32.totalorder %s151, %s152
      %p164 = scmp.eq.s32.totalorder %s21, 1
      %p165 = por %p163, %p164
      %p167 = scmp.ne.s32.totalorder %s152, %s166
      %p168 = scmp.eq.s32.totalorder %s21, 0
      %p169 = por %p167, %p168
      %s171 = sadd.s32 %s170, 1
      %p174 = scmp.eq.s32.totalorder %s15, 1
      %p175 = scmp.ne.s32.totalorder %s170, %s172
      %p176 = scmp.eq.s32.totalorder %s15, 0
      %p177 = por %p175, %p176
      %p178 = scmp.ne.s32.totalorder %s170, %s172
      %p179 = scmp.eq.s32.totalorder %s20, 1
      %p180 = por %p178, %p179
      %p181 = scmp.ne.s32.totalorder %s172, %s173
      %p182 = scmp.eq.s32.totalorder %s20, 0
      %p183 = por %p181, %p182
      %p184 = scmp.ne.s32.totalorder %s172, %s173
      %p185 = scmp.eq.s32.totalorder %s21, 1
      %p186 = por %p184, %p185
      %p188 = scmp.ne.s32.totalorder %s173, %s187
      %p189 = scmp.eq.s32.totalorder %s21, 0
      %p190 = por %p188, %p189
      %s191 = ssub.s32 %s15, %s22
      %p192 = scmp.eq.s32.totalorder %s191, 0
      %s194 = sadd.s32 %s193, 1
      %s195 = scalar_select %p192, %s193, %s194
      %p198 = pneg %p192
      %p199 = scmp.eq.s32.totalorder %s15, 1
      %p200 = por %p198, %p199
      %p201 = scmp.ne.s32.totalorder %s193, %s196
      %p202 = scmp.eq.s32.totalorder %s15, 0
      %p203 = por %p201, %p202
      %p204 = scmp.ne.s32.totalorder %s193, %s196
      %p205 = scmp.eq.s32.totalorder %s20, 1
      %p206 = por %p204, %p205
      %p207 = scmp.ne.s32.totalorder %s196, %s197
      %p208 = scmp.eq.s32.totalorder %s20, 0
      %p209 = por %p207, %p208
      %p210 = scmp.ne.s32.totalorder %s196, %s197
      %p211 = scmp.eq.s32.totalorder %s21, 1
      %p212 = por %p210, %p211
      %p214 = scmp.ne.s32.totalorder %s197, %s213
      %p215 = scmp.eq.s32.totalorder %s21, 0
      %p216 = por %p214, %p215
      %s217 = ssub.s32 %s15, %s22
      %p218 = scmp.eq.s32.totalorder %s217, 0
      %s220 = sadd.s32 %s219, 1
      %s221 = scalar_select %p218, %s219, %s220
      %p224 = pneg %p218
      %p225 = scmp.eq.s32.totalorder %s15, 1
      %p226 = por %p224, %p225
      %p227 = scmp.ne.s32.totalorder %s219, %s222
      %p228 = scmp.eq.s32.totalorder %s15, 0
      %p229 = por %p227, %p228
      %p230 = scmp.ne.s32.totalorder %s219, %s222
      %p231 = scmp.eq.s32.totalorder %s20, 1
      %p232 = por %p230, %p231
      %p233 = scmp.ne.s32.totalorder %s222, %s223
      %p234 = scmp.eq.s32.totalorder %s20, 0
      %p235 = por %p233, %p234
      %p236 = scmp.ne.s32.totalorder %s222, %s223
      %p237 = scmp.eq.s32.totalorder %s21, 1
      %p238 = por %p236, %p237
      %p240 = scmp.ne.s32.totalorder %s223, %s239
      %p241 = scmp.eq.s32.totalorder %s21, 0
      %p242 = por %p240, %p241
      %p243 = scmp.le.s32.totalorder 1, %s15
      %p244 = scmp.lt.s32.totalorder %s15, 3
      %p245 = pnand %p243, %p244
      %p246 = pneg %p245
      // Predicated region
      $region9: #{forward.11} parent=5 // pred_check
        _
      $region10: #{forward.11} parent=5 // pred_check_branch
        %248 = sbr.rel (%p245) target = $region12
      $region11: #{forward.11} parent=5 // pred_region
        %s249 = ssub.s32 %s15, 1
        // Predicated region
        $region13: #{forward.11} parent=11 // pred_check
          %p250 = pneg %p36
        $region14: #{forward.11} parent=11 // pred_check_branch
          %252 = sbr.rel (%p250) target = $region16
        $region15: #{forward.11} parent=11 // pred_region
          _
        $region16: #{forward.11} parent=11 // pred_fallthru
          _
        // Predicated region
        $region17: #{forward.11} parent=11 // pred_check
          %p253 = pneg %p57
        $region18: #{forward.11} parent=11 // pred_check_branch
          %255 = sbr.rel (%p253) target = $region20
        $region19: #{forward.11} parent=11 // pred_region
          _
        $region20: #{forward.11} parent=11 // pred_fallthru
          _
        // Predicated region
        $region21: #{forward.11} parent=11 // pred_check
          %p256 = pneg %p78
        $region22: #{forward.11} parent=11 // pred_check_branch
          %258 = sbr.rel (%p256) target = $region24
        $region23: #{forward.11} parent=11 // pred_region
          _
        $region24: #{forward.11} parent=11 // pred_fallthru
          _
        // Predicated region
        $region25: #{forward.11} parent=11 // pred_check
          %p259 = pneg %p99
        $region26: #{forward.11} parent=11 // pred_check_branch
          %261 = sbr.rel (%p259) target = $region28
        $region27: #{forward.11} parent=11 // pred_region
          _
        $region28: #{forward.11} parent=11 // pred_fallthru
          _
        // Predicated region
        $region29: #{forward.11} parent=11 // pred_check
          %p262 = pneg %p120
        $region30: #{forward.11} parent=11 // pred_check_branch
          %264 = sbr.rel (%p262) target = $region32
        $region31: #{forward.11} parent=11 // pred_region
          _
        $region32: #{forward.11} parent=11 // pred_fallthru
          _
        // Predicated region
        $region33: #{forward.11} parent=11 // pred_check
          %p265 = pneg %p141
        $region34: #{forward.11} parent=11 // pred_check_branch
          %267 = sbr.rel (%p265) target = $region36
        $region35: #{forward.11} parent=11 // pred_region
          _
        $region36: #{forward.11} parent=11 // pred_fallthru
          _
        // Predicated region
        $region37: #{forward.11} parent=11 // pred_check
          %p268 = pneg %p162
        $region38: #{forward.11} parent=11 // pred_check_branch
          %270 = sbr.rel (%p268) target = $region40
        $region39: #{forward.11} parent=11 // pred_region
          _
        $region40: #{forward.11} parent=11 // pred_fallthru
          _
        // Predicated region
        $region41: #{forward.11} parent=11 // pred_check
          %p271 = pneg %p183
        $region42: #{forward.11} parent=11 // pred_check_branch
          %273 = sbr.rel (%p271) target = $region44
        $region43: #{forward.11} parent=11 // pred_region
          _
        $region44: #{forward.11} parent=11 // pred_fallthru
          _
      $region12: #{forward.11} parent=5 // pred_fallthru
        _
      %p274 = scmp.lt.s32.totalorder %s15, 2
      // Predicated region
      $region45: #{forward.11} parent=5 // pred_check
        %p275 = pneg %p274
      $region46: #{forward.11} parent=5 // pred_check_branch
        %277 = sbr.rel (%p275) target = $region48
      $region47: #{forward.11} parent=5 // pred_region
        // Predicated region
        $region49: #{forward.11} parent=47 // pred_check
          %p278 = pneg %p203
        $region50: #{forward.11} parent=47 // pred_check_branch
          %280 = sbr.rel (%p278) target = $region52
        $region51: #{forward.11} parent=47 // pred_region
          %p281 = scmp.lt.s32.totalorder %s15, 1
          %s282 = scalar_select %p281, %s15, 1
          %s283 = smul.addr %s282, 4
          %s284 = scalar_lea.vmem %s8, %s283
        $region52: #{forward.11} parent=47 // pred_fallthru
          _
      $region48: #{forward.11} parent=5 // pred_fallthru
        _
      %p285 = scmp.le.s32.totalorder 1, %s15
      %p286 = scmp.lt.s32.totalorder %s15, 3
      %p287 = pnand %p285, %p286
      %p288 = pneg %p287
      // Predicated region
      $region53: #{forward.11} parent=5 // pred_check
        _
      $region54: #{forward.11} parent=5 // pred_check_branch
        %290 = sbr.rel (%p287) target = $region56
      $region55: #{forward.11} parent=5 // pred_region
        %s291 = ssub.s32 %s15, 1
        %p292 = pneg %p36
        %p293 = pneg %p33
        %p294 = pneg %p57
        %p295 = pneg %p54
        %p296 = pneg %p78
        %p297 = pneg %p75
        %p298 = pneg %p99
        %p299 = pneg %p96
        %p300 = pneg %p120
        %p301 = pneg %p117
        %p302 = pneg %p141
        %p303 = pneg %p138
        %p304 = pneg %p162
        %p305 = pneg %p159
        %p306 = pneg %p183
        %p307 = pneg %p180
        %p308 = scmp.lt.s32.totalorder %s20, 1
        %s309 = scalar_select %p308, %s20, 1
        %s310 = smul.addr %s309, 4
        %s311 = scalar_lea.vmem %s8, %s310
        %p312 = pneg %p209
        %p313 = pneg %p206
        %p314 = pneg %p235
        %p315 = pneg %p232
        %s316 = sand.u32 %s222, 1
        %s317 = sand.u32 %s222, 1
        %s318 = smul.addr %s317, 16
        %s319 = scalar_lea.vmem [#allocation2], %s318
        %p320 = scmp.lt.s32.totalorder %s20, 1
        %s321 = scalar_select %p320, %s20, 1
        %s322 = smul.addr %s321, 4
        %s323 = scalar_lea.vmem %s8, %s322
        %v324 = vld [vmem:[%s323] sm:$0xf]
        %v325 = vld [vmem:[%s0] sm:$0x7f]
        %v326 = vld [vmem:[%s1] sm:$0x7f]
        %328 = vset.pattern.permute.xlu0 0
        %329 = vperm.xlu0 %328, %v326
        %v330 = vpop.permute.xlu0 %329
        %vm332 = vcmask 31744
        %v334 = vsel %vm332, %v325, 0
        %vm336 = vcmask 1043456
        %v338 = vsel %vm336, %v324, 0
        %340 = vmatpush.msra.mxu0 0.0
        %341 = vmatpush.msra.mxu0 0.0
        %342 = vmatpush.msra.mxu0 0.0
        %343 = vmatpush.msra.mxu0 0.0
        %344 = vmatpush.msra.mxu0 0.0
        %345 = vmatpush.msra.mxu0 0.0
        %346 = vmatpush.msra.mxu0 0.0
        %347 = vmatpush.msra.mxu0 0.0
        %348 = vmatpush.msra.mxu0 0.0
        %349 = vmatpush.msra.mxu0 0.0
        %350 = vmatpush.msra.mxu0 0.0
        %351 = vmatpush.msra.mxu0 0.0
        %352 = vmatpush.msra.mxu0 0.0
        %353 = vmatpush.msra.mxu0 0.0
        %354 = vmatpush.msra.mxu0 0.0
        %v355 = vand.u32 %v338, 4294901760
        %356 = vmatpush.msra.mxu0 %v355
        %v357 = vand.u32 %v334, 4294901760
        %v358 = vsub.f32 %v334, %v357
        %v359 = vand.u32 %v358, 4294901760
        %v360 = vsub.f32 %v358, %v359
        %v361 = vand.u32 %v360, 4294901760
        %362 = vmatmul.f32.gmra.mxu0 %v361
        %v363 = vpop.f32.mrf.mxu0
        %v364 = vadd.f32 %v330, %v363
        %365 = vdwg.mxu0
        %366 = vmatpush.msra.mxu0 0.0
        %367 = vmatpush.msra.mxu0 0.0
        %368 = vmatpush.msra.mxu0 0.0
        %369 = vmatpush.msra.mxu0 0.0
        %370 = vmatpush.msra.mxu0 0.0
        %371 = vmatpush.msra.mxu0 0.0
        %372 = vmatpush.msra.mxu0 0.0
        %373 = vmatpush.msra.mxu0 0.0
        %374 = vmatpush.msra.mxu0 0.0
        %375 = vmatpush.msra.mxu0 0.0
        %376 = vmatpush.msra.mxu0 0.0
        %377 = vmatpush.msra.mxu0 0.0
        %378 = vmatpush.msra.mxu0 0.0
        %379 = vmatpush.msra.mxu0 0.0
        %380 = vmatpush.msra.mxu0 0.0
        %v381 = vand.u32 %v338, 4294901760
        %v382 = vsub.f32 %v338, %v381
        %v383 = vand.u32 %v382, 4294901760
        %v384 = vsub.f32 %v382, %v383
        %v385 = vand.u32 %v384, 4294901760
        %386 = vmatpush.msra.mxu0 %v385
        %v387 = vand.u32 %v334, 4294901760
        %388 = vmatmul.f32.gmra.mxu0 %v387
        %v389 = vpop.f32.mrf.mxu0
        %v390 = vadd.f32 %v364, %v389
        %391 = vdwg.mxu0
        %392 = vmatpush.msra.mxu0 0.0
        %393 = vmatpush.msra.mxu0 0.0
        %394 = vmatpush.msra.mxu0 0.0
        %395 = vmatpush.msra.mxu0 0.0
        %396 = vmatpush.msra.mxu0 0.0
        %397 = vmatpush.msra.mxu0 0.0
        %398 = vmatpush.msra.mxu0 0.0
        %399 = vmatpush.msra.mxu0 0.0
        %400 = vmatpush.msra.mxu0 0.0
        %401 = vmatpush.msra.mxu0 0.0
        %402 = vmatpush.msra.mxu0 0.0
        %403 = vmatpush.msra.mxu0 0.0
        %404 = vmatpush.msra.mxu0 0.0
        %405 = vmatpush.msra.mxu0 0.0
        %406 = vmatpush.msra.mxu0 0.0
        %v407 = vand.u32 %v338, 4294901760
        %v408 = vsub.f32 %v338, %v407
        %409 = vmatpush.msra.mxu0 %v408
        %v410 = vand.u32 %v334, 4294901760
        %v411 = vsub.f32 %v334, %v410
        %412 = vmatmul.f32.gmra.mxu0 %v411
        %v413 = vpop.f32.mrf.mxu0
        %v414 = vadd.f32 %v390, %v413
        %415 = vdwg.mxu0
        %416 = vmatpush.msra.mxu0 0.0
        %417 = vmatpush.msra.mxu0 0.0
        %418 = vmatpush.msra.mxu0 0.0
        %419 = vmatpush.msra.mxu0 0.0
        %420 = vmatpush.msra.mxu0 0.0
        %421 = vmatpush.msra.mxu0 0.0
        %422 = vmatpush.msra.mxu0 0.0
        %423 = vmatpush.msra.mxu0 0.0
        %424 = vmatpush.msra.mxu0 0.0
        %425 = vmatpush.msra.mxu0 0.0
        %426 = vmatpush.msra.mxu0 0.0
        %427 = vmatpush.msra.mxu0 0.0
        %428 = vmatpush.msra.mxu0 0.0
        %429 = vmatpush.msra.mxu0 0.0
        %430 = vmatpush.msra.mxu0 0.0
        %v431 = vand.u32 %v338, 4294901760
        %432 = vmatpush.msra.mxu0 %v431
        %v433 = vand.u32 %v334, 4294901760
        %v434 = vsub.f32 %v334, %v433
        %v435 = vand.u32 %v434, 4294901760
        %436 = vmatmul.f32.gmra.mxu0 %v435
        %v437 = vpop.f32.mrf.mxu0
        %v438 = vadd.f32 %v414, %v437
        %439 = vdwg.mxu0
        %440 = vmatpush.msra.mxu0 0.0
        %441 = vmatpush.msra.mxu0 0.0
        %442 = vmatpush.msra.mxu0 0.0
        %443 = vmatpush.msra.mxu0 0.0
        %444 = vmatpush.msra.mxu0 0.0
        %445 = vmatpush.msra.mxu0 0.0
        %446 = vmatpush.msra.mxu0 0.0
        %447 = vmatpush.msra.mxu0 0.0
        %448 = vmatpush.msra.mxu0 0.0
        %449 = vmatpush.msra.mxu0 0.0
        %450 = vmatpush.msra.mxu0 0.0
        %451 = vmatpush.msra.mxu0 0.0
        %452 = vmatpush.msra.mxu0 0.0
        %453 = vmatpush.msra.mxu0 0.0
        %454 = vmatpush.msra.mxu0 0.0
        %v455 = vand.u32 %v338, 4294901760
        %v456 = vsub.f32 %v338, %v455
        %v457 = vand.u32 %v456, 4294901760
        %458 = vmatpush.msra.mxu0 %v457
        %v459 = vand.u32 %v334, 4294901760
        %460 = vmatmul.f32.gmra.mxu0 %v459
        %v461 = vpop.f32.mrf.mxu0
        %v462 = vadd.f32 %v438, %v461
        %463 = vdwg.mxu0
        %464 = vmatpush.msra.mxu0 0.0
        %465 = vmatpush.msra.mxu0 0.0
        %466 = vmatpush.msra.mxu0 0.0
        %467 = vmatpush.msra.mxu0 0.0
        %468 = vmatpush.msra.mxu0 0.0
        %469 = vmatpush.msra.mxu0 0.0
        %470 = vmatpush.msra.mxu0 0.0
        %471 = vmatpush.msra.mxu0 0.0
        %472 = vmatpush.msra.mxu0 0.0
        %473 = vmatpush.msra.mxu0 0.0
        %474 = vmatpush.msra.mxu0 0.0
        %475 = vmatpush.msra.mxu0 0.0
        %476 = vmatpush.msra.mxu0 0.0
        %477 = vmatpush.msra.mxu0 0.0
        %478 = vmatpush.msra.mxu0 0.0
        %v479 = vand.u32 %v338, 4294901760
        %480 = vmatpush.msra.mxu0 %v479
        %v481 = vand.u32 %v334, 4294901760
        %482 = vmatmul.f32.gmra.mxu0 %v481
        %v483 = vpop.f32.mrf.mxu0
        %v484 = vadd.f32 %v462, %v483
        %485 = vdwg.mxu0
        %vm486 = vcmp.ge.f32.partialorder %v484, 0.0
        %v487 = vmul.f32 %v484, 0.01
        %v488 = vsel %vm486, %v484, %v487
        %v489 = vld [vmem:[%s2] sm:$0x3f]
        %v490 = vld [vmem:[%s3] sm:$0x3f]
        %492 = vset.pattern.permute.xlu0 0
        %493 = vperm.xlu0 %492, %v490
        %v494 = vpop.permute.xlu0 %493
        %vm496 = vcmask 56320
        %v498 = vsel %vm496, %v489, 0
        %vm500 = vcmask 1046528
        %v502 = vsel %vm500, %v488, 0
        %504 = vmatpush.msra.mxu0 0.0
        %505 = vmatpush.msra.mxu0 0.0
        %506 = vmatpush.msra.mxu0 0.0
        %507 = vmatpush.msra.mxu0 0.0
        %508 = vmatpush.msra.mxu0 0.0
        %509 = vmatpush.msra.mxu0 0.0
        %510 = vmatpush.msra.mxu0 0.0
        %511 = vmatpush.msra.mxu0 0.0
        %512 = vmatpush.msra.mxu0 0.0
        %513 = vmatpush.msra.mxu0 0.0
        %514 = vmatpush.msra.mxu0 0.0
        %515 = vmatpush.msra.mxu0 0.0
        %516 = vmatpush.msra.mxu0 0.0
        %517 = vmatpush.msra.mxu0 0.0
        %518 = vmatpush.msra.mxu0 0.0
        %v519 = vand.u32 %v502, 4294901760
        %520 = vmatpush.msra.mxu0 %v519
        %v521 = vand.u32 %v498, 4294901760
        %v522 = vsub.f32 %v498, %v521
        %v523 = vand.u32 %v522, 4294901760
        %v524 = vsub.f32 %v522, %v523
        %v525 = vand.u32 %v524, 4294901760
        %526 = vmatmul.f32.gmra.mxu0 %v525
        %v527 = vpop.f32.mrf.mxu0
        %v528 = vadd.f32 %v494, %v527
        %529 = vdwg.mxu0
        %530 = vmatpush.msra.mxu0 0.0
        %531 = vmatpush.msra.mxu0 0.0
        %532 = vmatpush.msra.mxu0 0.0
        %533 = vmatpush.msra.mxu0 0.0
        %534 = vmatpush.msra.mxu0 0.0
        %535 = vmatpush.msra.mxu0 0.0
        %536 = vmatpush.msra.mxu0 0.0
        %537 = vmatpush.msra.mxu0 0.0
        %538 = vmatpush.msra.mxu0 0.0
        %539 = vmatpush.msra.mxu0 0.0
        %540 = vmatpush.msra.mxu0 0.0
        %541 = vmatpush.msra.mxu0 0.0
        %542 = vmatpush.msra.mxu0 0.0
        %543 = vmatpush.msra.mxu0 0.0
        %544 = vmatpush.msra.mxu0 0.0
        %v545 = vand.u32 %v502, 4294901760
        %v546 = vsub.f32 %v502, %v545
        %v547 = vand.u32 %v546, 4294901760
        %v548 = vsub.f32 %v546, %v547
        %v549 = vand.u32 %v548, 4294901760
        %550 = vmatpush.msra.mxu0 %v549
        %v551 = vand.u32 %v498, 4294901760
        %552 = vmatmul.f32.gmra.mxu0 %v551
        %v553 = vpop.f32.mrf.mxu0
        %v554 = vadd.f32 %v528, %v553
        %555 = vdwg.mxu0
        %556 = vmatpush.msra.mxu0 0.0
        %557 = vmatpush.msra.mxu0 0.0
        %558 = vmatpush.msra.mxu0 0.0
        %559 = vmatpush.msra.mxu0 0.0
        %560 = vmatpush.msra.mxu0 0.0
        %561 = vmatpush.msra.mxu0 0.0
        %562 = vmatpush.msra.mxu0 0.0
        %563 = vmatpush.msra.mxu0 0.0
        %564 = vmatpush.msra.mxu0 0.0
        %565 = vmatpush.msra.mxu0 0.0
        %566 = vmatpush.msra.mxu0 0.0
        %567 = vmatpush.msra.mxu0 0.0
        %568 = vmatpush.msra.mxu0 0.0
        %569 = vmatpush.msra.mxu0 0.0
        %570 = vmatpush.msra.mxu0 0.0
        %v571 = vand.u32 %v502, 4294901760
        %v572 = vsub.f32 %v502, %v571
        %573 = vmatpush.msra.mxu0 %v572
        %v574 = vand.u32 %v498, 4294901760
        %v575 = vsub.f32 %v498, %v574
        %576 = vmatmul.f32.gmra.mxu0 %v575
        %v577 = vpop.f32.mrf.mxu0
        %v578 = vadd.f32 %v554, %v577
        %579 = vdwg.mxu0
        %580 = vmatpush.msra.mxu0 0.0
        %581 = vmatpush.msra.mxu0 0.0
        %582 = vmatpush.msra.mxu0 0.0
        %583 = vmatpush.msra.mxu0 0.0
        %584 = vmatpush.msra.mxu0 0.0
        %585 = vmatpush.msra.mxu0 0.0
        %586 = vmatpush.msra.mxu0 0.0
        %587 = vmatpush.msra.mxu0 0.0
        %588 = vmatpush.msra.mxu0 0.0
        %589 = vmatpush.msra.mxu0 0.0
        %590 = vmatpush.msra.mxu0 0.0
        %591 = vmatpush.msra.mxu0 0.0
        %592 = vmatpush.msra.mxu0 0.0
        %593 = vmatpush.msra.mxu0 0.0
        %594 = vmatpush.msra.mxu0 0.0
        %v595 = vand.u32 %v502, 4294901760
        %596 = vmatpush.msra.mxu0 %v595
        %v597 = vand.u32 %v498, 4294901760
        %v598 = vsub.f32 %v498, %v597
        %v599 = vand.u32 %v598, 4294901760
        %600 = vmatmul.f32.gmra.mxu0 %v599
        %v601 = vpop.f32.mrf.mxu0
        %v602 = vadd.f32 %v578, %v601
        %603 = vdwg.mxu0
        %604 = vmatpush.msra.mxu0 0.0
        %605 = vmatpush.msra.mxu0 0.0
        %606 = vmatpush.msra.mxu0 0.0
        %607 = vmatpush.msra.mxu0 0.0
        %608 = vmatpush.msra.mxu0 0.0
        %609 = vmatpush.msra.mxu0 0.0
        %610 = vmatpush.msra.mxu0 0.0
        %611 = vmatpush.msra.mxu0 0.0
        %612 = vmatpush.msra.mxu0 0.0
        %613 = vmatpush.msra.mxu0 0.0
        %614 = vmatpush.msra.mxu0 0.0
        %615 = vmatpush.msra.mxu0 0.0
        %616 = vmatpush.msra.mxu0 0.0
        %617 = vmatpush.msra.mxu0 0.0
        %618 = vmatpush.msra.mxu0 0.0
        %v619 = vand.u32 %v502, 4294901760
        %v620 = vsub.f32 %v502, %v619
        %v621 = vand.u32 %v620, 4294901760
        %622 = vmatpush.msra.mxu0 %v621
        %v623 = vand.u32 %v498, 4294901760
        %624 = vmatmul.f32.gmra.mxu0 %v623
        %v625 = vpop.f32.mrf.mxu0
        %v626 = vadd.f32 %v602, %v625
        %627 = vdwg.mxu0
        %628 = vmatpush.msra.mxu0 0.0
        %629 = vmatpush.msra.mxu0 0.0
        %630 = vmatpush.msra.mxu0 0.0
        %631 = vmatpush.msra.mxu0 0.0
        %632 = vmatpush.msra.mxu0 0.0
        %633 = vmatpush.msra.mxu0 0.0
        %634 = vmatpush.msra.mxu0 0.0
        %635 = vmatpush.msra.mxu0 0.0
        %636 = vmatpush.msra.mxu0 0.0
        %637 = vmatpush.msra.mxu0 0.0
        %638 = vmatpush.msra.mxu0 0.0
        %639 = vmatpush.msra.mxu0 0.0
        %640 = vmatpush.msra.mxu0 0.0
        %641 = vmatpush.msra.mxu0 0.0
        %642 = vmatpush.msra.mxu0 0.0
        %v643 = vand.u32 %v502, 4294901760
        %644 = vmatpush.msra.mxu0 %v643
        %v645 = vand.u32 %v498, 4294901760
        %646 = vmatmul.f32.gmra.mxu0 %v645
        %v647 = vpop.f32.mrf.mxu0
        %v648 = vadd.f32 %v626, %v647
        %649 = vdwg.mxu0
        %vm650 = vcmp.ge.f32.partialorder %v648, 0.0
        %v651 = vmul.f32 %v648, 0.01
        %v652 = vsel %vm650, %v648, %v651
        %v653 = vld [vmem:[%s4] sm:$0x1f]
        %v654 = vld [vmem:[%s5] sm:$0x1f]
        %656 = vset.pattern.permute.xlu0 0
        %657 = vperm.xlu0 %656, %v654
        %v658 = vpop.permute.xlu0 %657
        %vm660 = vcmask 48128
        %v662 = vsel %vm660, %v653, 0
        %vm664 = vcmask 1045504
        %v666 = vsel %vm664, %v652, 0
        %668 = vmatpush.msra.mxu0 0.0
        %669 = vmatpush.msra.mxu0 0.0
        %670 = vmatpush.msra.mxu0 0.0
        %671 = vmatpush.msra.mxu0 0.0
        %672 = vmatpush.msra.mxu0 0.0
        %673 = vmatpush.msra.mxu0 0.0
        %674 = vmatpush.msra.mxu0 0.0
        %675 = vmatpush.msra.mxu0 0.0
        %676 = vmatpush.msra.mxu0 0.0
        %677 = vmatpush.msra.mxu0 0.0
        %678 = vmatpush.msra.mxu0 0.0
        %679 = vmatpush.msra.mxu0 0.0
        %680 = vmatpush.msra.mxu0 0.0
        %681 = vmatpush.msra.mxu0 0.0
        %682 = vmatpush.msra.mxu0 0.0
        %v683 = vand.u32 %v666, 4294901760
        %684 = vmatpush.msra.mxu0 %v683
        %v685 = vand.u32 %v662, 4294901760
        %v686 = vsub.f32 %v662, %v685
        %v687 = vand.u32 %v686, 4294901760
        %v688 = vsub.f32 %v686, %v687
        %v689 = vand.u32 %v688, 4294901760
        %690 = vmatmul.f32.gmra.mxu0 %v689
        %v691 = vpop.f32.mrf.mxu0
        %v692 = vadd.f32 %v658, %v691
        %693 = vdwg.mxu0
        %694 = vmatpush.msra.mxu0 0.0
        %695 = vmatpush.msra.mxu0 0.0
        %696 = vmatpush.msra.mxu0 0.0
        %697 = vmatpush.msra.mxu0 0.0
        %698 = vmatpush.msra.mxu0 0.0
        %699 = vmatpush.msra.mxu0 0.0
        %700 = vmatpush.msra.mxu0 0.0
        %701 = vmatpush.msra.mxu0 0.0
        %702 = vmatpush.msra.mxu0 0.0
        %703 = vmatpush.msra.mxu0 0.0
        %704 = vmatpush.msra.mxu0 0.0
        %705 = vmatpush.msra.mxu0 0.0
        %706 = vmatpush.msra.mxu0 0.0
        %707 = vmatpush.msra.mxu0 0.0
        %708 = vmatpush.msra.mxu0 0.0
        %v709 = vand.u32 %v666, 4294901760
        %v710 = vsub.f32 %v666, %v709
        %v711 = vand.u32 %v710, 4294901760
        %v712 = vsub.f32 %v710, %v711
        %v713 = vand.u32 %v712, 4294901760
        %714 = vmatpush.msra.mxu0 %v713
        %v715 = vand.u32 %v662, 4294901760
        %716 = vmatmul.f32.gmra.mxu0 %v715
        %v717 = vpop.f32.mrf.mxu0
        %v718 = vadd.f32 %v692, %v717
        %719 = vdwg.mxu0
        %720 = vmatpush.msra.mxu0 0.0
        %721 = vmatpush.msra.mxu0 0.0
        %722 = vmatpush.msra.mxu0 0.0
        %723 = vmatpush.msra.mxu0 0.0
        %724 = vmatpush.msra.mxu0 0.0
        %725 = vmatpush.msra.mxu0 0.0
        %726 = vmatpush.msra.mxu0 0.0
        %727 = vmatpush.msra.mxu0 0.0
        %728 = vmatpush.msra.mxu0 0.0
        %729 = vmatpush.msra.mxu0 0.0
        %730 = vmatpush.msra.mxu0 0.0
        %731 = vmatpush.msra.mxu0 0.0
        %732 = vmatpush.msra.mxu0 0.0
        %733 = vmatpush.msra.mxu0 0.0
        %734 = vmatpush.msra.mxu0 0.0
        %v735 = vand.u32 %v666, 4294901760
        %v736 = vsub.f32 %v666, %v735
        %737 = vmatpush.msra.mxu0 %v736
        %v738 = vand.u32 %v662, 4294901760
        %v739 = vsub.f32 %v662, %v738
        %740 = vmatmul.f32.gmra.mxu0 %v739
        %v741 = vpop.f32.mrf.mxu0
        %v742 = vadd.f32 %v718, %v741
        %743 = vdwg.mxu0
        %744 = vmatpush.msra.mxu0 0.0
        %745 = vmatpush.msra.mxu0 0.0
        %746 = vmatpush.msra.mxu0 0.0
        %747 = vmatpush.msra.mxu0 0.0
        %748 = vmatpush.msra.mxu0 0.0
        %749 = vmatpush.msra.mxu0 0.0
        %750 = vmatpush.msra.mxu0 0.0
        %751 = vmatpush.msra.mxu0 0.0
        %752 = vmatpush.msra.mxu0 0.0
        %753 = vmatpush.msra.mxu0 0.0
        %754 = vmatpush.msra.mxu0 0.0
        %755 = vmatpush.msra.mxu0 0.0
        %756 = vmatpush.msra.mxu0 0.0
        %757 = vmatpush.msra.mxu0 0.0
        %758 = vmatpush.msra.mxu0 0.0
        %v759 = vand.u32 %v666, 4294901760
        %760 = vmatpush.msra.mxu0 %v759
        %v761 = vand.u32 %v662, 4294901760
        %v762 = vsub.f32 %v662, %v761
        %v763 = vand.u32 %v762, 4294901760
        %764 = vmatmul.f32.gmra.mxu0 %v763
        %v765 = vpop.f32.mrf.mxu0
        %v766 = vadd.f32 %v742, %v765
        %767 = vdwg.mxu0
        %768 = vmatpush.msra.mxu0 0.0
        %769 = vmatpush.msra.mxu0 0.0
        %770 = vmatpush.msra.mxu0 0.0
        %771 = vmatpush.msra.mxu0 0.0
        %772 = vmatpush.msra.mxu0 0.0
        %773 = vmatpush.msra.mxu0 0.0
        %774 = vmatpush.msra.mxu0 0.0
        %775 = vmatpush.msra.mxu0 0.0
        %776 = vmatpush.msra.mxu0 0.0
        %777 = vmatpush.msra.mxu0 0.0
        %778 = vmatpush.msra.mxu0 0.0
        %779 = vmatpush.msra.mxu0 0.0
        %780 = vmatpush.msra.mxu0 0.0
        %781 = vmatpush.msra.mxu0 0.0
        %782 = vmatpush.msra.mxu0 0.0
        %v783 = vand.u32 %v666, 4294901760
        %v784 = vsub.f32 %v666, %v783
        %v785 = vand.u32 %v784, 4294901760
        %786 = vmatpush.msra.mxu0 %v785
        %v787 = vand.u32 %v662, 4294901760
        %788 = vmatmul.f32.gmra.mxu0 %v787
        %v789 = vpop.f32.mrf.mxu0
        %v790 = vadd.f32 %v766, %v789
        %791 = vdwg.mxu0
        %792 = vmatpush.msra.mxu0 0.0
        %793 = vmatpush.msra.mxu0 0.0
        %794 = vmatpush.msra.mxu0 0.0
        %795 = vmatpush.msra.mxu0 0.0
        %796 = vmatpush.msra.mxu0 0.0
        %797 = vmatpush.msra.mxu0 0.0
        %798 = vmatpush.msra.mxu0 0.0
        %799 = vmatpush.msra.mxu0 0.0
        %800 = vmatpush.msra.mxu0 0.0
        %801 = vmatpush.msra.mxu0 0.0
        %802 = vmatpush.msra.mxu0 0.0
        %803 = vmatpush.msra.mxu0 0.0
        %804 = vmatpush.msra.mxu0 0.0
        %805 = vmatpush.msra.mxu0 0.0
        %806 = vmatpush.msra.mxu0 0.0
        %v807 = vand.u32 %v666, 4294901760
        %808 = vmatpush.msra.mxu0 %v807
        %v809 = vand.u32 %v662, 4294901760
        %810 = vmatmul.f32.gmra.mxu0 %v809
        %v811 = vpop.f32.mrf.mxu0
        %v812 = vadd.f32 %v790, %v811
        %813 = vdwg.mxu0
        %vm814 = vcmp.ge.f32.partialorder %v812, 0.0
        %v815 = vmul.f32 %v812, 0.01
        %v816 = vsel %vm814, %v812, %v815
        %v817 = vld [vmem:[%s6] sm:$0xff]
        %v818 = vld [vmem:[%s6 + $0x8] sm:$0xff]
        %v819 = vld [vmem:[%s7] sm:$0xff]
        %v820 = vld [vmem:[%s7 + $0x8] sm:$0xff]
        %822 = vset.pattern.permute.xlu0 0
        %823 = vperm.xlu0 %822, %v819
        %v824 = vpop.permute.xlu0 %823
        %827 = vset.pattern.permute.xlu0 0
        %828 = vperm.xlu0 %827, %v820
        %v829 = vpop.permute.xlu0 %828
        %vm831 = vcmask 39936
        %v833 = vsel %vm831, %v817, 0
        %v836 = vsel %vm831, %v818, 0
        %vm838 = vcmask 1044480
        %v840 = vsel %vm838, %v816, 0
        %842 = vmatpush.msra.mxu0 0.0
        %843 = vmatpush.msra.mxu0 0.0
        %844 = vmatpush.msra.mxu0 0.0
        %845 = vmatpush.msra.mxu0 0.0
        %846 = vmatpush.msra.mxu0 0.0
        %847 = vmatpush.msra.mxu0 0.0
        %848 = vmatpush.msra.mxu0 0.0
        %849 = vmatpush.msra.mxu0 0.0
        %850 = vmatpush.msra.mxu0 0.0
        %851 = vmatpush.msra.mxu0 0.0
        %852 = vmatpush.msra.mxu0 0.0
        %853 = vmatpush.msra.mxu0 0.0
        %854 = vmatpush.msra.mxu0 0.0
        %855 = vmatpush.msra.mxu0 0.0
        %856 = vmatpush.msra.mxu0 0.0
        %v857 = vand.u32 %v840, 4294901760
        %858 = vmatpush.msra.mxu0 %v857
        %v859 = vand.u32 %v833, 4294901760
        %v860 = vsub.f32 %v833, %v859
        %v861 = vand.u32 %v860, 4294901760
        %v862 = vsub.f32 %v860, %v861
        %v863 = vand.u32 %v862, 4294901760
        %864 = vmatmul.f32.gmra.mxu0 %v863
        %v865 = vpop.f32.mrf.mxu0
        %v866 = vadd.f32 %v824, %v865
        %v867 = vand.u32 %v836, 4294901760
        %v868 = vsub.f32 %v836, %v867
        %v869 = vand.u32 %v868, 4294901760
        %v870 = vsub.f32 %v868, %v869
        %v871 = vand.u32 %v870, 4294901760
        %872 = vmatmul.f32.gmra.mxu0 %v871
        %v873 = vpop.f32.mrf.mxu0
        %v874 = vadd.f32 %v829, %v873
        %875 = vdwg.mxu0
        %876 = vmatpush.msra.mxu0 0.0
        %877 = vmatpush.msra.mxu0 0.0
        %878 = vmatpush.msra.mxu0 0.0
        %879 = vmatpush.msra.mxu0 0.0
        %880 = vmatpush.msra.mxu0 0.0
        %881 = vmatpush.msra.mxu0 0.0
        %882 = vmatpush.msra.mxu0 0.0
        %883 = vmatpush.msra.mxu0 0.0
        %884 = vmatpush.msra.mxu0 0.0
        %885 = vmatpush.msra.mxu0 0.0
        %886 = vmatpush.msra.mxu0 0.0
        %887 = vmatpush.msra.mxu0 0.0
        %888 = vmatpush.msra.mxu0 0.0
        %889 = vmatpush.msra.mxu0 0.0
        %890 = vmatpush.msra.mxu0 0.0
        %v891 = vand.u32 %v840, 4294901760
        %v892 = vsub.f32 %v840, %v891
        %v893 = vand.u32 %v892, 4294901760
        %v894 = vsub.f32 %v892, %v893
        %v895 = vand.u32 %v894, 4294901760
        %896 = vmatpush.msra.mxu0 %v895
        %v897 = vand.u32 %v833, 4294901760
        %898 = vmatmul.f32.gmra.mxu0 %v897
        %v899 = vpop.f32.mrf.mxu0
        %v900 = vadd.f32 %v866, %v899
        %v901 = vand.u32 %v836, 4294901760
        %902 = vmatmul.f32.gmra.mxu0 %v901
        %v903 = vpop.f32.mrf.mxu0
        %v904 = vadd.f32 %v874, %v903
        %905 = vdwg.mxu0
        %906 = vmatpush.msra.mxu0 0.0
        %907 = vmatpush.msra.mxu0 0.0
        %908 = vmatpush.msra.mxu0 0.0
        %909 = vmatpush.msra.mxu0 0.0
        %910 = vmatpush.msra.mxu0 0.0
        %911 = vmatpush.msra.mxu0 0.0
        %912 = vmatpush.msra.mxu0 0.0
        %913 = vmatpush.msra.mxu0 0.0
        %914 = vmatpush.msra.mxu0 0.0
        %915 = vmatpush.msra.mxu0 0.0
        %916 = vmatpush.msra.mxu0 0.0
        %917 = vmatpush.msra.mxu0 0.0
        %918 = vmatpush.msra.mxu0 0.0
        %919 = vmatpush.msra.mxu0 0.0
        %920 = vmatpush.msra.mxu0 0.0
        %v921 = vand.u32 %v840, 4294901760
        %v922 = vsub.f32 %v840, %v921
        %923 = vmatpush.msra.mxu0 %v922
        %v924 = vand.u32 %v833, 4294901760
        %v925 = vsub.f32 %v833, %v924
        %926 = vmatmul.f32.gmra.mxu0 %v925
        %v927 = vpop.f32.mrf.mxu0
        %v928 = vadd.f32 %v900, %v927
        %v929 = vand.u32 %v836, 4294901760
        %v930 = vsub.f32 %v836, %v929
        %931 = vmatmul.f32.gmra.mxu0 %v930
        %v932 = vpop.f32.mrf.mxu0
        %v933 = vadd.f32 %v904, %v932
        %934 = vdwg.mxu0
        %935 = vmatpush.msra.mxu0 0.0
        %936 = vmatpush.msra.mxu0 0.0
        %937 = vmatpush.msra.mxu0 0.0
        %938 = vmatpush.msra.mxu0 0.0
        %939 = vmatpush.msra.mxu0 0.0
        %940 = vmatpush.msra.mxu0 0.0
        %941 = vmatpush.msra.mxu0 0.0
        %942 = vmatpush.msra.mxu0 0.0
        %943 = vmatpush.msra.mxu0 0.0
        %944 = vmatpush.msra.mxu0 0.0
        %945 = vmatpush.msra.mxu0 0.0
        %946 = vmatpush.msra.mxu0 0.0
        %947 = vmatpush.msra.mxu0 0.0
        %948 = vmatpush.msra.mxu0 0.0
        %949 = vmatpush.msra.mxu0 0.0
        %v950 = vand.u32 %v840, 4294901760
        %951 = vmatpush.msra.mxu0 %v950
        %v952 = vand.u32 %v833, 4294901760
        %v953 = vsub.f32 %v833, %v952
        %v954 = vand.u32 %v953, 4294901760
        %955 = vmatmul.f32.gmra.mxu0 %v954
        %v956 = vpop.f32.mrf.mxu0
        %v957 = vadd.f32 %v928, %v956
        %v958 = vand.u32 %v836, 4294901760
        %v959 = vsub.f32 %v836, %v958
        %v960 = vand.u32 %v959, 4294901760
        %961 = vmatmul.f32.gmra.mxu0 %v960
        %v962 = vpop.f32.mrf.mxu0
        %v963 = vadd.f32 %v933, %v962
        %964 = vdwg.mxu0
        %965 = vmatpush.msra.mxu0 0.0
        %966 = vmatpush.msra.mxu0 0.0
        %967 = vmatpush.msra.mxu0 0.0
        %968 = vmatpush.msra.mxu0 0.0
        %969 = vmatpush.msra.mxu0 0.0
        %970 = vmatpush.msra.mxu0 0.0
        %971 = vmatpush.msra.mxu0 0.0
        %972 = vmatpush.msra.mxu0 0.0
        %973 = vmatpush.msra.mxu0 0.0
        %974 = vmatpush.msra.mxu0 0.0
        %975 = vmatpush.msra.mxu0 0.0
        %976 = vmatpush.msra.mxu0 0.0
        %977 = vmatpush.msra.mxu0 0.0
        %978 = vmatpush.msra.mxu0 0.0
        %979 = vmatpush.msra.mxu0 0.0
        %v980 = vand.u32 %v840, 4294901760
        %v981 = vsub.f32 %v840, %v980
        %v982 = vand.u32 %v981, 4294901760
        %983 = vmatpush.msra.mxu0 %v982
        %v984 = vand.u32 %v833, 4294901760
        %985 = vmatmul.f32.gmra.mxu0 %v984
        %v986 = vpop.f32.mrf.mxu0
        %v987 = vadd.f32 %v957, %v986
        %v988 = vand.u32 %v836, 4294901760
        %989 = vmatmul.f32.gmra.mxu0 %v988
        %v990 = vpop.f32.mrf.mxu0
        %v991 = vadd.f32 %v963, %v990
        %992 = vdwg.mxu0
        %993 = vmatpush.msra.mxu0 0.0
        %994 = vmatpush.msra.mxu0 0.0
        %995 = vmatpush.msra.mxu0 0.0
        %996 = vmatpush.msra.mxu0 0.0
        %997 = vmatpush.msra.mxu0 0.0
        %998 = vmatpush.msra.mxu0 0.0
        %999 = vmatpush.msra.mxu0 0.0
        %1000 = vmatpush.msra.mxu0 0.0
        %1001 = vmatpush.msra.mxu0 0.0
        %1002 = vmatpush.msra.mxu0 0.0
        %1003 = vmatpush.msra.mxu0 0.0
        %1004 = vmatpush.msra.mxu0 0.0
        %1005 = vmatpush.msra.mxu0 0.0
        %1006 = vmatpush.msra.mxu0 0.0
        %1007 = vmatpush.msra.mxu0 0.0
        %v1008 = vand.u32 %v840, 4294901760
        %1009 = vmatpush.msra.mxu0 %v1008
        %v1010 = vand.u32 %v833, 4294901760
        %1011 = vmatmul.f32.gmra.mxu0 %v1010
        %v1012 = vpop.f32.mrf.mxu0
        %v1013 = vadd.f32 %v987, %v1012
        %v1014 = vand.u32 %v836, 4294901760
        %1015 = vmatmul.f32.gmra.mxu0 %v1014
        %v1016 = vpop.f32.mrf.mxu0
        %v1017 = vadd.f32 %v991, %v1016
        %1018 = vdwg.mxu0
        %v1019 = vmax.f32 %v1013, 0.0
        %v1020 = vmax.f32 %v1017, 0.0
        %v1021 = vmin.f32 %v1019, 1.0
        %v1022 = vmin.f32 %v1020, 1.0
        %1023 = vst [vmem:[%s319] sm:$0xff] %v1021
        %1024 = vst [vmem:[%s319 + $0x8] sm:$0xff] %v1022
        %s1025 = sand.u32 %s222, 1
        %s1026 = sand.u32 %s222, 1
        %s1027 = smul.addr %s1026, 16
        %s1028 = scalar_lea.vmem [#allocation2], %s1027
        // Predicated region
        $region57: #{forward.11} parent=55 // pred_check
          %p1029 = pneg %p232
        $region58: #{forward.11} parent=55 // pred_check_branch
          %1031 = sbr.rel (%p1029) target = $region60
        $region59: #{forward.11} parent=55 // pred_region
          %s1032 = smul.addr %s20, 8
          %s1033 = scalar_lea.vmem %s9, %s1032
          // Predicated region
          $region61: #{forward.11} parent=59 // pred_check
            _
          $region62: #{forward.11} parent=59 // pred_check_branch
            %1035 = sbr.rel (0) target = $region64
          $region63: #{forward.11} parent=59 // pred_region
            // Predicated region
            $region65: #{forward.11} parent=63 // pred_check
              _
            $region66: #{forward.11} parent=63 // pred_check_branch
              %1037 = sbr.rel (0) target = $region68
            $region67: #{forward.11} parent=63 // pred_region
              // Predicated region
              $region80: #{forward.11} parent=67 // pred_check
                _
              $region81: #{forward.11} parent=67 // pred_check_branch
                %1055 = sbr.rel (0) target = $region83
              $region82: #{forward.11} parent=67 // pred_region
                loop: start=0, step=1, limit=1
                $region84: #{forward.11} parent=82 // loop_pre_header
                  _
                $region85: #{forward.11} parent=82 // loop_header
                  %s1057 = sphi 0, %s1061
                  %p1058 = scmp.ge.s32.totalorder %s1057, 1
                  %s1062 = sphi %s1028, %s1028
                  %s1063 = sphi %s1033, %s1033
                $region86: #{forward.11} parent=82 // loop_header_branch
                  %1060 = sbr.rel (%p1058) target = $region90
                $region87: #{forward.11} parent=82 // loop_body
                  %v1064 = vld [vmem:[%s1062] sm:$0xff]
                  %1065 = vst [vmem:[%s1063] sm:$0xff] %v1064
                  %v1066 = vld [vmem:[%s1062 + $0x8] sm:$0xff]
                  %1067 = vst [vmem:[%s1063 + $0x10] sm:$0xff] %v1066
                $region88: #{forward.11} parent=82 // loop_footer
                  %s1061 = sadd.s32 1, %s1057
                $region89: #{forward.11} parent=82 // loop_footer_branch
                  %1056 = sbr.rel target = $region85
                $region90: #{forward.11} parent=82 // loop_exit
                  _
              $region83: #{forward.11} parent=67 // pred_fallthru
                _
              // Predicated region
              $region91: #{forward.11} parent=67 // pred_check
                _
              $region92: #{forward.11} parent=67 // pred_check_branch
                %1069 = sbr.rel target = $region94
              $region93: #{forward.11} parent=67 // pred_region
                _
              $region94: #{forward.11} parent=67 // pred_fallthru
                _
            $region68: #{forward.11} parent=63 // pred_fallthru
              _
            // Predicated region
            $region69: #{forward.11} parent=63 // pred_check
              _
            $region70: #{forward.11} parent=63 // pred_check_branch
              %1039 = sbr.rel target = $region72
            $region71: #{forward.11} parent=63 // pred_region
              %s1041 = ssub.s32 256, 1
              loop: start=0, step=1, limit=1
              $region73: #{forward.11} parent=71 // loop_pre_header
                _
              $region74: #{forward.11} parent=71 // loop_header
                %s1043 = sphi 0, %s1047
                %p1044 = scmp.ge.s32.totalorder %s1043, 1
                %s1048 = sphi %s1028, %s1028
                %s1049 = sphi %s1033, %s1033
              $region75: #{forward.11} parent=71 // loop_header_branch
                %1046 = sbr.rel (%p1044) target = $region79
              $region76: #{forward.11} parent=71 // loop_body
                %v1050 = vld [vmem:[%s1048] sm:%s1041]
                %1051 = vst [vmem:[%s1049] sm:%s1041] %v1050
                %v1052 = vld [vmem:[%s1048 + $0x8] sm:%s1041]
                %1053 = vst [vmem:[%s1049 + $0x10] sm:%s1041] %v1052
              $region77: #{forward.11} parent=71 // loop_footer
                %s1047 = sadd.s32 1, %s1043
              $region78: #{forward.11} parent=71 // loop_footer_branch
                %1042 = sbr.rel target = $region74
              $region79: #{forward.11} parent=71 // loop_exit
                _
            $region72: #{forward.11} parent=63 // pred_fallthru
              _
          $region64: #{forward.11} parent=59 // pred_fallthru
            _
          %1070 = vnop
        $region60: #{forward.11} parent=55 // pred_fallthru
          _
      $region56: #{forward.11} parent=5 // pred_fallthru
        _
      %p1071 = scmp.le.s32.totalorder 2, %s15
      // Predicated region
      $region95: #{forward.11} parent=5 // pred_check
        %p1072 = pneg %p1071
      $region96: #{forward.11} parent=5 // pred_check_branch
        %1074 = sbr.rel (%p1072) target = $region98
      $region97: #{forward.11} parent=5 // pred_region
        %s1075 = ssub.s32 %s15, 2
        // Predicated region
        $region99: #{forward.11} parent=97 // pred_check
          %p1076 = pneg %p238
        $region100: #{forward.11} parent=97 // pred_check_branch
          %1078 = sbr.rel (%p1076) target = $region102
        $region101: #{forward.11} parent=97 // pred_region
          %s1079 = sand.u32 %s223, 1
          %s1080 = sand.u32 %s223, 1
          %s1081 = smul.addr %s1080, 16
          %s1082 = scalar_lea.vmem [#allocation2], %s1081
        $region102: #{forward.11} parent=97 // pred_fallthru
          _
      $region98: #{forward.11} parent=5 // pred_fallthru
        _
    $region6: #{forward.11} parent=1 // loop_footer
      %s19 = sadd.s32 1, %s15
    $region7: #{forward.11} parent=1 // loop_footer_branch
      %14 = sbr.rel target = $region3
    $region8: #{forward.11} parent=1 // loop_exit
      _

// kernel: forward.18
$region0: #{forward.18}
  #allocation0 [shape = 'u32[]', space=smem, size = 0x4, offset = 0x4, fixed_abs, tag = 'smem constant byte address 0x4 - core index']
  #allocation1 [shape = 'u32[72,128]{1,0:T(1,128)}', space=vmem, size = 0x9000, scoped, tag = 'internal scratch']
  %s0 = inlined_call_operand.vmem [shape: f32[4,8], index: 0, kind: input, shape index: {}]
  %s1 = inlined_call_operand.vmem [shape: f32[8,64], index: 1, kind: input, shape index: {}]
  %s2 = inlined_call_operand.vmem [shape: f32[4,64], index: 2, kind: output, shape index: {0}]
  %s3 = inlined_call_operand.vmem [shape: f32[4,1], index: 3, kind: output, shape index: {1}]
  %s4 = inlined_call_operand.vmem [shape: f32[4,1], index: 4, kind: output, shape index: {2}]
  %5 = xla_tuple %s2, %s3, %s4
  %s6 = sld [smem:[#allocation0]]
  $region38: #{forward.18} parent=0
    _
  %s8 = ssub.s32 1, %s6
  %s9 = scalar_select 0, %s8, %s6
  // Predicated region
  $region2: #{forward.18} parent=0 // pred_check
    _
  $region3: #{forward.18} parent=0 // pred_check_branch
    %11 = sbr.rel (0) target = $region5
  $region4: #{forward.18} parent=0 // pred_region
    _
  $region5: #{forward.18} parent=0 // pred_fallthru
    _
  // Predicated region
  $region6: #{forward.18} parent=0 // pred_check
    _
  $region7: #{forward.18} parent=0 // pred_check_branch
    %13 = sbr.rel (0) target = $region9
  $region8: #{forward.18} parent=0 // pred_region
    _
  $region9: #{forward.18} parent=0 // pred_fallthru
    _
  %p14 = scmp.eq.s32.totalorder 0, 0
  // Predicated region
  $region10: #{forward.18} parent=0 // pred_check
    %p15 = pneg %p14
  $region11: #{forward.18} parent=0 // pred_check_branch
    %17 = sbr.rel (%p15) target = $region13
  $region12: #{forward.18} parent=0 // pred_region
    %vm18 = vcmask 3072
    %19 = vst.msk [vmem:[%s3] sm:$0xf] %vm18, 0.0
    %20 = vst.msk [vmem:[%s4] sm:$0xf] %vm18, 0.0
  $region13: #{forward.18} parent=0 // pred_fallthru
    _
  %v21 = vld [vmem:[%s0] sm:$0xf]
  %v22 = vld [vmem:[%s1] sm:$0xff]
  %vm23 = vcmask 64512
  %v25 = vsel %vm23, %v21, 0
  %27 = vmatpush.msra.mxu0 0.0
  %28 = vmatpush.msra.mxu0 0.0
  %29 = vmatpush.msra.mxu0 0.0
  %30 = vmatpush.msra.mxu0 0.0
  %31 = vmatpush.msra.mxu0 0.0
  %32 = vmatpush.msra.mxu0 0.0
  %33 = vmatpush.msra.mxu0 0.0
  %34 = vmatpush.msra.mxu0 0.0
  %35 = vmatpush.msra.mxu0 0.0
  %36 = vmatpush.msra.mxu0 0.0
  %37 = vmatpush.msra.mxu0 0.0
  %38 = vmatpush.msra.mxu0 0.0
  %39 = vmatpush.msra.mxu0 0.0
  %40 = vmatpush.msra.mxu0 0.0
  %41 = vmatpush.msra.mxu0 0.0
  %v42 = vand.u32 %v22, 4294901760
  %43 = vmatpush.msra.mxu0 %v42
  %v44 = vand.u32 %v25, 4294901760
  %v45 = vsub.f32 %v25, %v44
  %v46 = vand.u32 %v45, 4294901760
  %v47 = vsub.f32 %v45, %v46
  %v48 = vand.u32 %v47, 4294901760
  %49 = vmatmul.f32.gmra.mxu0 %v48
  %v50 = vpop.f32.mrf.mxu0
  %v51 = vadd.f32 0.0, %v50
  %52 = vdwg.mxu0
  %53 = vmatpush.msra.mxu0 0.0
  %54 = vmatpush.msra.mxu0 0.0
  %55 = vmatpush.msra.mxu0 0.0
  %56 = vmatpush.msra.mxu0 0.0
  %57 = vmatpush.msra.mxu0 0.0
  %58 = vmatpush.msra.mxu0 0.0
  %59 = vmatpush.msra.mxu0 0.0
  %60 = vmatpush.msra.mxu0 0.0
  %61 = vmatpush.msra.mxu0 0.0
  %62 = vmatpush.msra.mxu0 0.0
  %63 = vmatpush.msra.mxu0 0.0
  %64 = vmatpush.msra.mxu0 0.0
  %65 = vmatpush.msra.mxu0 0.0
  %66 = vmatpush.msra.mxu0 0.0
  %67 = vmatpush.msra.mxu0 0.0
  %v68 = vand.u32 %v22, 4294901760
  %v69 = vsub.f32 %v22, %v68
  %v70 = vand.u32 %v69, 4294901760
  %v71 = vsub.f32 %v69, %v70
  %v72 = vand.u32 %v71, 4294901760
  %73 = vmatpush.msra.mxu0 %v72
  %v74 = vand.u32 %v25, 4294901760
  %75 = vmatmul.f32.gmra.mxu0 %v74
  %v76 = vpop.f32.mrf.mxu0
  %v77 = vadd.f32 %v51, %v76
  %78 = vdwg.mxu0
  %79 = vmatpush.msra.mxu0 0.0
  %80 = vmatpush.msra.mxu0 0.0
  %81 = vmatpush.msra.mxu0 0.0
  %82 = vmatpush.msra.mxu0 0.0
  %83 = vmatpush.msra.mxu0 0.0
  %84 = vmatpush.msra.mxu0 0.0
  %85 = vmatpush.msra.mxu0 0.0
  %86 = vmatpush.msra.mxu0 0.0
  %87 = vmatpush.msra.mxu0 0.0
  %88 = vmatpush.msra.mxu0 0.0
  %89 = vmatpush.msra.mxu0 0.0
  %90 = vmatpush.msra.mxu0 0.0
  %91 = vmatpush.msra.mxu0 0.0
  %92 = vmatpush.msra.mxu0 0.0
  %93 = vmatpush.msra.mxu0 0.0
  %v94 = vand.u32 %v22, 4294901760
  %v95 = vsub.f32 %v22, %v94
  %96 = vmatpush.msra.mxu0 %v95
  %v97 = vand.u32 %v25, 4294901760
  %v98 = vsub.f32 %v25, %v97
  %99 = vmatmul.f32.gmra.mxu0 %v98
  %v100 = vpop.f32.mrf.mxu0
  %v101 = vadd.f32 %v77, %v100
  %102 = vdwg.mxu0
  %103 = vmatpush.msra.mxu0 0.0
  %104 = vmatpush.msra.mxu0 0.0
  %105 = vmatpush.msra.mxu0 0.0
  %106 = vmatpush.msra.mxu0 0.0
  %107 = vmatpush.msra.mxu0 0.0
  %108 = vmatpush.msra.mxu0 0.0
  %109 = vmatpush.msra.mxu0 0.0
  %110 = vmatpush.msra.mxu0 0.0
  %111 = vmatpush.msra.mxu0 0.0
  %112 = vmatpush.msra.mxu0 0.0
  %113 = vmatpush.msra.mxu0 0.0
  %114 = vmatpush.msra.mxu0 0.0
  %115 = vmatpush.msra.mxu0 0.0
  %116 = vmatpush.msra.mxu0 0.0
  %117 = vmatpush.msra.mxu0 0.0
  %v118 = vand.u32 %v22, 4294901760
  %119 = vmatpush.msra.mxu0 %v118
  %v120 = vand.u32 %v25, 4294901760
  %v121 = vsub.f32 %v25, %v120
  %v122 = vand.u32 %v121, 4294901760
  %123 = vmatmul.f32.gmra.mxu0 %v122
  %v124 = vpop.f32.mrf.mxu0
  %v125 = vadd.f32 %v101, %v124
  %126 = vdwg.mxu0
  %127 = vmatpush.msra.mxu0 0.0
  %128 = vmatpush.msra.mxu0 0.0
  %129 = vmatpush.msra.mxu0 0.0
  %130 = vmatpush.msra.mxu0 0.0
  %131 = vmatpush.msra.mxu0 0.0
  %132 = vmatpush.msra.mxu0 0.0
  %133 = vmatpush.msra.mxu0 0.0
  %134 = vmatpush.msra.mxu0 0.0
  %135 = vmatpush.msra.mxu0 0.0
  %136 = vmatpush.msra.mxu0 0.0
  %137 = vmatpush.msra.mxu0 0.0
  %138 = vmatpush.msra.mxu0 0.0
  %139 = vmatpush.msra.mxu0 0.0
  %140 = vmatpush.msra.mxu0 0.0
  %141 = vmatpush.msra.mxu0 0.0
  %v142 = vand.u32 %v22, 4294901760
  %v143 = vsub.f32 %v22, %v142
  %v144 = vand.u32 %v143, 4294901760
  %145 = vmatpush.msra.mxu0 %v144
  %v146 = vand.u32 %v25, 4294901760
  %147 = vmatmul.f32.gmra.mxu0 %v146
  %v148 = vpop.f32.mrf.mxu0
  %v149 = vadd.f32 %v125, %v148
  %150 = vdwg.mxu0
  %151 = vmatpush.msra.mxu0 0.0
  %152 = vmatpush.msra.mxu0 0.0
  %153 = vmatpush.msra.mxu0 0.0
  %154 = vmatpush.msra.mxu0 0.0
  %155 = vmatpush.msra.mxu0 0.0
  %156 = vmatpush.msra.mxu0 0.0
  %157 = vmatpush.msra.mxu0 0.0
  %158 = vmatpush.msra.mxu0 0.0
  %159 = vmatpush.msra.mxu0 0.0
  %160 = vmatpush.msra.mxu0 0.0
  %161 = vmatpush.msra.mxu0 0.0
  %162 = vmatpush.msra.mxu0 0.0
  %163 = vmatpush.msra.mxu0 0.0
  %164 = vmatpush.msra.mxu0 0.0
  %165 = vmatpush.msra.mxu0 0.0
  %v166 = vand.u32 %v22, 4294901760
  %167 = vmatpush.msra.mxu0 %v166
  %v168 = vand.u32 %v25, 4294901760
  %169 = vmatmul.f32.gmra.mxu0 %v168
  %v170 = vpop.f32.mrf.mxu0
  %v171 = vadd.f32 %v149, %v170
  %172 = vdwg.mxu0
  %vm173 = vcmask 519168
  %174 = vst.msk [vmem:[%s2] sm:$0xf] %vm173, %v171
  %v175 = vld [vmem:[%s3] sm:$0xf]
  %v176 = vsel %vm173, %v171, 0.0
  %177 = vadd.xlane.f32.xlu0 %v176
  %v178 = vpop.xlane.xlu0 %177
  %v179 = vadd.f32 %v175, %v178
  %vm180 = vcmask 3072
  %181 = vst.msk [vmem:[%s3] sm:$0xf] %vm180, %v179
  %v182 = vld [vmem:[%s4] sm:$0xf]
  %v183 = vmul.f32 %v171, %v171
  %v184 = vsel %vm173, %v183, 0.0
  %185 = vadd.xlane.f32.xlu0 %v184
  %v186 = vpop.xlane.xlu0 %185
  %v187 = vadd.f32 %v182, %v186
  %188 = vst.msk [vmem:[%s4] sm:$0xf] %vm180, %v187
  // Predicated region
  $region14: #{forward.18} parent=0 // pred_check
    _
  $region15: #{forward.18} parent=0 // pred_check_branch
    %190 = sbr.rel (0) target = $region17
  $region16: #{forward.18} parent=0 // pred_region
    _
  $region17: #{forward.18} parent=0 // pred_fallthru
    _
  // Predicated region
  $region18: #{forward.18} parent=0 // pred_check
    _
  $region19: #{forward.18} parent=0 // pred_check_branch
    %192 = sbr.rel (0) target = $region21
  $region20: #{forward.18} parent=0 // pred_region
    _
  $region21: #{forward.18} parent=0 // pred_fallthru
    _
  // Predicated region
  $region22: #{forward.18} parent=0 // pred_check
    _
  $region23: #{forward.18} parent=0 // pred_check_branch
    %194 = sbr.rel (0) target = $region25
  $region24: #{forward.18} parent=0 // pred_region
    _
  $region25: #{forward.18} parent=0 // pred_fallthru
    _
  // Predicated region
  $region26: #{forward.18} parent=0 // pred_check
    _
  $region27: #{forward.18} parent=0 // pred_check_branch
    %196 = sbr.rel (0) target = $region29
  $region28: #{forward.18} parent=0 // pred_region
    _
  $region29: #{forward.18} parent=0 // pred_fallthru
    _
  // Predicated region
  $region30: #{forward.18} parent=0 // pred_check
    _
  $region31: #{forward.18} parent=0 // pred_check_branch
    %198 = sbr.rel (0) target = $region33
  $region32: #{forward.18} parent=0 // pred_region
    _
  $region33: #{forward.18} parent=0 // pred_fallthru
    _
  // Predicated region
  $region34: #{forward.18} parent=0 // pred_check
    _
  $region35: #{forward.18} parent=0 // pred_check_branch
    %200 = sbr.rel (0) target = $region37
  $region36: #{forward.18} parent=0 // pred_region
    _
  $region37: #{forward.18} parent=0 // pred_fallthru
    _

// kernel: forward.19
$region0: #{forward.19}
  #allocation0 [shape = 'u32[]', space=smem, size = 0x4, offset = 0x4, fixed_abs, tag = 'smem constant byte address 0x4 - core index']
  #allocation1 [shape = 'u32[72,128]{1,0:T(1,128)}', space=vmem, size = 0x9000, scoped, tag = 'internal scratch']
  %s0 = inlined_call_operand.vmem [shape: f32[4,1], index: 0, kind: input, shape index: {}]
  %s1 = inlined_call_operand.vmem [shape: f32[4,1], index: 1, kind: input, shape index: {}]
  %s2 = inlined_call_operand.vmem [shape: f32[4,64], index: 2, kind: input, shape index: {}]
  %s3 = inlined_call_operand.vmem [shape: f32[4,64], index: 3, kind: output, shape index: {}]
  %s4 = sld [smem:[#allocation0]]
  $region22: #{forward.19} parent=0
    _
  %s6 = ssub.s32 1, %s4
  %s7 = scalar_select 0, %s6, %s4
  // Predicated region
  $region2: #{forward.19} parent=0 // pred_check
    _
  $region3: #{forward.19} parent=0 // pred_check_branch
    %9 = sbr.rel (0) target = $region5
  $region4: #{forward.19} parent=0 // pred_region
    _
  $region5: #{forward.19} parent=0 // pred_fallthru
    _
  // Predicated region
  $region6: #{forward.19} parent=0 // pred_check
    _
  $region7: #{forward.19} parent=0 // pred_check_branch
    %11 = sbr.rel (0) target = $region9
  $region8: #{forward.19} parent=0 // pred_region
    _
  $region9: #{forward.19} parent=0 // pred_fallthru
    _
  // Predicated region
  $region10: #{forward.19} parent=0 // pred_check
    _
  $region11: #{forward.19} parent=0 // pred_check_branch
    %13 = sbr.rel (0) target = $region13
  $region12: #{forward.19} parent=0 // pred_region
    _
  $region13: #{forward.19} parent=0 // pred_fallthru
    _
  %v14 = vld [vmem:[%s0] sm:$0xf]
  %v15 = vmul.f32 %v14, 0.015625
  %v16 = vld [vmem:[%s1] sm:$0xf]
  %v17 = vmul.f32 %v16, 0.015625
  %v18 = vmul.f32 %v15, %v15
  %v19 = vsub.f32 %v17, %v18
  %v20 = vadd.f32 %v19, 1e-05
  %v21 = vrsqrt.pop %v20
  %v22 = vmul.f32 %v21, %v20
  %v23 = vmul.f32 %v22, %v21
  %v24 = vmul.f32 0.5, %v23
  %v25 = vsub.f32 1.5, %v24
  %v26 = vmul.f32 %v21, %v25
  %vm27 = vweird.f32 %v20
  %vm28 = vweird.f32 %v21
  %vm29 = vmor %vm27, %vm28
  %v30 = vsel %vm29, %v21, %v26
  %v31 = vld [vmem:[%s2] sm:$0xf]
  %33 = vset.pattern.permute.xlu0 0
  %34 = vperm.xlu0 %33, %v15
  %v35 = vpop.permute.xlu0 %34
  %v37 = vsub.f32 %v31, %v35
  %39 = vset.pattern.permute.xlu0 0
  %40 = vperm.xlu0 %39, %v30
  %v41 = vpop.permute.xlu0 %40
  %v43 = vmul.f32 %v37, %v41
  %v44 = vmax.f32 %v43, 0.0
  %v45 = vmin.f32 %v44, 1.0
  %vm46 = vcmask 519168
  %47 = vst.msk [vmem:[%s3] sm:$0xf] %vm46, %v45
  // Predicated region
  $region14: #{forward.19} parent=0 // pred_check
    _
  $region15: #{forward.19} parent=0 // pred_check_branch
    %49 = sbr.rel (0) target = $region17
  $region16: #{forward.19} parent=0 // pred_region
    _
  $region17: #{forward.19} parent=0 // pred_fallthru
    _
  // Predicated region
  $region18: #{forward.19} parent=0 // pred_check
    _
  $region19: #{forward.19} parent=0 // pred_check_branch
    %51 = sbr.rel (0) target = $region21
  $region20: #{forward.19} parent=0 // pred_region
    _
  $region21: #{forward.19} parent=0 // pred_fallthru
    _

// kernel: forward.15
$region0: #{forward.15}
  #allocation0 [shape = 'u32[]', space=smem, size = 0x4, offset = 0x4, fixed_abs, tag = 'smem constant byte address 0x4 - core index']
  #allocation1 [shape = 'u32[72,128]{1,0:T(1,128)}', space=vmem, size = 0x9000, scoped, tag = 'internal scratch']
  %s0 = inlined_call_operand.vmem [shape: f32[8,16], index: 0, kind: input, shape index: {}]
  %s1 = inlined_call_operand.vmem [shape: f32[16,64], index: 1, kind: input, shape index: {}]
  %s2 = inlined_call_operand.vmem [shape: f32[8,64], index: 2, kind: output, shape index: {}]
  %s3 = sld [smem:[#allocation0]]
  $region18: #{forward.15} parent=0
    _
  %s5 = ssub.s32 1, %s3
  %s6 = scalar_select 0, %s5, %s3
  // Predicated region
  $region2: #{forward.15} parent=0 // pred_check
    _
  $region3: #{forward.15} parent=0 // pred_check_branch
    %8 = sbr.rel (0) target = $region5
  $region4: #{forward.15} parent=0 // pred_region
    _
  $region5: #{forward.15} parent=0 // pred_fallthru
    _
  // Predicated region
  $region6: #{forward.15} parent=0 // pred_check
    _
  $region7: #{forward.15} parent=0 // pred_check_branch
    %10 = sbr.rel (0) target = $region9
  $region8: #{forward.15} parent=0 // pred_region
    _
  $region9: #{forward.15} parent=0 // pred_fallthru
    _
  %v11 = vld [vmem:[%s0] sm:$0xff]
  %v12 = vld [vmem:[%s1] sm:$0xff]
  %v13 = vld [vmem:[%s1 + $0x8] sm:$0xff]
  %vm14 = vcmask 130048
  %v16 = vsel %vm14, %v11, 0
  %18 = vmatpush.msra.mxu0 0.0
  %19 = vmatpush.msra.mxu0 0.0
  %20 = vmatpush.msra.mxu0 0.0
  %21 = vmatpush.msra.mxu0 0.0
  %22 = vmatpush.msra.mxu0 0.0
  %23 = vmatpush.msra.mxu0 0.0
  %24 = vmatpush.msra.mxu0 0.0
  %25 = vmatpush.msra.mxu0 0.0
  %26 = vmatpush.msra.mxu0 0.0
  %27 = vmatpush.msra.mxu0 0.0
  %28 = vmatpush.msra.mxu0 0.0
  %29 = vmatpush.msra.mxu0 0.0
  %30 = vmatpush.msra.mxu0 0.0
  %31 = vmatpush.msra.mxu0 0.0
  %v32 = vand.u32 %v13, 4294901760
  %33 = vmatpush.msra.mxu0 %v32
  %v34 = vand.u32 %v12, 4294901760
  %35 = vmatpush.msra.mxu0 %v34
  %v36 = vand.u32 %v16, 4294901760
  %v37 = vsub.f32 %v16, %v36
  %v38 = vand.u32 %v37, 4294901760
  %v39 = vsub.f32 %v37, %v38
  %v40 = vand.u32 %v39, 4294901760
  %41 = vmatmul.f32.gmra.mxu0 %v40
  %v42 = vpop.f32.mrf.mxu0
  %v43 = vadd.f32 0.0, %v42
  %44 = vdwg.mxu0
  %45 = vmatpush.msra.mxu0 0.0
  %46 = vmatpush.msra.mxu0 0.0
  %47 = vmatpush.msra.mxu0 0.0
  %48 = vmatpush.msra.mxu0 0.0
  %49 = vmatpush.msra.mxu0 0.0
  %50 = vmatpush.msra.mxu0 0.0
  %51 = vmatpush.msra.mxu0 0.0
  %52 = vmatpush.msra.mxu0 0.0
  %53 = vmatpush.msra.mxu0 0.0
  %54 = vmatpush.msra.mxu0 0.0
  %55 = vmatpush.msra.mxu0 0.0
  %56 = vmatpush.msra.mxu0 0.0
  %57 = vmatpush.msra.mxu0 0.0
  %58 = vmatpush.msra.mxu0 0.0
  %v59 = vand.u32 %v13, 4294901760
  %v60 = vsub.f32 %v13, %v59
  %v61 = vand.u32 %v60, 4294901760
  %v62 = vsub.f32 %v60, %v61
  %v63 = vand.u32 %v62, 4294901760
  %64 = vmatpush.msra.mxu0 %v63
  %v65 = vand.u32 %v12, 4294901760
  %v66 = vsub.f32 %v12, %v65
  %v67 = vand.u32 %v66, 4294901760
  %v68 = vsub.f32 %v66, %v67
  %v69 = vand.u32 %v68, 4294901760
  %70 = vmatpush.msra.mxu0 %v69
  %v71 = vand.u32 %v16, 4294901760
  %72 = vmatmul.f32.gmra.mxu0 %v71
  %v73 = vpop.f32.mrf.mxu0
  %v74 = vadd.f32 %v43, %v73
  %75 = vdwg.mxu0
  %76 = vmatpush.msra.mxu0 0.0
  %77 = vmatpush.msra.mxu0 0.0
  %78 = vmatpush.msra.mxu0 0.0
  %79 = vmatpush.msra.mxu0 0.0
  %80 = vmatpush.msra.mxu0 0.0
  %81 = vmatpush.msra.mxu0 0.0
  %82 = vmatpush.msra.mxu0 0.0
  %83 = vmatpush.msra.mxu0 0.0
  %84 = vmatpush.msra.mxu0 0.0
  %85 = vmatpush.msra.mxu0 0.0
  %86 = vmatpush.msra.mxu0 0.0
  %87 = vmatpush.msra.mxu0 0.0
  %88 = vmatpush.msra.mxu0 0.0
  %89 = vmatpush.msra.mxu0 0.0
  %v90 = vand.u32 %v13, 4294901760
  %v91 = vsub.f32 %v13, %v90
  %92 = vmatpush.msra.mxu0 %v91
  %v93 = vand.u32 %v12, 4294901760
  %v94 = vsub.f32 %v12, %v93
  %95 = vmatpush.msra.mxu0 %v94
  %v96 = vand.u32 %v16, 4294901760
  %v97 = vsub.f32 %v16, %v96
  %98 = vmatmul.f32.gmra.mxu0 %v97
  %v99 = vpop.f32.mrf.mxu0
  %v100 = vadd.f32 %v74, %v99
  %101 = vdwg.mxu0
  %102 = vmatpush.msra.mxu0 0.0
  %103 = vmatpush.msra.mxu0 0.0
  %104 = vmatpush.msra.mxu0 0.0
  %105 = vmatpush.msra.mxu0 0.0
  %106 = vmatpush.msra.mxu0 0.0
  %107 = vmatpush.msra.mxu0 0.0
  %108 = vmatpush.msra.mxu0 0.0
  %109 = vmatpush.msra.mxu0 0.0
  %110 = vmatpush.msra.mxu0 0.0
  %111 = vmatpush.msra.mxu0 0.0
  %112 = vmatpush.msra.mxu0 0.0
  %113 = vmatpush.msra.mxu0 0.0
  %114 = vmatpush.msra.mxu0 0.0
  %115 = vmatpush.msra.mxu0 0.0
  %v116 = vand.u32 %v13, 4294901760
  %117 = vmatpush.msra.mxu0 %v116
  %v118 = vand.u32 %v12, 4294901760
  %119 = vmatpush.msra.mxu0 %v118
  %v120 = vand.u32 %v16, 4294901760
  %v121 = vsub.f32 %v16, %v120
  %v122 = vand.u32 %v121, 4294901760
  %123 = vmatmul.f32.gmra.mxu0 %v122
  %v124 = vpop.f32.mrf.mxu0
  %v125 = vadd.f32 %v100, %v124
  %126 = vdwg.mxu0
  %127 = vmatpush.msra.mxu0 0.0
  %128 = vmatpush.msra.mxu0 0.0
  %129 = vmatpush.msra.mxu0 0.0
  %130 = vmatpush.msra.mxu0 0.0
  %131 = vmatpush.msra.mxu0 0.0
  %132 = vmatpush.msra.mxu0 0.0
  %133 = vmatpush.msra.mxu0 0.0
  %134 = vmatpush.msra.mxu0 0.0
  %135 = vmatpush.msra.mxu0 0.0
  %136 = vmatpush.msra.mxu0 0.0
  %137 = vmatpush.msra.mxu0 0.0
  %138 = vmatpush.msra.mxu0 0.0
  %139 = vmatpush.msra.mxu0 0.0
  %140 = vmatpush.msra.mxu0 0.0
  %v141 = vand.u32 %v13, 4294901760
  %v142 = vsub.f32 %v13, %v141
  %v143 = vand.u32 %v142, 4294901760
  %144 = vmatpush.msra.mxu0 %v143
  %v145 = vand.u32 %v12, 4294901760
  %v146 = vsub.f32 %v12, %v145
  %v147 = vand.u32 %v146, 4294901760
  %148 = vmatpush.msra.mxu0 %v147
  %v149 = vand.u32 %v16, 4294901760
  %150 = vmatmul.f32.gmra.mxu0 %v149
  %v151 = vpop.f32.mrf.mxu0
  %v152 = vadd.f32 %v125, %v151
  %153 = vdwg.mxu0
  %154 = vmatpush.msra.mxu0 0.0
  %155 = vmatpush.msra.mxu0 0.0
  %156 = vmatpush.msra.mxu0 0.0
  %157 = vmatpush.msra.mxu0 0.0
  %158 = vmatpush.msra.mxu0 0.0
  %159 = vmatpush.msra.mxu0 0.0
  %160 = vmatpush.msra.mxu0 0.0
  %161 = vmatpush.msra.mxu0 0.0
  %162 = vmatpush.msra.mxu0 0.0
  %163 = vmatpush.msra.mxu0 0.0
  %164 = vmatpush.msra.mxu0 0.0
  %165 = vmatpush.msra.mxu0 0.0
  %166 = vmatpush.msra.mxu0 0.0
  %167 = vmatpush.msra.mxu0 0.0
  %v168 = vand.u32 %v13, 4294901760
  %169 = vmatpush.msra.mxu0 %v168
  %v170 = vand.u32 %v12, 4294901760
  %171 = vmatpush.msra.mxu0 %v170
  %v172 = vand.u32 %v16, 4294901760
  %173 = vmatmul.f32.gmra.mxu0 %v172
  %v174 = vpop.f32.mrf.mxu0
  %v175 = vadd.f32 %v152, %v174
  %176 = vdwg.mxu0
  %vm177 = vcmask 523264
  %178 = vst.msk [vmem:[%s2] sm:$0xff] %vm177, %v175
  // Predicated region
  $region10: #{forward.15} parent=0 // pred_check
    _
  $region11: #{forward.15} parent=0 // pred_check_branch
    %180 = sbr.rel (0) target = $region13
  $region12: #{forward.15} parent=0 // pred_region
    _
  $region13: #{forward.15} parent=0 // pred_fallthru
    _
  // Predicated region
  $region14: #{forward.15} parent=0 // pred_check
    _
  $region15: #{forward.15} parent=0 // pred_check_branch
    %182 = sbr.rel (0) target = $region17
  $region16: #{forward.15} parent=0 // pred_region
    _
  $region17: #{forward.15} parent=0 // pred_fallthru
    _

// kernel: forward.12
$region0: #{forward.12}
  #allocation0 [shape = 'u32[]', space=smem, size = 0x4, offset = 0x4, fixed_abs, tag = 'smem constant byte address 0x4 - core index']
  #allocation1 [shape = 'u32[72,128]{1,0:T(1,128)}', space=vmem, size = 0x9000, scoped, tag = 'internal scratch']
  %s0 = inlined_call_operand.vmem [shape: f32[128,32], index: 0, kind: input, shape index: {}]
  %s1 = inlined_call_operand.vmem [shape: f32[32,8], index: 1, kind: input, shape index: {}]
  %s2 = inlined_call_operand.vmem [shape: f32[128,8], index: 2, kind: output, shape index: {}]
  %s3 = sld [smem:[#allocation0]]
  $region18: #{forward.12} parent=0
    _
  %s5 = ssub.s32 1, %s3
  %s6 = scalar_select 0, %s5, %s3
  // Predicated region
  $region2: #{forward.12} parent=0 // pred_check
    _
  $region3: #{forward.12} parent=0 // pred_check_branch
    %8 = sbr.rel (0) target = $region5
  $region4: #{forward.12} parent=0 // pred_region
    _
  $region5: #{forward.12} parent=0 // pred_fallthru
    _
  // Predicated region
  $region6: #{forward.12} parent=0 // pred_check
    _
  $region7: #{forward.12} parent=0 // pred_check_branch
    %10 = sbr.rel (0) target = $region9
  $region8: #{forward.12} parent=0 // pred_region
    _
  $region9: #{forward.12} parent=0 // pred_fallthru
    _
  %v11 = vld [vmem:[%s0] sm:$0xff]
  %v12 = vld [vmem:[%s0 + $0x8] sm:$0xff]
  %v13 = vld [vmem:[%s0 + $0x10] sm:$0xff]
  %v14 = vld [vmem:[%s0 + $0x18] sm:$0xff]
  %v15 = vld [vmem:[%s0 + $0x20] sm:$0xff]
  %v16 = vld [vmem:[%s0 + $0x28] sm:$0xff]
  %v17 = vld [vmem:[%s0 + $0x30] sm:$0xff]
  %v18 = vld [vmem:[%s0 + $0x38] sm:$0xff]
  %v19 = vld [vmem:[%s0 + $0x40] sm:$0xff]
  %v20 = vld [vmem:[%s0 + $0x48] sm:$0xff]
  %v21 = vld [vmem:[%s0 + $0x50] sm:$0xff]
  %v22 = vld [vmem:[%s0 + $0x58] sm:$0xff]
  %v23 = vld [vmem:[%s0 + $0x60] sm:$0xff]
  %v24 = vld [vmem:[%s0 + $0x68] sm:$0xff]
  %v25 = vld [vmem:[%s0 + $0x70] sm:$0xff]
  %v26 = vld [vmem:[%s0 + $0x78] sm:$0xff]
  %v27 = vld [vmem:[%s1] sm:$0xff]
  %v28 = vld [vmem:[%s1 + $0x8] sm:$0xff]
  %v29 = vld [vmem:[%s1 + $0x10] sm:$0xff]
  %v30 = vld [vmem:[%s1 + $0x18] sm:$0xff]
  %vm31 = vcmask 261120
  %v33 = vsel %vm31, %v11, 0
  %v36 = vsel %vm31, %v12, 0
  %v39 = vsel %vm31, %v13, 0
  %v42 = vsel %vm31, %v14, 0
  %v45 = vsel %vm31, %v15, 0
  %v48 = vsel %vm31, %v16, 0
  %v51 = vsel %vm31, %v17, 0
  %v54 = vsel %vm31, %v18, 0
  %v57 = vsel %vm31, %v19, 0
  %v60 = vsel %vm31, %v20, 0
  %v63 = vsel %vm31, %v21, 0
  %v66 = vsel %vm31, %v22, 0
  %v69 = vsel %vm31, %v23, 0
  %v72 = vsel %vm31, %v24, 0
  %v75 = vsel %vm31, %v25, 0
  %v78 = vsel %vm31, %v26, 0
  %80 = vmatpush.msra.mxu0 0.0
  %81 = vmatpush.msra.mxu0 0.0
  %82 = vmatpush.msra.mxu0 0.0
  %83 = vmatpush.msra.mxu0 0.0
  %84 = vmatpush.msra.mxu0 0.0
  %85 = vmatpush.msra.mxu0 0.0
  %86 = vmatpush.msra.mxu0 0.0
  %87 = vmatpush.msra.mxu0 0.0
  %88 = vmatpush.msra.mxu0 0.0
  %89 = vmatpush.msra.mxu0 0.0
  %90 = vmatpush.msra.mxu0 0.0
  %91 = vmatpush.msra.mxu0 0.0
  %v92 = vand.u32 %v30, 4294901760
  %93 = vmatpush.msra.mxu0 %v92
  %v94 = vand.u32 %v29, 4294901760
  %95 = vmatpush.msra.mxu0 %v94
  %v96 = vand.u32 %v28, 4294901760
  %97 = vmatpush.msra.mxu0 %v96
  %v98 = vand.u32 %v27, 4294901760
  %99 = vmatpush.msra.mxu0 %v98
  %v100 = vand.u32 %v33, 4294901760
  %v101 = vsub.f32 %v33, %v100
  %v102 = vand.u32 %v101, 4294901760
  %v103 = vsub.f32 %v101, %v102
  %v104 = vand.u32 %v103, 4294901760
  %105 = vmatmul.f32.gmra.mxu0 %v104
  %v106 = vpop.f32.mrf.mxu0
  %v107 = vadd.f32 0.0, %v106
  %v108 = vand.u32 %v36, 4294901760
  %v109 = vsub.f32 %v36, %v108
  %v110 = vand.u32 %v109, 4294901760
  %v111 = vsub.f32 %v109, %v110
  %v112 = vand.u32 %v111, 4294901760
  %113 = vmatmul.f32.gmra.mxu0 %v112
  %v114 = vpop.f32.mrf.mxu0
  %v115 = vadd.f32 0.0, %v114
  %v116 = vand.u32 %v39, 4294901760
  %v117 = vsub.f32 %v39, %v116
  %v118 = vand.u32 %v117, 4294901760
  %v119 = vsub.f32 %v117, %v118
  %v120 = vand.u32 %v119, 4294901760
  %121 = vmatmul.f32.gmra.mxu0 %v120
  %v122 = vpop.f32.mrf.mxu0
  %v123 = vadd.f32 0.0, %v122
  %v124 = vand.u32 %v42, 4294901760
  %v125 = vsub.f32 %v42, %v124
  %v126 = vand.u32 %v125, 4294901760
  %v127 = vsub.f32 %v125, %v126
  %v128 = vand.u32 %v127, 4294901760
  %129 = vmatmul.f32.gmra.mxu0 %v128
  %v130 = vpop.f32.mrf.mxu0
  %v131 = vadd.f32 0.0, %v130
  %v132 = vand.u32 %v45, 4294901760
  %v133 = vsub.f32 %v45, %v132
  %v134 = vand.u32 %v133, 4294901760
  %v135 = vsub.f32 %v133, %v134
  %v136 = vand.u32 %v135, 4294901760
  %137 = vmatmul.f32.gmra.mxu0 %v136
  %v138 = vpop.f32.mrf.mxu0
  %v139 = vadd.f32 0.0, %v138
  %v140 = vand.u32 %v48, 4294901760
  %v141 = vsub.f32 %v48, %v140
  %v142 = vand.u32 %v141, 4294901760
  %v143 = vsub.f32 %v141, %v142
  %v144 = vand.u32 %v143, 4294901760
  %145 = vmatmul.f32.gmra.mxu0 %v144
  %v146 = vpop.f32.mrf.mxu0
  %v147 = vadd.f32 0.0, %v146
  %v148 = vand.u32 %v51, 4294901760
  %v149 = vsub.f32 %v51, %v148
  %v150 = vand.u32 %v149, 4294901760
  %v151 = vsub.f32 %v149, %v150
  %v152 = vand.u32 %v151, 4294901760
  %153 = vmatmul.f32.gmra.mxu0 %v152
  %v154 = vpop.f32.mrf.mxu0
  %v155 = vadd.f32 0.0, %v154
  %v156 = vand.u32 %v54, 4294901760
  %v157 = vsub.f32 %v54, %v156
  %v158 = vand.u32 %v157, 4294901760
  %v159 = vsub.f32 %v157, %v158
  %v160 = vand.u32 %v159, 4294901760
  %161 = vmatmul.f32.gmra.mxu0 %v160
  %v162 = vpop.f32.mrf.mxu0
  %v163 = vadd.f32 0.0, %v162
  %v164 = vand.u32 %v57, 4294901760
  %v165 = vsub.f32 %v57, %v164
  %v166 = vand.u32 %v165, 4294901760
  %v167 = vsub.f32 %v165, %v166
  %v168 = vand.u32 %v167, 4294901760
  %169 = vmatmul.f32.gmra.mxu0 %v168
  %v170 = vpop.f32.mrf.mxu0
  %v171 = vadd.f32 0.0, %v170
  %v172 = vand.u32 %v60, 4294901760
  %v173 = vsub.f32 %v60, %v172
  %v174 = vand.u32 %v173, 4294901760
  %v175 = vsub.f32 %v173, %v174
  %v176 = vand.u32 %v175, 4294901760
  %177 = vmatmul.f32.gmra.mxu0 %v176
  %v178 = vpop.f32.mrf.mxu0
  %v179 = vadd.f32 0.0, %v178
  %v180 = vand.u32 %v63, 4294901760
  %v181 = vsub.f32 %v63, %v180
  %v182 = vand.u32 %v181, 4294901760
  %v183 = vsub.f32 %v181, %v182
  %v184 = vand.u32 %v183, 4294901760
  %185 = vmatmul.f32.gmra.mxu0 %v184
  %v186 = vpop.f32.mrf.mxu0
  %v187 = vadd.f32 0.0, %v186
  %v188 = vand.u32 %v66, 4294901760
  %v189 = vsub.f32 %v66, %v188
  %v190 = vand.u32 %v189, 4294901760
  %v191 = vsub.f32 %v189, %v190
  %v192 = vand.u32 %v191, 4294901760
  %193 = vmatmul.f32.gmra.mxu0 %v192
  %v194 = vpop.f32.mrf.mxu0
  %v195 = vadd.f32 0.0, %v194
  %v196 = vand.u32 %v69, 4294901760
  %v197 = vsub.f32 %v69, %v196
  %v198 = vand.u32 %v197, 4294901760
  %v199 = vsub.f32 %v197, %v198
  %v200 = vand.u32 %v199, 4294901760
  %201 = vmatmul.f32.gmra.mxu0 %v200
  %v202 = vpop.f32.mrf.mxu0
  %v203 = vadd.f32 0.0, %v202
  %v204 = vand.u32 %v72, 4294901760
  %v205 = vsub.f32 %v72, %v204
  %v206 = vand.u32 %v205, 4294901760
  %v207 = vsub.f32 %v205, %v206
  %v208 = vand.u32 %v207, 4294901760
  %209 = vmatmul.f32.gmra.mxu0 %v208
  %v210 = vpop.f32.mrf.mxu0
  %v211 = vadd.f32 0.0, %v210
  %v212 = vand.u32 %v75, 4294901760
  %v213 = vsub.f32 %v75, %v212
  %v214 = vand.u32 %v213, 4294901760
  %v215 = vsub.f32 %v213, %v214
  %v216 = vand.u32 %v215, 4294901760
  %217 = vmatmul.f32.gmra.mxu0 %v216
  %v218 = vpop.f32.mrf.mxu0
  %v219 = vadd.f32 0.0, %v218
  %v220 = vand.u32 %v78, 4294901760
  %v221 = vsub.f32 %v78, %v220
  %v222 = vand.u32 %v221, 4294901760
  %v223 = vsub.f32 %v221, %v222
  %v224 = vand.u32 %v223, 4294901760
  %225 = vmatmul.f32.gmra.mxu0 %v224
  %v226 = vpop.f32.mrf.mxu0
  %v227 = vadd.f32 0.0, %v226
  %228 = vdwg.mxu0
  %229 = vmatpush.msra.mxu0 0.0
  %230 = vmatpush.msra.mxu0 0.0
  %231 = vmatpush.msra.mxu0 0.0
  %232 = vmatpush.msra.mxu0 0.0
  %233 = vmatpush.msra.mxu0 0.0
  %234 = vmatpush.msra.mxu0 0.0
  %235 = vmatpush.msra.mxu0 0.0
  %236 = vmatpush.msra.mxu0 0.0
  %237 = vmatpush.msra.mxu0 0.0
  %238 = vmatpush.msra.mxu0 0.0
  %239 = vmatpush.msra.mxu0 0.0
  %240 = vmatpush.msra.mxu0 0.0
  %v241 = vand.u32 %v30, 4294901760
  %v242 = vsub.f32 %v30, %v241
  %v243 = vand.u32 %v242, 4294901760
  %v244 = vsub.f32 %v242, %v243
  %v245 = vand.u32 %v244, 4294901760
  %246 = vmatpush.msra.mxu0 %v245
  %v247 = vand.u32 %v29, 4294901760
  %v248 = vsub.f32 %v29, %v247
  %v249 = vand.u32 %v248, 4294901760
  %v250 = vsub.f32 %v248, %v249
  %v251 = vand.u32 %v250, 4294901760
  %252 = vmatpush.msra.mxu0 %v251
  %v253 = vand.u32 %v28, 4294901760
  %v254 = vsub.f32 %v28, %v253
  %v255 = vand.u32 %v254, 4294901760
  %v256 = vsub.f32 %v254, %v255
  %v257 = vand.u32 %v256, 4294901760
  %258 = vmatpush.msra.mxu0 %v257
  %v259 = vand.u32 %v27, 4294901760
  %v260 = vsub.f32 %v27, %v259
  %v261 = vand.u32 %v260, 4294901760
  %v262 = vsub.f32 %v260, %v261
  %v263 = vand.u32 %v262, 4294901760
  %264 = vmatpush.msra.mxu0 %v263
  %v265 = vand.u32 %v33, 4294901760
  %266 = vmatmul.f32.gmra.mxu0 %v265
  %v267 = vpop.f32.mrf.mxu0
  %v268 = vadd.f32 %v107, %v267
  %v269 = vand.u32 %v36, 4294901760
  %270 = vmatmul.f32.gmra.mxu0 %v269
  %v271 = vpop.f32.mrf.mxu0
  %v272 = vadd.f32 %v115, %v271
  %v273 = vand.u32 %v39, 4294901760
  %274 = vmatmul.f32.gmra.mxu0 %v273
  %v275 = vpop.f32.mrf.mxu0
  %v276 = vadd.f32 %v123, %v275
  %v277 = vand.u32 %v42, 4294901760
  %278 = vmatmul.f32.gmra.mxu0 %v277
  %v279 = vpop.f32.mrf.mxu0
  %v280 = vadd.f32 %v131, %v279
  %v281 = vand.u32 %v45, 4294901760
  %282 = vmatmul.f32.gmra.mxu0 %v281
  %v283 = vpop.f32.mrf.mxu0
  %v284 = vadd.f32 %v139, %v283
  %v285 = vand.u32 %v48, 4294901760
  %286 = vmatmul.f32.gmra.mxu0 %v285
  %v287 = vpop.f32.mrf.mxu0
  %v288 = vadd.f32 %v147, %v287
  %v289 = vand.u32 %v51, 4294901760
  %290 = vmatmul.f32.gmra.mxu0 %v289
  %v291 = vpop.f32.mrf.mxu0
  %v292 = vadd.f32 %v155, %v291
  %v293 = vand.u32 %v54, 4294901760
  %294 = vmatmul.f32.gmra.mxu0 %v293
  %v295 = vpop.f32.mrf.mxu0
  %v296 = vadd.f32 %v163, %v295
  %v297 = vand.u32 %v57, 4294901760
  %298 = vmatmul.f32.gmra.mxu0 %v297
  %v299 = vpop.f32.mrf.mxu0
  %v300 = vadd.f32 %v171, %v299
  %v301 = vand.u32 %v60, 4294901760
  %302 = vmatmul.f32.gmra.mxu0 %v301
  %v303 = vpop.f32.mrf.mxu0
  %v304 = vadd.f32 %v179, %v303
  %v305 = vand.u32 %v63, 4294901760
  %306 = vmatmul.f32.gmra.mxu0 %v305
  %v307 = vpop.f32.mrf.mxu0
  %v308 = vadd.f32 %v187, %v307
  %v309 = vand.u32 %v66, 4294901760
  %310 = vmatmul.f32.gmra.mxu0 %v309
  %v311 = vpop.f32.mrf.mxu0
  %v312 = vadd.f32 %v195, %v311
  %v313 = vand.u32 %v69, 4294901760
  %314 = vmatmul.f32.gmra.mxu0 %v313
  %v315 = vpop.f32.mrf.mxu0
  %v316 = vadd.f32 %v203, %v315
  %v317 = vand.u32 %v72, 4294901760
  %318 = vmatmul.f32.gmra.mxu0 %v317
  %v319 = vpop.f32.mrf.mxu0
  %v320 = vadd.f32 %v211, %v319
  %v321 = vand.u32 %v75, 4294901760
  %322 = vmatmul.f32.gmra.mxu0 %v321
  %v323 = vpop.f32.mrf.mxu0
  %v324 = vadd.f32 %v219, %v323
  %v325 = vand.u32 %v78, 4294901760
  %326 = vmatmul.f32.gmra.mxu0 %v325
  %v327 = vpop.f32.mrf.mxu0
  %v328 = vadd.f32 %v227, %v327
  %329 = vdwg.mxu0
  %330 = vmatpush.msra.mxu0 0.0
  %331 = vmatpush.msra.mxu0 0.0
  %332 = vmatpush.msra.mxu0 0.0
  %333 = vmatpush.msra.mxu0 0.0
  %334 = vmatpush.msra.mxu0 0.0
  %335 = vmatpush.msra.mxu0 0.0
  %336 = vmatpush.msra.mxu0 0.0
  %337 = vmatpush.msra.mxu0 0.0
  %338 = vmatpush.msra.mxu0 0.0
  %339 = vmatpush.msra.mxu0 0.0
  %340 = vmatpush.msra.mxu0 0.0
  %341 = vmatpush.msra.mxu0 0.0
  %v342 = vand.u32 %v30, 4294901760
  %v343 = vsub.f32 %v30, %v342
  %344 = vmatpush.msra.mxu0 %v343
  %v345 = vand.u32 %v29, 4294901760
  %v346 = vsub.f32 %v29, %v345
  %347 = vmatpush.msra.mxu0 %v346
  %v348 = vand.u32 %v28, 4294901760
  %v349 = vsub.f32 %v28, %v348
  %350 = vmatpush.msra.mxu0 %v349
  %v351 = vand.u32 %v27, 4294901760
  %v352 = vsub.f32 %v27, %v351
  %353 = vmatpush.msra.mxu0 %v352
  %v354 = vand.u32 %v33, 4294901760
  %v355 = vsub.f32 %v33, %v354
  %356 = vmatmul.f32.gmra.mxu0 %v355
  %v357 = vpop.f32.mrf.mxu0
  %v358 = vadd.f32 %v268, %v357
  %v359 = vand.u32 %v36, 4294901760
  %v360 = vsub.f32 %v36, %v359
  %361 = vmatmul.f32.gmra.mxu0 %v360
  %v362 = vpop.f32.mrf.mxu0
  %v363 = vadd.f32 %v272, %v362
  %v364 = vand.u32 %v39, 4294901760
  %v365 = vsub.f32 %v39, %v364
  %366 = vmatmul.f32.gmra.mxu0 %v365
  %v367 = vpop.f32.mrf.mxu0
  %v368 = vadd.f32 %v276, %v367
  %v369 = vand.u32 %v42, 4294901760
  %v370 = vsub.f32 %v42, %v369
  %371 = vmatmul.f32.gmra.mxu0 %v370
  %v372 = vpop.f32.mrf.mxu0
  %v373 = vadd.f32 %v280, %v372
  %v374 = vand.u32 %v45, 4294901760
  %v375 = vsub.f32 %v45, %v374
  %376 = vmatmul.f32.gmra.mxu0 %v375
  %v377 = vpop.f32.mrf.mxu0
  %v378 = vadd.f32 %v284, %v377
  %v379 = vand.u32 %v48, 4294901760
  %v380 = vsub.f32 %v48, %v379
  %381 = vmatmul.f32.gmra.mxu0 %v380
  %v382 = vpop.f32.mrf.mxu0
  %v383 = vadd.f32 %v288, %v382
  %v384 = vand.u32 %v51, 4294901760
  %v385 = vsub.f32 %v51, %v384
  %386 = vmatmul.f32.gmra.mxu0 %v385
  %v387 = vpop.f32.mrf.mxu0
  %v388 = vadd.f32 %v292, %v387
  %v389 = vand.u32 %v54, 4294901760
  %v390 = vsub.f32 %v54, %v389
  %391 = vmatmul.f32.gmra.mxu0 %v390
  %v392 = vpop.f32.mrf.mxu0
  %v393 = vadd.f32 %v296, %v392
  %v394 = vand.u32 %v57, 4294901760
  %v395 = vsub.f32 %v57, %v394
  %396 = vmatmul.f32.gmra.mxu0 %v395
  %v397 = vpop.f32.mrf.mxu0
  %v398 = vadd.f32 %v300, %v397
  %v399 = vand.u32 %v60, 4294901760
  %v400 = vsub.f32 %v60, %v399
  %401 = vmatmul.f32.gmra.mxu0 %v400
  %v402 = vpop.f32.mrf.mxu0
  %v403 = vadd.f32 %v304, %v402
  %v404 = vand.u32 %v63, 4294901760
  %v405 = vsub.f32 %v63, %v404
  %406 = vmatmul.f32.gmra.mxu0 %v405
  %v407 = vpop.f32.mrf.mxu0
  %v408 = vadd.f32 %v308, %v407
  %v409 = vand.u32 %v66, 4294901760
  %v410 = vsub.f32 %v66, %v409
  %411 = vmatmul.f32.gmra.mxu0 %v410
  %v412 = vpop.f32.mrf.mxu0
  %v413 = vadd.f32 %v312, %v412
  %v414 = vand.u32 %v69, 4294901760
  %v415 = vsub.f32 %v69, %v414
  %416 = vmatmul.f32.gmra.mxu0 %v415
  %v417 = vpop.f32.mrf.mxu0
  %v418 = vadd.f32 %v316, %v417
  %v419 = vand.u32 %v72, 4294901760
  %v420 = vsub.f32 %v72, %v419
  %421 = vmatmul.f32.gmra.mxu0 %v420
  %v422 = vpop.f32.mrf.mxu0
  %v423 = vadd.f32 %v320, %v422
  %v424 = vand.u32 %v75, 4294901760
  %v425 = vsub.f32 %v75, %v424
  %426 = vmatmul.f32.gmra.mxu0 %v425
  %v427 = vpop.f32.mrf.mxu0
  %v428 = vadd.f32 %v324, %v427
  %v429 = vand.u32 %v78, 4294901760
  %v430 = vsub.f32 %v78, %v429
  %431 = vmatmul.f32.gmra.mxu0 %v430
  %v432 = vpop.f32.mrf.mxu0
  %v433 = vadd.f32 %v328, %v432
  %434 = vdwg.mxu0
  %435 = vmatpush.msra.mxu0 0.0
  %436 = vmatpush.msra.mxu0 0.0
  %437 = vmatpush.msra.mxu0 0.0
  %438 = vmatpush.msra.mxu0 0.0
  %439 = vmatpush.msra.mxu0 0.0
  %440 = vmatpush.msra.mxu0 0.0
  %441 = vmatpush.msra.mxu0 0.0
  %442 = vmatpush.msra.mxu0 0.0
  %443 = vmatpush.msra.mxu0 0.0
  %444 = vmatpush.msra.mxu0 0.0
  %445 = vmatpush.msra.mxu0 0.0
  %446 = vmatpush.msra.mxu0 0.0
  %v447 = vand.u32 %v30, 4294901760
  %448 = vmatpush.msra.mxu0 %v447
  %v449 = vand.u32 %v29, 4294901760
  %450 = vmatpush.msra.mxu0 %v449
  %v451 = vand.u32 %v28, 4294901760
  %452 = vmatpush.msra.mxu0 %v451
  %v453 = vand.u32 %v27, 4294901760
  %454 = vmatpush.msra.mxu0 %v453
  %v455 = vand.u32 %v33, 4294901760
  %v456 = vsub.f32 %v33, %v455
  %v457 = vand.u32 %v456, 4294901760
  %458 = vmatmul.f32.gmra.mxu0 %v457
  %v459 = vpop.f32.mrf.mxu0
  %v460 = vadd.f32 %v358, %v459
  %v461 = vand.u32 %v36, 4294901760
  %v462 = vsub.f32 %v36, %v461
  %v463 = vand.u32 %v462, 4294901760
  %464 = vmatmul.f32.gmra.mxu0 %v463
  %v465 = vpop.f32.mrf.mxu0
  %v466 = vadd.f32 %v363, %v465
  %v467 = vand.u32 %v39, 4294901760
  %v468 = vsub.f32 %v39, %v467
  %v469 = vand.u32 %v468, 4294901760
  %470 = vmatmul.f32.gmra.mxu0 %v469
  %v471 = vpop.f32.mrf.mxu0
  %v472 = vadd.f32 %v368, %v471
  %v473 = vand.u32 %v42, 4294901760
  %v474 = vsub.f32 %v42, %v473
  %v475 = vand.u32 %v474, 4294901760
  %476 = vmatmul.f32.gmra.mxu0 %v475
  %v477 = vpop.f32.mrf.mxu0
  %v478 = vadd.f32 %v373, %v477
  %v479 = vand.u32 %v45, 4294901760
  %v480 = vsub.f32 %v45, %v479
  %v481 = vand.u32 %v480, 4294901760
  %482 = vmatmul.f32.gmra.mxu0 %v481
  %v483 = vpop.f32.mrf.mxu0
  %v484 = vadd.f32 %v378, %v483
  %v485 = vand.u32 %v48, 4294901760
  %v486 = vsub.f32 %v48, %v485
  %v487 = vand.u32 %v486, 4294901760
  %488 = vmatmul.f32.gmra.mxu0 %v487
  %v489 = vpop.f32.mrf.mxu0
  %v490 = vadd.f32 %v383, %v489
  %v491 = vand.u32 %v51, 4294901760
  %v492 = vsub.f32 %v51, %v491
  %v493 = vand.u32 %v492, 4294901760
  %494 = vmatmul.f32.gmra.mxu0 %v493
  %v495 = vpop.f32.mrf.mxu0
  %v496 = vadd.f32 %v388, %v495
  %v497 = vand.u32 %v54, 4294901760
  %v498 = vsub.f32 %v54, %v497
  %v499 = vand.u32 %v498, 4294901760
  %500 = vmatmul.f32.gmra.mxu0 %v499
  %v501 = vpop.f32.mrf.mxu0
  %v502 = vadd.f32 %v393, %v501
  %v503 = vand.u32 %v57, 4294901760
  %v504 = vsub.f32 %v57, %v503
  %v505 = vand.u32 %v504, 4294901760
  %506 = vmatmul.f32.gmra.mxu0 %v505
  %v507 = vpop.f32.mrf.mxu0
  %v508 = vadd.f32 %v398, %v507
  %v509 = vand.u32 %v60, 4294901760
  %v510 = vsub.f32 %v60, %v509
  %v511 = vand.u32 %v510, 4294901760
  %512 = vmatmul.f32.gmra.mxu0 %v511
  %v513 = vpop.f32.mrf.mxu0
  %v514 = vadd.f32 %v403, %v513
  %v515 = vand.u32 %v63, 4294901760
  %v516 = vsub.f32 %v63, %v515
  %v517 = vand.u32 %v516, 4294901760
  %518 = vmatmul.f32.gmra.mxu0 %v517
  %v519 = vpop.f32.mrf.mxu0
  %v520 = vadd.f32 %v408, %v519
  %v521 = vand.u32 %v66, 4294901760
  %v522 = vsub.f32 %v66, %v521
  %v523 = vand.u32 %v522, 4294901760
  %524 = vmatmul.f32.gmra.mxu0 %v523
  %v525 = vpop.f32.mrf.mxu0
  %v526 = vadd.f32 %v413, %v525
  %v527 = vand.u32 %v69, 4294901760
  %v528 = vsub.f32 %v69, %v527
  %v529 = vand.u32 %v528, 4294901760
  %530 = vmatmul.f32.gmra.mxu0 %v529
  %v531 = vpop.f32.mrf.mxu0
  %v532 = vadd.f32 %v418, %v531
  %v533 = vand.u32 %v72, 4294901760
  %v534 = vsub.f32 %v72, %v533
  %v535 = vand.u32 %v534, 4294901760
  %536 = vmatmul.f32.gmra.mxu0 %v535
  %v537 = vpop.f32.mrf.mxu0
  %v538 = vadd.f32 %v423, %v537
  %v539 = vand.u32 %v75, 4294901760
  %v540 = vsub.f32 %v75, %v539
  %v541 = vand.u32 %v540, 4294901760
  %542 = vmatmul.f32.gmra.mxu0 %v541
  %v543 = vpop.f32.mrf.mxu0
  %v544 = vadd.f32 %v428, %v543
  %v545 = vand.u32 %v78, 4294901760
  %v546 = vsub.f32 %v78, %v545
  %v547 = vand.u32 %v546, 4294901760
  %548 = vmatmul.f32.gmra.mxu0 %v547
  %v549 = vpop.f32.mrf.mxu0
  %v550 = vadd.f32 %v433, %v549
  %551 = vdwg.mxu0
  %552 = vmatpush.msra.mxu0 0.0
  %553 = vmatpush.msra.mxu0 0.0
  %554 = vmatpush.msra.mxu0 0.0
  %555 = vmatpush.msra.mxu0 0.0
  %556 = vmatpush.msra.mxu0 0.0
  %557 = vmatpush.msra.mxu0 0.0
  %558 = vmatpush.msra.mxu0 0.0
  %559 = vmatpush.msra.mxu0 0.0
  %560 = vmatpush.msra.mxu0 0.0
  %561 = vmatpush.msra.mxu0 0.0
  %562 = vmatpush.msra.mxu0 0.0
  %563 = vmatpush.msra.mxu0 0.0
  %v564 = vand.u32 %v30, 4294901760
  %v565 = vsub.f32 %v30, %v564
  %v566 = vand.u32 %v565, 4294901760
  %567 = vmatpush.msra.mxu0 %v566
  %v568 = vand.u32 %v29, 4294901760
  %v569 = vsub.f32 %v29, %v568
  %v570 = vand.u32 %v569, 4294901760
  %571 = vmatpush.msra.mxu0 %v570
  %v572 = vand.u32 %v28, 4294901760
  %v573 = vsub.f32 %v28, %v572
  %v574 = vand.u32 %v573, 4294901760
  %575 = vmatpush.msra.mxu0 %v574
  %v576 = vand.u32 %v27, 4294901760
  %v577 = vsub.f32 %v27, %v576
  %v578 = vand.u32 %v577, 4294901760
  %579 = vmatpush.msra.mxu0 %v578
  %v580 = vand.u32 %v33, 4294901760
  %581 = vmatmul.f32.gmra.mxu0 %v580
  %v582 = vpop.f32.mrf.mxu0
  %v583 = vadd.f32 %v460, %v582
  %v584 = vand.u32 %v36, 4294901760
  %585 = vmatmul.f32.gmra.mxu0 %v584
  %v586 = vpop.f32.mrf.mxu0
  %v587 = vadd.f32 %v466, %v586
  %v588 = vand.u32 %v39, 4294901760
  %589 = vmatmul.f32.gmra.mxu0 %v588
  %v590 = vpop.f32.mrf.mxu0
  %v591 = vadd.f32 %v472, %v590
  %v592 = vand.u32 %v42, 4294901760
  %593 = vmatmul.f32.gmra.mxu0 %v592
  %v594 = vpop.f32.mrf.mxu0
  %v595 = vadd.f32 %v478, %v594
  %v596 = vand.u32 %v45, 4294901760
  %597 = vmatmul.f32.gmra.mxu0 %v596
  %v598 = vpop.f32.mrf.mxu0
  %v599 = vadd.f32 %v484, %v598
  %v600 = vand.u32 %v48, 4294901760
  %601 = vmatmul.f32.gmra.mxu0 %v600
  %v602 = vpop.f32.mrf.mxu0
  %v603 = vadd.f32 %v490, %v602
  %v604 = vand.u32 %v51, 4294901760
  %605 = vmatmul.f32.gmra.mxu0 %v604
  %v606 = vpop.f32.mrf.mxu0
  %v607 = vadd.f32 %v496, %v606
  %v608 = vand.u32 %v54, 4294901760
  %609 = vmatmul.f32.gmra.mxu0 %v608
  %v610 = vpop.f32.mrf.mxu0
  %v611 = vadd.f32 %v502, %v610
  %v612 = vand.u32 %v57, 4294901760
  %613 = vmatmul.f32.gmra.mxu0 %v612
  %v614 = vpop.f32.mrf.mxu0
  %v615 = vadd.f32 %v508, %v614
  %v616 = vand.u32 %v60, 4294901760
  %617 = vmatmul.f32.gmra.mxu0 %v616
  %v618 = vpop.f32.mrf.mxu0
  %v619 = vadd.f32 %v514, %v618
  %v620 = vand.u32 %v63, 4294901760
  %621 = vmatmul.f32.gmra.mxu0 %v620
  %v622 = vpop.f32.mrf.mxu0
  %v623 = vadd.f32 %v520, %v622
  %v624 = vand.u32 %v66, 4294901760
  %625 = vmatmul.f32.gmra.mxu0 %v624
  %v626 = vpop.f32.mrf.mxu0
  %v627 = vadd.f32 %v526, %v626
  %v628 = vand.u32 %v69, 4294901760
  %629 = vmatmul.f32.gmra.mxu0 %v628
  %v630 = vpop.f32.mrf.mxu0
  %v631 = vadd.f32 %v532, %v630
  %v632 = vand.u32 %v72, 4294901760
  %633 = vmatmul.f32.gmra.mxu0 %v632
  %v634 = vpop.f32.mrf.mxu0
  %v635 = vadd.f32 %v538, %v634
  %v636 = vand.u32 %v75, 4294901760
  %637 = vmatmul.f32.gmra.mxu0 %v636
  %v638 = vpop.f32.mrf.mxu0
  %v639 = vadd.f32 %v544, %v638
  %v640 = vand.u32 %v78, 4294901760
  %641 = vmatmul.f32.gmra.mxu0 %v640
  %v642 = vpop.f32.mrf.mxu0
  %v643 = vadd.f32 %v550, %v642
  %644 = vdwg.mxu0
  %645 = vmatpush.msra.mxu0 0.0
  %646 = vmatpush.msra.mxu0 0.0
  %647 = vmatpush.msra.mxu0 0.0
  %648 = vmatpush.msra.mxu0 0.0
  %649 = vmatpush.msra.mxu0 0.0
  %650 = vmatpush.msra.mxu0 0.0
  %651 = vmatpush.msra.mxu0 0.0
  %652 = vmatpush.msra.mxu0 0.0
  %653 = vmatpush.msra.mxu0 0.0
  %654 = vmatpush.msra.mxu0 0.0
  %655 = vmatpush.msra.mxu0 0.0
  %656 = vmatpush.msra.mxu0 0.0
  %v657 = vand.u32 %v30, 4294901760
  %658 = vmatpush.msra.mxu0 %v657
  %v659 = vand.u32 %v29, 4294901760
  %660 = vmatpush.msra.mxu0 %v659
  %v661 = vand.u32 %v28, 4294901760
  %662 = vmatpush.msra.mxu0 %v661
  %v663 = vand.u32 %v27, 4294901760
  %664 = vmatpush.msra.mxu0 %v663
  %v665 = vand.u32 %v33, 4294901760
  %666 = vmatmul.f32.gmra.mxu0 %v665
  %v667 = vpop.f32.mrf.mxu0
  %v668 = vadd.f32 %v583, %v667
  %v669 = vand.u32 %v36, 4294901760
  %670 = vmatmul.f32.gmra.mxu0 %v669
  %v671 = vpop.f32.mrf.mxu0
  %v672 = vadd.f32 %v587, %v671
  %v673 = vand.u32 %v39, 4294901760
  %674 = vmatmul.f32.gmra.mxu0 %v673
  %v675 = vpop.f32.mrf.mxu0
  %v676 = vadd.f32 %v591, %v675
  %v677 = vand.u32 %v42, 4294901760
  %678 = vmatmul.f32.gmra.mxu0 %v677
  %v679 = vpop.f32.mrf.mxu0
  %v680 = vadd.f32 %v595, %v679
  %v681 = vand.u32 %v45, 4294901760
  %682 = vmatmul.f32.gmra.mxu0 %v681
  %v683 = vpop.f32.mrf.mxu0
  %v684 = vadd.f32 %v599, %v683
  %v685 = vand.u32 %v48, 4294901760
  %686 = vmatmul.f32.gmra.mxu0 %v685
  %v687 = vpop.f32.mrf.mxu0
  %v688 = vadd.f32 %v603, %v687
  %v689 = vand.u32 %v51, 4294901760
  %690 = vmatmul.f32.gmra.mxu0 %v689
  %v691 = vpop.f32.mrf.mxu0
  %v692 = vadd.f32 %v607, %v691
  %v693 = vand.u32 %v54, 4294901760
  %694 = vmatmul.f32.gmra.mxu0 %v693
  %v695 = vpop.f32.mrf.mxu0
  %v696 = vadd.f32 %v611, %v695
  %v697 = vand.u32 %v57, 4294901760
  %698 = vmatmul.f32.gmra.mxu0 %v697
  %v699 = vpop.f32.mrf.mxu0
  %v700 = vadd.f32 %v615, %v699
  %v701 = vand.u32 %v60, 4294901760
  %702 = vmatmul.f32.gmra.mxu0 %v701
  %v703 = vpop.f32.mrf.mxu0
  %v704 = vadd.f32 %v619, %v703
  %v705 = vand.u32 %v63, 4294901760
  %706 = vmatmul.f32.gmra.mxu0 %v705
  %v707 = vpop.f32.mrf.mxu0
  %v708 = vadd.f32 %v623, %v707
  %v709 = vand.u32 %v66, 4294901760
  %710 = vmatmul.f32.gmra.mxu0 %v709
  %v711 = vpop.f32.mrf.mxu0
  %v712 = vadd.f32 %v627, %v711
  %v713 = vand.u32 %v69, 4294901760
  %714 = vmatmul.f32.gmra.mxu0 %v713
  %v715 = vpop.f32.mrf.mxu0
  %v716 = vadd.f32 %v631, %v715
  %v717 = vand.u32 %v72, 4294901760
  %718 = vmatmul.f32.gmra.mxu0 %v717
  %v719 = vpop.f32.mrf.mxu0
  %v720 = vadd.f32 %v635, %v719
  %v721 = vand.u32 %v75, 4294901760
  %722 = vmatmul.f32.gmra.mxu0 %v721
  %v723 = vpop.f32.mrf.mxu0
  %v724 = vadd.f32 %v639, %v723
  %v725 = vand.u32 %v78, 4294901760
  %726 = vmatmul.f32.gmra.mxu0 %v725
  %v727 = vpop.f32.mrf.mxu0
  %v728 = vadd.f32 %v643, %v727
  %729 = vdwg.mxu0
  %vm730 = vcmask 64512
  %731 = vst.msk [vmem:[%s2] sm:$0xff] %vm730, %v668
  %732 = vst.msk [vmem:[%s2 + $0x8] sm:$0xff] %vm730, %v672
  %733 = vst.msk [vmem:[%s2 + $0x10] sm:$0xff] %vm730, %v676
  %734 = vst.msk [vmem:[%s2 + $0x18] sm:$0xff] %vm730, %v680
  %735 = vst.msk [vmem:[%s2 + $0x20] sm:$0xff] %vm730, %v684
  %736 = vst.msk [vmem:[%s2 + $0x28] sm:$0xff] %vm730, %v688
  %737 = vst.msk [vmem:[%s2 + $0x30] sm:$0xff] %vm730, %v692
  %738 = vst.msk [vmem:[%s2 + $0x38] sm:$0xff] %vm730, %v696
  %739 = vst.msk [vmem:[%s2 + $0x40] sm:$0xff] %vm730, %v700
  %740 = vst.msk [vmem:[%s2 + $0x48] sm:$0xff] %vm730, %v704
  %741 = vst.msk [vmem:[%s2 + $0x50] sm:$0xff] %vm730, %v708
  %742 = vst.msk [vmem:[%s2 + $0x58] sm:$0xff] %vm730, %v712
  %743 = vst.msk [vmem:[%s2 + $0x60] sm:$0xff] %vm730, %v716
  %744 = vst.msk [vmem:[%s2 + $0x68] sm:$0xff] %vm730, %v720
  %745 = vst.msk [vmem:[%s2 + $0x70] sm:$0xff] %vm730, %v724
  %746 = vst.msk [vmem:[%s2 + $0x78] sm:$0xff] %vm730, %v728
  // Predicated region
  $region10: #{forward.12} parent=0 // pred_check
    _
  $region11: #{forward.12} parent=0 // pred_check_branch
    %748 = sbr.rel (0) target = $region13
  $region12: #{forward.12} parent=0 // pred_region
    _
  $region13: #{forward.12} parent=0 // pred_fallthru
    _
  // Predicated region
  $region14: #{forward.12} parent=0 // pred_check
    _
  $region15: #{forward.12} parent=0 // pred_check_branch
    %750 = sbr.rel (0) target = $region17
  $region16: #{forward.12} parent=0 // pred_region
    _
  $region17: #{forward.12} parent=0 // pred_fallthru
    _

// kernel: forward.13
$region0: #{forward.13}
  #allocation0 [shape = 'u32[]', space=smem, size = 0x4, offset = 0x4, fixed_abs, tag = 'smem constant byte address 0x4 - core index']
  #allocation1 [shape = 'u32[72,128]{1,0:T(1,128)}', space=vmem, size = 0x9000, scoped, tag = 'internal scratch']
  %s0 = inlined_call_operand.vmem [shape: f32[32,32], index: 0, kind: input, shape index: {}]
  %s1 = inlined_call_operand.vmem [shape: f32[32,8], index: 1, kind: input, shape index: {}]
  %s2 = inlined_call_operand.hbm [shape: f32[32,8], index: 2, kind: output, shape index: {}]
  %s3 = sld [smem:[#allocation0]]
  $region18: #{forward.13} parent=0
    _
  %s5 = ssub.s32 1, %s3
  %s6 = scalar_select 0, %s5, %s3
  $region1: #{forward.13} parent=0
    #allocation2 [shape = 'u8[16384]{0}', space=vmem, size = 0x4000, scoped, tag = 'output window, operand 0, single buffered']
    #allocation3 [shape = 's32[1]{0}', space=sflag, size = 0x4, scoped, tag = 'scoped memory for forward.13']
    %7 = vsyncpa [#allocation3], 0
    // Predicated region
    $region2: #{forward.13} parent=1 // pred_check
      _
    $region3: #{forward.13} parent=1 // pred_check_branch
      %9 = sbr.rel (0) target = $region5
    $region4: #{forward.13} parent=1 // pred_region
      _
    $region5: #{forward.13} parent=1 // pred_fallthru
      _
    // Predicated region
    $region6: #{forward.13} parent=1 // pred_check
      _
    $region7: #{forward.13} parent=1 // pred_check_branch
      %11 = sbr.rel (0) target = $region9
    $region8: #{forward.13} parent=1 // pred_region
      _
    $region9: #{forward.13} parent=1 // pred_fallthru
      _
    %v12 = vld [vmem:[%s0] sm:$0xff]
    %v13 = vld [vmem:[%s0 + $0x8] sm:$0xff]
    %v14 = vld [vmem:[%s0 + $0x10] sm:$0xff]
    %v15 = vld [vmem:[%s0 + $0x18] sm:$0xff]
    %v16 = vld [vmem:[%s1] sm:$0xff]
    %v17 = vld [vmem:[%s1 + $0x8] sm:$0xff]
    %v18 = vld [vmem:[%s1 + $0x10] sm:$0xff]
    %v19 = vld [vmem:[%s1 + $0x18] sm:$0xff]
    %vm20 = vcmask 261120
    %v22 = vsel %vm20, %v12, 0
    %v25 = vsel %vm20, %v13, 0
    %v28 = vsel %vm20, %v14, 0
    %v31 = vsel %vm20, %v15, 0
    %33 = vmatpush.msra.mxu0 0.0
    %34 = vmatpush.msra.mxu0 0.0
    %35 = vmatpush.msra.mxu0 0.0
    %36 = vmatpush.msra.mxu0 0.0
    %37 = vmatpush.msra.mxu0 0.0
    %38 = vmatpush.msra.mxu0 0.0
    %39 = vmatpush.msra.mxu0 0.0
    %40 = vmatpush.msra.mxu0 0.0
    %41 = vmatpush.msra.mxu0 0.0
    %42 = vmatpush.msra.mxu0 0.0
    %43 = vmatpush.msra.mxu0 0.0
    %44 = vmatpush.msra.mxu0 0.0
    %v45 = vand.u32 %v19, 4294901760
    %46 = vmatpush.msra.mxu0 %v45
    %v47 = vand.u32 %v18, 4294901760
    %48 = vmatpush.msra.mxu0 %v47
    %v49 = vand.u32 %v17, 4294901760
    %50 = vmatpush.msra.mxu0 %v49
    %v51 = vand.u32 %v16, 4294901760
    %52 = vmatpush.msra.mxu0 %v51
    %v53 = vand.u32 %v22, 4294901760
    %v54 = vsub.f32 %v22, %v53
    %v55 = vand.u32 %v54, 4294901760
    %v56 = vsub.f32 %v54, %v55
    %v57 = vand.u32 %v56, 4294901760
    %58 = vmatmul.f32.gmra.mxu0 %v57
    %v59 = vpop.f32.mrf.mxu0
    %v60 = vadd.f32 0.0, %v59
    %v61 = vand.u32 %v25, 4294901760
    %v62 = vsub.f32 %v25, %v61
    %v63 = vand.u32 %v62, 4294901760
    %v64 = vsub.f32 %v62, %v63
    %v65 = vand.u32 %v64, 4294901760
    %66 = vmatmul.f32.gmra.mxu0 %v65
    %v67 = vpop.f32.mrf.mxu0
    %v68 = vadd.f32 0.0, %v67
    %v69 = vand.u32 %v28, 4294901760
    %v70 = vsub.f32 %v28, %v69
    %v71 = vand.u32 %v70, 4294901760
    %v72 = vsub.f32 %v70, %v71
    %v73 = vand.u32 %v72, 4294901760
    %74 = vmatmul.f32.gmra.mxu0 %v73
    %v75 = vpop.f32.mrf.mxu0
    %v76 = vadd.f32 0.0, %v75
    %v77 = vand.u32 %v31, 4294901760
    %v78 = vsub.f32 %v31, %v77
    %v79 = vand.u32 %v78, 4294901760
    %v80 = vsub.f32 %v78, %v79
    %v81 = vand.u32 %v80, 4294901760
    %82 = vmatmul.f32.gmra.mxu0 %v81
    %v83 = vpop.f32.mrf.mxu0
    %v84 = vadd.f32 0.0, %v83
    %85 = vdwg.mxu0
    %86 = vmatpush.msra.mxu0 0.0
    %87 = vmatpush.msra.mxu0 0.0
    %88 = vmatpush.msra.mxu0 0.0
    %89 = vmatpush.msra.mxu0 0.0
    %90 = vmatpush.msra.mxu0 0.0
    %91 = vmatpush.msra.mxu0 0.0
    %92 = vmatpush.msra.mxu0 0.0
    %93 = vmatpush.msra.mxu0 0.0
    %94 = vmatpush.msra.mxu0 0.0
    %95 = vmatpush.msra.mxu0 0.0
    %96 = vmatpush.msra.mxu0 0.0
    %97 = vmatpush.msra.mxu0 0.0
    %v98 = vand.u32 %v19, 4294901760
    %v99 = vsub.f32 %v19, %v98
    %v100 = vand.u32 %v99, 4294901760
    %v101 = vsub.f32 %v99, %v100
    %v102 = vand.u32 %v101, 4294901760
    %103 = vmatpush.msra.mxu0 %v102
    %v104 = vand.u32 %v18, 4294901760
    %v105 = vsub.f32 %v18, %v104
    %v106 = vand.u32 %v105, 4294901760
    %v107 = vsub.f32 %v105, %v106
    %v108 = vand.u32 %v107, 4294901760
    %109 = vmatpush.msra.mxu0 %v108
    %v110 = vand.u32 %v17, 4294901760
    %v111 = vsub.f32 %v17, %v110
    %v112 = vand.u32 %v111, 4294901760
    %v113 = vsub.f32 %v111, %v112
    %v114 = vand.u32 %v113, 4294901760
    %115 = vmatpush.msra.mxu0 %v114
    %v116 = vand.u32 %v16, 4294901760
    %v117 = vsub.f32 %v16, %v116
    %v118 = vand.u32 %v117, 4294901760
    %v119 = vsub.f32 %v117, %v118
    %v120 = vand.u32 %v119, 4294901760
    %121 = vmatpush.msra.mxu0 %v120
    %v122 = vand.u32 %v22, 4294901760
    %123 = vmatmul.f32.gmra.mxu0 %v122
    %v124 = vpop.f32.mrf.mxu0
    %v125 = vadd.f32 %v60, %v124
    %v126 = vand.u32 %v25, 4294901760
    %127 = vmatmul.f32.gmra.mxu0 %v126
    %v128 = vpop.f32.mrf.mxu0
    %v129 = vadd.f32 %v68, %v128
    %v130 = vand.u32 %v28, 4294901760
    %131 = vmatmul.f32.gmra.mxu0 %v130
    %v132 = vpop.f32.mrf.mxu0
    %v133 = vadd.f32 %v76, %v132
    %v134 = vand.u32 %v31, 4294901760
    %135 = vmatmul.f32.gmra.mxu0 %v134
    %v136 = vpop.f32.mrf.mxu0
    %v137 = vadd.f32 %v84, %v136
    %138 = vdwg.mxu0
    %139 = vmatpush.msra.mxu0 0.0
    %140 = vmatpush.msra.mxu0 0.0
    %141 = vmatpush.msra.mxu0 0.0
    %142 = vmatpush.msra.mxu0 0.0
    %143 = vmatpush.msra.mxu0 0.0
    %144 = vmatpush.msra.mxu0 0.0
    %145 = vmatpush.msra.mxu0 0.0
    %146 = vmatpush.msra.mxu0 0.0
    %147 = vmatpush.msra.mxu0 0.0
    %148 = vmatpush.msra.mxu0 0.0
    %149 = vmatpush.msra.mxu0 0.0
    %150 = vmatpush.msra.mxu0 0.0
    %v151 = vand.u32 %v19, 4294901760
    %v152 = vsub.f32 %v19, %v151
    %153 = vmatpush.msra.mxu0 %v152
    %v154 = vand.u32 %v18, 4294901760
    %v155 = vsub.f32 %v18, %v154
    %156 = vmatpush.msra.mxu0 %v155
    %v157 = vand.u32 %v17, 4294901760
    %v158 = vsub.f32 %v17, %v157
    %159 = vmatpush.msra.mxu0 %v158
    %v160 = vand.u32 %v16, 4294901760
    %v161 = vsub.f32 %v16, %v160
    %162 = vmatpush.msra.mxu0 %v161
    %v163 = vand.u32 %v22, 4294901760
    %v164 = vsub.f32 %v22, %v163
    %165 = vmatmul.f32.gmra.mxu0 %v164
    %v166 = vpop.f32.mrf.mxu0
    %v167 = vadd.f32 %v125, %v166
    %v168 = vand.u32 %v25, 4294901760
    %v169 = vsub.f32 %v25, %v168
    %170 = vmatmul.f32.gmra.mxu0 %v169
    %v171 = vpop.f32.mrf.mxu0
    %v172 = vadd.f32 %v129, %v171
    %v173 = vand.u32 %v28, 4294901760
    %v174 = vsub.f32 %v28, %v173
    %175 = vmatmul.f32.gmra.mxu0 %v174
    %v176 = vpop.f32.mrf.mxu0
    %v177 = vadd.f32 %v133, %v176
    %v178 = vand.u32 %v31, 4294901760
    %v179 = vsub.f32 %v31, %v178
    %180 = vmatmul.f32.gmra.mxu0 %v179
    %v181 = vpop.f32.mrf.mxu0
    %v182 = vadd.f32 %v137, %v181
    %183 = vdwg.mxu0
    %184 = vmatpush.msra.mxu0 0.0
    %185 = vmatpush.msra.mxu0 0.0
    %186 = vmatpush.msra.mxu0 0.0
    %187 = vmatpush.msra.mxu0 0.0
    %188 = vmatpush.msra.mxu0 0.0
    %189 = vmatpush.msra.mxu0 0.0
    %190 = vmatpush.msra.mxu0 0.0
    %191 = vmatpush.msra.mxu0 0.0
    %192 = vmatpush.msra.mxu0 0.0
    %193 = vmatpush.msra.mxu0 0.0
    %194 = vmatpush.msra.mxu0 0.0
    %195 = vmatpush.msra.mxu0 0.0
    %v196 = vand.u32 %v19, 4294901760
    %197 = vmatpush.msra.mxu0 %v196
    %v198 = vand.u32 %v18, 4294901760
    %199 = vmatpush.msra.mxu0 %v198
    %v200 = vand.u32 %v17, 4294901760
    %201 = vmatpush.msra.mxu0 %v200
    %v202 = vand.u32 %v16, 4294901760
    %203 = vmatpush.msra.mxu0 %v202
    %v204 = vand.u32 %v22, 4294901760
    %v205 = vsub.f32 %v22, %v204
    %v206 = vand.u32 %v205, 4294901760
    %207 = vmatmul.f32.gmra.mxu0 %v206
    %v208 = vpop.f32.mrf.mxu0
    %v209 = vadd.f32 %v167, %v208
    %v210 = vand.u32 %v25, 4294901760
    %v211 = vsub.f32 %v25, %v210
    %v212 = vand.u32 %v211, 4294901760
    %213 = vmatmul.f32.gmra.mxu0 %v212
    %v214 = vpop.f32.mrf.mxu0
    %v215 = vadd.f32 %v172, %v214
    %v216 = vand.u32 %v28, 4294901760
    %v217 = vsub.f32 %v28, %v216
    %v218 = vand.u32 %v217, 4294901760
    %219 = vmatmul.f32.gmra.mxu0 %v218
    %v220 = vpop.f32.mrf.mxu0
    %v221 = vadd.f32 %v177, %v220
    %v222 = vand.u32 %v31, 4294901760
    %v223 = vsub.f32 %v31, %v222
    %v224 = vand.u32 %v223, 4294901760
    %225 = vmatmul.f32.gmra.mxu0 %v224
    %v226 = vpop.f32.mrf.mxu0
    %v227 = vadd.f32 %v182, %v226
    %228 = vdwg.mxu0
    %229 = vmatpush.msra.mxu0 0.0
    %230 = vmatpush.msra.mxu0 0.0
    %231 = vmatpush.msra.mxu0 0.0
    %232 = vmatpush.msra.mxu0 0.0
    %233 = vmatpush.msra.mxu0 0.0
    %234 = vmatpush.msra.mxu0 0.0
    %235 = vmatpush.msra.mxu0 0.0
    %236 = vmatpush.msra.mxu0 0.0
    %237 = vmatpush.msra.mxu0 0.0
    %238 = vmatpush.msra.mxu0 0.0
    %239 = vmatpush.msra.mxu0 0.0
    %240 = vmatpush.msra.mxu0 0.0
    %v241 = vand.u32 %v19, 4294901760
    %v242 = vsub.f32 %v19, %v241
    %v243 = vand.u32 %v242, 4294901760
    %244 = vmatpush.msra.mxu0 %v243
    %v245 = vand.u32 %v18, 4294901760
    %v246 = vsub.f32 %v18, %v245
    %v247 = vand.u32 %v246, 4294901760
    %248 = vmatpush.msra.mxu0 %v247
    %v249 = vand.u32 %v17, 4294901760
    %v250 = vsub.f32 %v17, %v249
    %v251 = vand.u32 %v250, 4294901760
    %252 = vmatpush.msra.mxu0 %v251
    %v253 = vand.u32 %v16, 4294901760
    %v254 = vsub.f32 %v16, %v253
    %v255 = vand.u32 %v254, 4294901760
    %256 = vmatpush.msra.mxu0 %v255
    %v257 = vand.u32 %v22, 4294901760
    %258 = vmatmul.f32.gmra.mxu0 %v257
    %v259 = vpop.f32.mrf.mxu0
    %v260 = vadd.f32 %v209, %v259
    %v261 = vand.u32 %v25, 4294901760
    %262 = vmatmul.f32.gmra.mxu0 %v261
    %v263 = vpop.f32.mrf.mxu0
    %v264 = vadd.f32 %v215, %v263
    %v265 = vand.u32 %v28, 4294901760
    %266 = vmatmul.f32.gmra.mxu0 %v265
    %v267 = vpop.f32.mrf.mxu0
    %v268 = vadd.f32 %v221, %v267
    %v269 = vand.u32 %v31, 4294901760
    %270 = vmatmul.f32.gmra.mxu0 %v269
    %v271 = vpop.f32.mrf.mxu0
    %v272 = vadd.f32 %v227, %v271
    %273 = vdwg.mxu0
    %274 = vmatpush.msra.mxu0 0.0
    %275 = vmatpush.msra.mxu0 0.0
    %276 = vmatpush.msra.mxu0 0.0
    %277 = vmatpush.msra.mxu0 0.0
    %278 = vmatpush.msra.mxu0 0.0
    %279 = vmatpush.msra.mxu0 0.0
    %280 = vmatpush.msra.mxu0 0.0
    %281 = vmatpush.msra.mxu0 0.0
    %282 = vmatpush.msra.mxu0 0.0
    %283 = vmatpush.msra.mxu0 0.0
    %284 = vmatpush.msra.mxu0 0.0
    %285 = vmatpush.msra.mxu0 0.0
    %v286 = vand.u32 %v19, 4294901760
    %287 = vmatpush.msra.mxu0 %v286
    %v288 = vand.u32 %v18, 4294901760
    %289 = vmatpush.msra.mxu0 %v288
    %v290 = vand.u32 %v17, 4294901760
    %291 = vmatpush.msra.mxu0 %v290
    %v292 = vand.u32 %v16, 4294901760
    %293 = vmatpush.msra.mxu0 %v292
    %v294 = vand.u32 %v22, 4294901760
    %295 = vmatmul.f32.gmra.mxu0 %v294
    %v296 = vpop.f32.mrf.mxu0
    %v297 = vadd.f32 %v260, %v296
    %v298 = vand.u32 %v25, 4294901760
    %299 = vmatmul.f32.gmra.mxu0 %v298
    %v300 = vpop.f32.mrf.mxu0
    %v301 = vadd.f32 %v264, %v300
    %v302 = vand.u32 %v28, 4294901760
    %303 = vmatmul.f32.gmra.mxu0 %v302
    %v304 = vpop.f32.mrf.mxu0
    %v305 = vadd.f32 %v268, %v304
    %v306 = vand.u32 %v31, 4294901760
    %307 = vmatmul.f32.gmra.mxu0 %v306
    %v308 = vpop.f32.mrf.mxu0
    %v309 = vadd.f32 %v272, %v308
    %310 = vdwg.mxu0
    %vm311 = vcmask 64512
    %312 = vst.msk [vmem:[#allocation2] sm:$0xff] %vm311, %v297
    %313 = vst.msk [vmem:[#allocation2 + $0x8] sm:$0xff] %vm311, %v301
    %314 = vst.msk [vmem:[#allocation2 + $0x10] sm:$0xff] %vm311, %v305
    %315 = vst.msk [vmem:[#allocation2 + $0x18] sm:$0xff] %vm311, %v309
    // Predicated region
    $region10: #{forward.13} parent=1 // pred_check
      _
    $region11: #{forward.13} parent=1 // pred_check_branch
      %317 = sbr.rel (0) target = $region13
    $region12: #{forward.13} parent=1 // pred_region
      %319 = vsyncadd [#allocation3], 0
      %s320 = sshll.u32 [#allocation2], 4
      %s321 = int_to_ptr.vmem [resolvable:$true] %s320
      %s322 = sshll.u32 %s2, 4
      %s323 = int_to_ptr.hbm [resolvable:$true] %s322
      %328 = dma.vmem_to_hbm [thread:$0]  %s321, 512, %s323, [#allocation3], 128, 128, 8
    $region13: #{forward.13} parent=1 // pred_fallthru
      _
    // Predicated region
    $region14: #{forward.13} parent=1 // pred_check
      _
    $region15: #{forward.13} parent=1 // pred_check_branch
      %330 = sbr.rel (0) target = $region17
    $region16: #{forward.13} parent=1 // pred_region
      %332 = dma.done [#allocation3], 512
    $region17: #{forward.13} parent=1 // pred_fallthru
      _
    %333 = vsyncpa [#allocation3], 1

// kernel: forward.10
$region0: #{forward.10}
  #allocation0 [shape = 'u32[]', space=smem, size = 0x4, offset = 0x4, fixed_abs, tag = 'smem constant byte address 0x4 - core index']
  #allocation1 [shape = 'u32[72,128]{1,0:T(1,128)}', space=vmem, size = 0x9000, scoped, tag = 'internal scratch']
  %s0 = inlined_call_operand.vmem [shape: f32[10,8], index: 0, kind: input, shape index: {}]
  %s1 = inlined_call_operand.vmem [shape: f32[10,1], index: 1, kind: input, shape index: {}]
  %s2 = inlined_call_operand.vmem [shape: f32[12,10], index: 2, kind: input, shape index: {}]
  %s3 = inlined_call_operand.vmem [shape: f32[12,1], index: 3, kind: input, shape index: {}]
  %s4 = inlined_call_operand.vmem [shape: f32[14,12], index: 4, kind: input, shape index: {}]
  %s5 = inlined_call_operand.vmem [shape: f32[14,1], index: 5, kind: input, shape index: {}]
  %s6 = inlined_call_operand.vmem [shape: f32[16,14], index: 6, kind: input, shape index: {}]
  %s7 = inlined_call_operand.vmem [shape: f32[16,1], index: 7, kind: input, shape index: {}]
  %s8 = inlined_call_operand.vmem [shape: f32[8,64], index: 8, kind: input, shape index: {}]
  %s9 = inlined_call_operand.vmem [shape: f32[16,64], index: 9, kind: output, shape index: {}]
  %s10 = sld [smem:[#allocation0]]
  $region46: #{forward.10} parent=0
    _
  %s12 = ssub.s32 1, %s10
  %s13 = scalar_select 0, %s12, %s10
  // Predicated region
  $region2: #{forward.10} parent=0 // pred_check
    _
  $region3: #{forward.10} parent=0 // pred_check_branch
    %15 = sbr.rel (0) target = $region5
  $region4: #{forward.10} parent=0 // pred_region
    _
  $region5: #{forward.10} parent=0 // pred_fallthru
    _
  // Predicated region
  $region6: #{forward.10} parent=0 // pred_check
    _
  $region7: #{forward.10} parent=0 // pred_check_branch
    %17 = sbr.rel (0) target = $region9
  $region8: #{forward.10} parent=0 // pred_region
    _
  $region9: #{forward.10} parent=0 // pred_fallthru
    _
  // Predicated region
  $region10: #{forward.10} parent=0 // pred_check
    _
  $region11: #{forward.10} parent=0 // pred_check_branch
    %19 = sbr.rel (0) target = $region13
  $region12: #{forward.10} parent=0 // pred_region
    _
  $region13: #{forward.10} parent=0 // pred_fallthru
    _
  // Predicated region
  $region14: #{forward.10} parent=0 // pred_check
    _
  $region15: #{forward.10} parent=0 // pred_check_branch
    %21 = sbr.rel (0) target = $region17
  $region16: #{forward.10} parent=0 // pred_region
    _
  $region17: #{forward.10} parent=0 // pred_fallthru
    _
  // Predicated region
  $region18: #{forward.10} parent=0 // pred_check
    _
  $region19: #{forward.10} parent=0 // pred_check_branch
    %23 = sbr.rel (0) target = $region21
  $region20: #{forward.10} parent=0 // pred_region
    _
  $region21: #{forward.10} parent=0 // pred_fallthru
    _
  // Predicated region
  $region22: #{forward.10} parent=0 // pred_check
    _
  $region23: #{forward.10} parent=0 // pred_check_branch
    %25 = sbr.rel (0) target = $region25
  $region24: #{forward.10} parent=0 // pred_region
    _
  $region25: #{forward.10} parent=0 // pred_fallthru
    _
  // Predicated region
  $region26: #{forward.10} parent=0 // pred_check
    _
  $region27: #{forward.10} parent=0 // pred_check_branch
    %27 = sbr.rel (0) target = $region29
  $region28: #{forward.10} parent=0 // pred_region
    _
  $region29: #{forward.10} parent=0 // pred_fallthru
    _
  // Predicated region
  $region30: #{forward.10} parent=0 // pred_check
    _
  $region31: #{forward.10} parent=0 // pred_check_branch
    %29 = sbr.rel (0) target = $region33
  $region32: #{forward.10} parent=0 // pred_region
    _
  $region33: #{forward.10} parent=0 // pred_fallthru
    _
  // Predicated region
  $region34: #{forward.10} parent=0 // pred_check
    _
  $region35: #{forward.10} parent=0 // pred_check_branch
    %31 = sbr.rel (0) target = $region37
  $region36: #{forward.10} parent=0 // pred_region
    _
  $region37: #{forward.10} parent=0 // pred_fallthru
    _
  %v32 = vld [vmem:[%s8] sm:$0xff]
  %v33 = vld [vmem:[%s0] sm:$0xff]
  %v34 = vld [vmem:[%s0 + $0x8] sm:$0x3]
  %v35 = vld [vmem:[%s1] sm:$0xff]
  %v36 = vld [vmem:[%s1 + $0x8] sm:$0x3]
  %38 = vset.pattern.permute.xlu0 0
  %39 = vperm.xlu0 %38, %v35
  %v40 = vpop.permute.xlu0 %39
  %43 = vset.pattern.permute.xlu0 0
  %44 = vperm.xlu0 %43, %v36
  %v45 = vpop.permute.xlu0 %44
  %vm47 = vcmask 64512
  %v49 = vsel %vm47, %v33, 0
  %v52 = vsel %vm47, %v34, 0
  %54 = vmatpush.msra.mxu0 0.0
  %55 = vmatpush.msra.mxu0 0.0
  %56 = vmatpush.msra.mxu0 0.0
  %57 = vmatpush.msra.mxu0 0.0
  %58 = vmatpush.msra.mxu0 0.0
  %59 = vmatpush.msra.mxu0 0.0
  %60 = vmatpush.msra.mxu0 0.0
  %61 = vmatpush.msra.mxu0 0.0
  %62 = vmatpush.msra.mxu0 0.0
  %63 = vmatpush.msra.mxu0 0.0
  %64 = vmatpush.msra.mxu0 0.0
  %65 = vmatpush.msra.mxu0 0.0
  %66 = vmatpush.msra.mxu0 0.0
  %67 = vmatpush.msra.mxu0 0.0
  %68 = vmatpush.msra.mxu0 0.0
  %v69 = vand.u32 %v32, 4294901760
  %70 = vmatpush.msra.mxu0 %v69
  %v71 = vand.u32 %v49, 4294901760
  %v72 = vsub.f32 %v49, %v71
  %v73 = vand.u32 %v72, 4294901760
  %v74 = vsub.f32 %v72, %v73
  %v75 = vand.u32 %v74, 4294901760
  %76 = vmatmul.f32.gmra.mxu0 %v75
  %v77 = vpop.f32.mrf.mxu0
  %v78 = vadd.f32 %v40, %v77
  %v79 = vand.u32 %v52, 4294901760
  %v80 = vsub.f32 %v52, %v79
  %v81 = vand.u32 %v80, 4294901760
  %v82 = vsub.f32 %v80, %v81
  %v83 = vand.u32 %v82, 4294901760
  %84 = vmatmul.f32.gmra.mxu0 %v83
  %v85 = vpop.f32.mrf.mxu0
  %v86 = vadd.f32 %v45, %v85
  %87 = vdwg.mxu0
  %88 = vmatpush.msra.mxu0 0.0
  %89 = vmatpush.msra.mxu0 0.0
  %90 = vmatpush.msra.mxu0 0.0
  %91 = vmatpush.msra.mxu0 0.0
  %92 = vmatpush.msra.mxu0 0.0
  %93 = vmatpush.msra.mxu0 0.0
  %94 = vmatpush.msra.mxu0 0.0
  %95 = vmatpush.msra.mxu0 0.0
  %96 = vmatpush.msra.mxu0 0.0
  %97 = vmatpush.msra.mxu0 0.0
  %98 = vmatpush.msra.mxu0 0.0
  %99 = vmatpush.msra.mxu0 0.0
  %100 = vmatpush.msra.mxu0 0.0
  %101 = vmatpush.msra.mxu0 0.0
  %102 = vmatpush.msra.mxu0 0.0
  %v103 = vand.u32 %v32, 4294901760
  %v104 = vsub.f32 %v32, %v103
  %v105 = vand.u32 %v104, 4294901760
  %v106 = vsub.f32 %v104, %v105
  %v107 = vand.u32 %v106, 4294901760
  %108 = vmatpush.msra.mxu0 %v107
  %v109 = vand.u32 %v49, 4294901760
  %110 = vmatmul.f32.gmra.mxu0 %v109
  %v111 = vpop.f32.mrf.mxu0
  %v112 = vadd.f32 %v78, %v111
  %v113 = vand.u32 %v52, 4294901760
  %114 = vmatmul.f32.gmra.mxu0 %v113
  %v115 = vpop.f32.mrf.mxu0
  %v116 = vadd.f32 %v86, %v115
  %117 = vdwg.mxu0
  %118 = vmatpush.msra.mxu0 0.0
  %119 = vmatpush.msra.mxu0 0.0
  %120 = vmatpush.msra.mxu0 0.0
  %121 = vmatpush.msra.mxu0 0.0
  %122 = vmatpush.msra.mxu0 0.0
  %123 = vmatpush.msra.mxu0 0.0
  %124 = vmatpush.msra.mxu0 0.0
  %125 = vmatpush.msra.mxu0 0.0
  %126 = vmatpush.msra.mxu0 0.0
  %127 = vmatpush.msra.mxu0 0.0
  %128 = vmatpush.msra.mxu0 0.0
  %129 = vmatpush.msra.mxu0 0.0
  %130 = vmatpush.msra.mxu0 0.0
  %131 = vmatpush.msra.mxu0 0.0
  %132 = vmatpush.msra.mxu0 0.0
  %v133 = vand.u32 %v32, 4294901760
  %v134 = vsub.f32 %v32, %v133
  %135 = vmatpush.msra.mxu0 %v134
  %v136 = vand.u32 %v49, 4294901760
  %v137 = vsub.f32 %v49, %v136
  %138 = vmatmul.f32.gmra.mxu0 %v137
  %v139 = vpop.f32.mrf.mxu0
  %v140 = vadd.f32 %v112, %v139
  %v141 = vand.u32 %v52, 4294901760
  %v142 = vsub.f32 %v52, %v141
  %143 = vmatmul.f32.gmra.mxu0 %v142
  %v144 = vpop.f32.mrf.mxu0
  %v145 = vadd.f32 %v116, %v144
  %146 = vdwg.mxu0
  %147 = vmatpush.msra.mxu0 0.0
  %148 = vmatpush.msra.mxu0 0.0
  %149 = vmatpush.msra.mxu0 0.0
  %150 = vmatpush.msra.mxu0 0.0
  %151 = vmatpush.msra.mxu0 0.0
  %152 = vmatpush.msra.mxu0 0.0
  %153 = vmatpush.msra.mxu0 0.0
  %154 = vmatpush.msra.mxu0 0.0
  %155 = vmatpush.msra.mxu0 0.0
  %156 = vmatpush.msra.mxu0 0.0
  %157 = vmatpush.msra.mxu0 0.0
  %158 = vmatpush.msra.mxu0 0.0
  %159 = vmatpush.msra.mxu0 0.0
  %160 = vmatpush.msra.mxu0 0.0
  %161 = vmatpush.msra.mxu0 0.0
  %v162 = vand.u32 %v32, 4294901760
  %163 = vmatpush.msra.mxu0 %v162
  %v164 = vand.u32 %v49, 4294901760
  %v165 = vsub.f32 %v49, %v164
  %v166 = vand.u32 %v165, 4294901760
  %167 = vmatmul.f32.gmra.mxu0 %v166
  %v168 = vpop.f32.mrf.mxu0
  %v169 = vadd.f32 %v140, %v168
  %v170 = vand.u32 %v52, 4294901760
  %v171 = vsub.f32 %v52, %v170
  %v172 = vand.u32 %v171, 4294901760
  %173 = vmatmul.f32.gmra.mxu0 %v172
  %v174 = vpop.f32.mrf.mxu0
  %v175 = vadd.f32 %v145, %v174
  %176 = vdwg.mxu0
  %177 = vmatpush.msra.mxu0 0.0
  %178 = vmatpush.msra.mxu0 0.0
  %179 = vmatpush.msra.mxu0 0.0
  %180 = vmatpush.msra.mxu0 0.0
  %181 = vmatpush.msra.mxu0 0.0
  %182 = vmatpush.msra.mxu0 0.0
  %183 = vmatpush.msra.mxu0 0.0
  %184 = vmatpush.msra.mxu0 0.0
  %185 = vmatpush.msra.mxu0 0.0
  %186 = vmatpush.msra.mxu0 0.0
  %187 = vmatpush.msra.mxu0 0.0
  %188 = vmatpush.msra.mxu0 0.0
  %189 = vmatpush.msra.mxu0 0.0
  %190 = vmatpush.msra.mxu0 0.0
  %191 = vmatpush.msra.mxu0 0.0
  %v192 = vand.u32 %v32, 4294901760
  %v193 = vsub.f32 %v32, %v192
  %v194 = vand.u32 %v193, 4294901760
  %195 = vmatpush.msra.mxu0 %v194
  %v196 = vand.u32 %v49, 4294901760
  %197 = vmatmul.f32.gmra.mxu0 %v196
  %v198 = vpop.f32.mrf.mxu0
  %v199 = vadd.f32 %v169, %v198
  %v200 = vand.u32 %v52, 4294901760
  %201 = vmatmul.f32.gmra.mxu0 %v200
  %v202 = vpop.f32.mrf.mxu0
  %v203 = vadd.f32 %v175, %v202
  %204 = vdwg.mxu0
  %205 = vmatpush.msra.mxu0 0.0
  %206 = vmatpush.msra.mxu0 0.0
  %207 = vmatpush.msra.mxu0 0.0
  %208 = vmatpush.msra.mxu0 0.0
  %209 = vmatpush.msra.mxu0 0.0
  %210 = vmatpush.msra.mxu0 0.0
  %211 = vmatpush.msra.mxu0 0.0
  %212 = vmatpush.msra.mxu0 0.0
  %213 = vmatpush.msra.mxu0 0.0
  %214 = vmatpush.msra.mxu0 0.0
  %215 = vmatpush.msra.mxu0 0.0
  %216 = vmatpush.msra.mxu0 0.0
  %217 = vmatpush.msra.mxu0 0.0
  %218 = vmatpush.msra.mxu0 0.0
  %219 = vmatpush.msra.mxu0 0.0
  %v220 = vand.u32 %v32, 4294901760
  %221 = vmatpush.msra.mxu0 %v220
  %v222 = vand.u32 %v49, 4294901760
  %223 = vmatmul.f32.gmra.mxu0 %v222
  %v224 = vpop.f32.mrf.mxu0
  %v225 = vadd.f32 %v199, %v224
  %v226 = vand.u32 %v52, 4294901760
  %227 = vmatmul.f32.gmra.mxu0 %v226
  %v228 = vpop.f32.mrf.mxu0
  %v229 = vadd.f32 %v203, %v228
  %230 = vdwg.mxu0
  %vm231 = vcmp.ge.f32.partialorder %v225, 0.0
  %vm232 = vcmp.ge.f32.partialorder %v229, 0.0
  %v233 = vmul.f32 %v225, 0.01
  %v234 = vmul.f32 %v229, 0.01
  %v235 = vsel %vm231, %v225, %v233
  %v236 = vsel %vm232, %v229, %v234
  %v237 = vld [vmem:[%s2] sm:$0xff]
  %v238 = vld [vmem:[%s2 + $0x8] sm:$0xf]
  %v239 = vld [vmem:[%s3] sm:$0xff]
  %v240 = vld [vmem:[%s3 + $0x8] sm:$0xf]
  %242 = vset.pattern.permute.xlu0 0
  %243 = vperm.xlu0 %242, %v239
  %v244 = vpop.permute.xlu0 %243
  %247 = vset.pattern.permute.xlu0 0
  %248 = vperm.xlu0 %247, %v240
  %v249 = vpop.permute.xlu0 %248
  %vm251 = vcmask 80896
  %v253 = vsel %vm251, %v237, 0
  %v256 = vsel %vm251, %v238, 0
  %vm258 = vcmask 1041408
  %v260 = vsel %vm258, %v236, 0
  %262 = vmatpush.msra.mxu0 0.0
  %263 = vmatpush.msra.mxu0 0.0
  %264 = vmatpush.msra.mxu0 0.0
  %265 = vmatpush.msra.mxu0 0.0
  %266 = vmatpush.msra.mxu0 0.0
  %267 = vmatpush.msra.mxu0 0.0
  %268 = vmatpush.msra.mxu0 0.0
  %269 = vmatpush.msra.mxu0 0.0
  %270 = vmatpush.msra.mxu0 0.0
  %271 = vmatpush.msra.mxu0 0.0
  %272 = vmatpush.msra.mxu0 0.0
  %273 = vmatpush.msra.mxu0 0.0
  %274 = vmatpush.msra.mxu0 0.0
  %275 = vmatpush.msra.mxu0 0.0
  %v276 = vand.u32 %v260, 4294901760
  %277 = vmatpush.msra.mxu0 %v276
  %v278 = vand.u32 %v235, 4294901760
  %279 = vmatpush.msra.mxu0 %v278
  %v280 = vand.u32 %v253, 4294901760
  %v281 = vsub.f32 %v253, %v280
  %v282 = vand.u32 %v281, 4294901760
  %v283 = vsub.f32 %v281, %v282
  %v284 = vand.u32 %v283, 4294901760
  %285 = vmatmul.f32.gmra.mxu0 %v284
  %v286 = vpop.f32.mrf.mxu0
  %v287 = vadd.f32 %v244, %v286
  %v288 = vand.u32 %v256, 4294901760
  %v289 = vsub.f32 %v256, %v288
  %v290 = vand.u32 %v289, 4294901760
  %v291 = vsub.f32 %v289, %v290
  %v292 = vand.u32 %v291, 4294901760
  %293 = vmatmul.f32.gmra.mxu0 %v292
  %v294 = vpop.f32.mrf.mxu0
  %v295 = vadd.f32 %v249, %v294
  %296 = vdwg.mxu0
  %297 = vmatpush.msra.mxu0 0.0
  %298 = vmatpush.msra.mxu0 0.0
  %299 = vmatpush.msra.mxu0 0.0
  %300 = vmatpush.msra.mxu0 0.0
  %301 = vmatpush.msra.mxu0 0.0
  %302 = vmatpush.msra.mxu0 0.0
  %303 = vmatpush.msra.mxu0 0.0
  %304 = vmatpush.msra.mxu0 0.0
  %305 = vmatpush.msra.mxu0 0.0
  %306 = vmatpush.msra.mxu0 0.0
  %307 = vmatpush.msra.mxu0 0.0
  %308 = vmatpush.msra.mxu0 0.0
  %309 = vmatpush.msra.mxu0 0.0
  %310 = vmatpush.msra.mxu0 0.0
  %v311 = vand.u32 %v260, 4294901760
  %v312 = vsub.f32 %v260, %v311
  %v313 = vand.u32 %v312, 4294901760
  %v314 = vsub.f32 %v312, %v313
  %v315 = vand.u32 %v314, 4294901760
  %316 = vmatpush.msra.mxu0 %v315
  %v317 = vand.u32 %v235, 4294901760
  %v318 = vsub.f32 %v235, %v317
  %v319 = vand.u32 %v318, 4294901760
  %v320 = vsub.f32 %v318, %v319
  %v321 = vand.u32 %v320, 4294901760
  %322 = vmatpush.msra.mxu0 %v321
  %v323 = vand.u32 %v253, 4294901760
  %324 = vmatmul.f32.gmra.mxu0 %v323
  %v325 = vpop.f32.mrf.mxu0
  %v326 = vadd.f32 %v287, %v325
  %v327 = vand.u32 %v256, 4294901760
  %328 = vmatmul.f32.gmra.mxu0 %v327
  %v329 = vpop.f32.mrf.mxu0
  %v330 = vadd.f32 %v295, %v329
  %331 = vdwg.mxu0
  %332 = vmatpush.msra.mxu0 0.0
  %333 = vmatpush.msra.mxu0 0.0
  %334 = vmatpush.msra.mxu0 0.0
  %335 = vmatpush.msra.mxu0 0.0
  %336 = vmatpush.msra.mxu0 0.0
  %337 = vmatpush.msra.mxu0 0.0
  %338 = vmatpush.msra.mxu0 0.0
  %339 = vmatpush.msra.mxu0 0.0
  %340 = vmatpush.msra.mxu0 0.0
  %341 = vmatpush.msra.mxu0 0.0
  %342 = vmatpush.msra.mxu0 0.0
  %343 = vmatpush.msra.mxu0 0.0
  %344 = vmatpush.msra.mxu0 0.0
  %345 = vmatpush.msra.mxu0 0.0
  %v346 = vand.u32 %v260, 4294901760
  %v347 = vsub.f32 %v260, %v346
  %348 = vmatpush.msra.mxu0 %v347
  %v349 = vand.u32 %v235, 4294901760
  %v350 = vsub.f32 %v235, %v349
  %351 = vmatpush.msra.mxu0 %v350
  %v352 = vand.u32 %v253, 4294901760
  %v353 = vsub.f32 %v253, %v352
  %354 = vmatmul.f32.gmra.mxu0 %v353
  %v355 = vpop.f32.mrf.mxu0
  %v356 = vadd.f32 %v326, %v355
  %v357 = vand.u32 %v256, 4294901760
  %v358 = vsub.f32 %v256, %v357
  %359 = vmatmul.f32.gmra.mxu0 %v358
  %v360 = vpop.f32.mrf.mxu0
  %v361 = vadd.f32 %v330, %v360
  %362 = vdwg.mxu0
  %363 = vmatpush.msra.mxu0 0.0
  %364 = vmatpush.msra.mxu0 0.0
  %365 = vmatpush.msra.mxu0 0.0
  %366 = vmatpush.msra.mxu0 0.0
  %367 = vmatpush.msra.mxu0 0.0
  %368 = vmatpush.msra.mxu0 0.0
  %369 = vmatpush.msra.mxu0 0.0
  %370 = vmatpush.msra.mxu0 0.0
  %371 = vmatpush.msra.mxu0 0.0
  %372 = vmatpush.msra.mxu0 0.0
  %373 = vmatpush.msra.mxu0 0.0
  %374 = vmatpush.msra.mxu0 0.0
  %375 = vmatpush.msra.mxu0 0.0
  %376 = vmatpush.msra.mxu0 0.0
  %v377 = vand.u32 %v260, 4294901760
  %378 = vmatpush.msra.mxu0 %v377
  %v379 = vand.u32 %v235, 4294901760
  %380 = vmatpush.msra.mxu0 %v379
  %v381 = vand.u32 %v253, 4294901760
  %v382 = vsub.f32 %v253, %v381
  %v383 = vand.u32 %v382, 4294901760
  %384 = vmatmul.f32.gmra.mxu0 %v383
  %v385 = vpop.f32.mrf.mxu0
  %v386 = vadd.f32 %v356, %v385
  %v387 = vand.u32 %v256, 4294901760
  %v388 = vsub.f32 %v256, %v387
  %v389 = vand.u32 %v388, 4294901760
  %390 = vmatmul.f32.gmra.mxu0 %v389
  %v391 = vpop.f32.mrf.mxu0
  %v392 = vadd.f32 %v361, %v391
  %393 = vdwg.mxu0
  %394 = vmatpush.msra.mxu0 0.0
  %395 = vmatpush.msra.mxu0 0.0
  %396 = vmatpush.msra.mxu0 0.0
  %397 = vmatpush.msra.mxu0 0.0
  %398 = vmatpush.msra.mxu0 0.0
  %399 = vmatpush.msra.mxu0 0.0
  %400 = vmatpush.msra.mxu0 0.0
  %401 = vmatpush.msra.mxu0 0.0
  %402 = vmatpush.msra.mxu0 0.0
  %403 = vmatpush.msra.mxu0 0.0
  %404 = vmatpush.msra.mxu0 0.0
  %405 = vmatpush.msra.mxu0 0.0
  %406 = vmatpush.msra.mxu0 0.0
  %407 = vmatpush.msra.mxu0 0.0
  %v408 = vand.u32 %v260, 4294901760
  %v409 = vsub.f32 %v260, %v408
  %v410 = vand.u32 %v409, 4294901760
  %411 = vmatpush.msra.mxu0 %v410
  %v412 = vand.u32 %v235, 4294901760
  %v413 = vsub.f32 %v235, %v412
  %v414 = vand.u32 %v413, 4294901760
  %415 = vmatpush.msra.mxu0 %v414
  %v416 = vand.u32 %v253, 4294901760
  %417 = vmatmul.f32.gmra.mxu0 %v416
  %v418 = vpop.f32.mrf.mxu0
  %v419 = vadd.f32 %v386, %v418
  %v420 = vand.u32 %v256, 4294901760
  %421 = vmatmul.f32.gmra.mxu0 %v420
  %v422 = vpop.f32.mrf.mxu0
  %v423 = vadd.f32 %v392, %v422
  %424 = vdwg.mxu0
  %425 = vmatpush.msra.mxu0 0.0
  %426 = vmatpush.msra.mxu0 0.0
  %427 = vmatpush.msra.mxu0 0.0
  %428 = vmatpush.msra.mxu0 0.0
  %429 = vmatpush.msra.mxu0 0.0
  %430 = vmatpush.msra.mxu0 0.0
  %431 = vmatpush.msra.mxu0 0.0
  %432 = vmatpush.msra.mxu0 0.0
  %433 = vmatpush.msra.mxu0 0.0
  %434 = vmatpush.msra.mxu0 0.0
  %435 = vmatpush.msra.mxu0 0.0
  %436 = vmatpush.msra.mxu0 0.0
  %437 = vmatpush.msra.mxu0 0.0
  %438 = vmatpush.msra.mxu0 0.0
  %v439 = vand.u32 %v260, 4294901760
  %440 = vmatpush.msra.mxu0 %v439
  %v441 = vand.u32 %v235, 4294901760
  %442 = vmatpush.msra.mxu0 %v441
  %v443 = vand.u32 %v253, 4294901760
  %444 = vmatmul.f32.gmra.mxu0 %v443
  %v445 = vpop.f32.mrf.mxu0
  %v446 = vadd.f32 %v419, %v445
  %v447 = vand.u32 %v256, 4294901760
  %448 = vmatmul.f32.gmra.mxu0 %v447
  %v449 = vpop.f32.mrf.mxu0
  %v450 = vadd.f32 %v423, %v449
  %451 = vdwg.mxu0
  %vm452 = vcmp.ge.f32.partialorder %v446, 0.0
  %vm453 = vcmp.ge.f32.partialorder %v450, 0.0
  %v454 = vmul.f32 %v446, 0.01
  %v455 = vmul.f32 %v450, 0.01
  %v456 = vsel %vm452, %v446, %v454
  %v457 = vsel %vm453, %v450, %v455
  %v458 = vld [vmem:[%s4] sm:$0xff]
  %v459 = vld [vmem:[%s4 + $0x8] sm:$0x3f]
  %v460 = vld [vmem:[%s5] sm:$0xff]
  %v461 = vld [vmem:[%s5 + $0x8] sm:$0x3f]
  %463 = vset.pattern.permute.xlu0 0
  %464 = vperm.xlu0 %463, %v460
  %v465 = vpop.permute.xlu0 %464
  %468 = vset.pattern.permute.xlu0 0
  %469 = vperm.xlu0 %468, %v461
  %v470 = vpop.permute.xlu0 %469
  %vm472 = vcmask 97280
  %v474 = vsel %vm472, %v458, 0
  %v477 = vsel %vm472, %v459, 0
  %vm479 = vcmask 1043456
  %v481 = vsel %vm479, %v457, 0
  %483 = vmatpush.msra.mxu0 0.0
  %484 = vmatpush.msra.mxu0 0.0
  %485 = vmatpush.msra.mxu0 0.0
  %486 = vmatpush.msra.mxu0 0.0
  %487 = vmatpush.msra.mxu0 0.0
  %488 = vmatpush.msra.mxu0 0.0
  %489 = vmatpush.msra.mxu0 0.0
  %490 = vmatpush.msra.mxu0 0.0
  %491 = vmatpush.msra.mxu0 0.0
  %492 = vmatpush.msra.mxu0 0.0
  %493 = vmatpush.msra.mxu0 0.0
  %494 = vmatpush.msra.mxu0 0.0
  %495 = vmatpush.msra.mxu0 0.0
  %496 = vmatpush.msra.mxu0 0.0
  %v497 = vand.u32 %v481, 4294901760
  %498 = vmatpush.msra.mxu0 %v497
  %v499 = vand.u32 %v456, 4294901760
  %500 = vmatpush.msra.mxu0 %v499
  %v501 = vand.u32 %v474, 4294901760
  %v502 = vsub.f32 %v474, %v501
  %v503 = vand.u32 %v502, 4294901760
  %v504 = vsub.f32 %v502, %v503
  %v505 = vand.u32 %v504, 4294901760
  %506 = vmatmul.f32.gmra.mxu0 %v505
  %v507 = vpop.f32.mrf.mxu0
  %v508 = vadd.f32 %v465, %v507
  %v509 = vand.u32 %v477, 4294901760
  %v510 = vsub.f32 %v477, %v509
  %v511 = vand.u32 %v510, 4294901760
  %v512 = vsub.f32 %v510, %v511
  %v513 = vand.u32 %v512, 4294901760
  %514 = vmatmul.f32.gmra.mxu0 %v513
  %v515 = vpop.f32.mrf.mxu0
  %v516 = vadd.f32 %v470, %v515
  %517 = vdwg.mxu0
  %518 = vmatpush.msra.mxu0 0.0
  %519 = vmatpush.msra.mxu0 0.0
  %520 = vmatpush.msra.mxu0 0.0
  %521 = vmatpush.msra.mxu0 0.0
  %522 = vmatpush.msra.mxu0 0.0
  %523 = vmatpush.msra.mxu0 0.0
  %524 = vmatpush.msra.mxu0 0.0
  %525 = vmatpush.msra.mxu0 0.0
  %526 = vmatpush.msra.mxu0 0.0
  %527 = vmatpush.msra.mxu0 0.0
  %528 = vmatpush.msra.mxu0 0.0
  %529 = vmatpush.msra.mxu0 0.0
  %530 = vmatpush.msra.mxu0 0.0
  %531 = vmatpush.msra.mxu0 0.0
  %v532 = vand.u32 %v481, 4294901760
  %v533 = vsub.f32 %v481, %v532
  %v534 = vand.u32 %v533, 4294901760
  %v535 = vsub.f32 %v533, %v534
  %v536 = vand.u32 %v535, 4294901760
  %537 = vmatpush.msra.mxu0 %v536
  %v538 = vand.u32 %v456, 4294901760
  %v539 = vsub.f32 %v456, %v538
  %v540 = vand.u32 %v539, 4294901760
  %v541 = vsub.f32 %v539, %v540
  %v542 = vand.u32 %v541, 4294901760
  %543 = vmatpush.msra.mxu0 %v542
  %v544 = vand.u32 %v474, 4294901760
  %545 = vmatmul.f32.gmra.mxu0 %v544
  %v546 = vpop.f32.mrf.mxu0
  %v547 = vadd.f32 %v508, %v546
  %v548 = vand.u32 %v477, 4294901760
  %549 = vmatmul.f32.gmra.mxu0 %v548
  %v550 = vpop.f32.mrf.mxu0
  %v551 = vadd.f32 %v516, %v550
  %552 = vdwg.mxu0
  %553 = vmatpush.msra.mxu0 0.0
  %554 = vmatpush.msra.mxu0 0.0
  %555 = vmatpush.msra.mxu0 0.0
  %556 = vmatpush.msra.mxu0 0.0
  %557 = vmatpush.msra.mxu0 0.0
  %558 = vmatpush.msra.mxu0 0.0
  %559 = vmatpush.msra.mxu0 0.0
  %560 = vmatpush.msra.mxu0 0.0
  %561 = vmatpush.msra.mxu0 0.0
  %562 = vmatpush.msra.mxu0 0.0
  %563 = vmatpush.msra.mxu0 0.0
  %564 = vmatpush.msra.mxu0 0.0
  %565 = vmatpush.msra.mxu0 0.0
  %566 = vmatpush.msra.mxu0 0.0
  %v567 = vand.u32 %v481, 4294901760
  %v568 = vsub.f32 %v481, %v567
  %569 = vmatpush.msra.mxu0 %v568
  %v570 = vand.u32 %v456, 4294901760
  %v571 = vsub.f32 %v456, %v570
  %572 = vmatpush.msra.mxu0 %v571
  %v573 = vand.u32 %v474, 4294901760
  %v574 = vsub.f32 %v474, %v573
  %575 = vmatmul.f32.gmra.mxu0 %v574
  %v576 = vpop.f32.mrf.mxu0
  %v577 = vadd.f32 %v547, %v576
  %v578 = vand.u32 %v477, 4294901760
  %v579 = vsub.f32 %v477, %v578
  %580 = vmatmul.f32.gmra.mxu0 %v579
  %v581 = vpop.f32.mrf.mxu0
  %v582 = vadd.f32 %v551, %v581
  %583 = vdwg.mxu0
  %584 = vmatpush.msra.mxu0 0.0
  %585 = vmatpush.msra.mxu0 0.0
  %586 = vmatpush.msra.mxu0 0.0
  %587 = vmatpush.msra.mxu0 0.0
  %588 = vmatpush.msra.mxu0 0.0
  %589 = vmatpush.msra.mxu0 0.0
  %590 = vmatpush.msra.mxu0 0.0
  %591 = vmatpush.msra.mxu0 0.0
  %592 = vmatpush.msra.mxu0 0.0
  %593 = vmatpush.msra.mxu0 0.0
  %594 = vmatpush.msra.mxu0 0.0
  %595 = vmatpush.msra.mxu0 0.0
  %596 = vmatpush.msra.mxu0 0.0
  %597 = vmatpush.msra.mxu0 0.0
  %v598 = vand.u32 %v481, 4294901760
  %599 = vmatpush.msra.mxu0 %v598
  %v600 = vand.u32 %v456, 4294901760
  %601 = vmatpush.msra.mxu0 %v600
  %v602 = vand.u32 %v474, 4294901760
  %v603 = vsub.f32 %v474, %v602
  %v604 = vand.u32 %v603, 4294901760
  %605 = vmatmul.f32.gmra.mxu0 %v604
  %v606 = vpop.f32.mrf.mxu0
  %v607 = vadd.f32 %v577, %v606
  %v608 = vand.u32 %v477, 4294901760
  %v609 = vsub.f32 %v477, %v608
  %v610 = vand.u32 %v609, 4294901760
  %611 = vmatmul.f32.gmra.mxu0 %v610
  %v612 = vpop.f32.mrf.mxu0
  %v613 = vadd.f32 %v582, %v612
  %614 = vdwg.mxu0
  %615 = vmatpush.msra.mxu0 0.0
  %616 = vmatpush.msra.mxu0 0.0
  %617 = vmatpush.msra.mxu0 0.0
  %618 = vmatpush.msra.mxu0 0.0
  %619 = vmatpush.msra.mxu0 0.0
  %620 = vmatpush.msra.mxu0 0.0
  %621 = vmatpush.msra.mxu0 0.0
  %622 = vmatpush.msra.mxu0 0.0
  %623 = vmatpush.msra.mxu0 0.0
  %624 = vmatpush.msra.mxu0 0.0
  %625 = vmatpush.msra.mxu0 0.0
  %626 = vmatpush.msra.mxu0 0.0
  %627 = vmatpush.msra.mxu0 0.0
  %628 = vmatpush.msra.mxu0 0.0
  %v629 = vand.u32 %v481, 4294901760
  %v630 = vsub.f32 %v481, %v629
  %v631 = vand.u32 %v630, 4294901760
  %632 = vmatpush.msra.mxu0 %v631
  %v633 = vand.u32 %v456, 4294901760
  %v634 = vsub.f32 %v456, %v633
  %v635 = vand.u32 %v634, 4294901760
  %636 = vmatpush.msra.mxu0 %v635
  %v637 = vand.u32 %v474, 4294901760
  %638 = vmatmul.f32.gmra.mxu0 %v637
  %v639 = vpop.f32.mrf.mxu0
  %v640 = vadd.f32 %v607, %v639
  %v641 = vand.u32 %v477, 4294901760
  %642 = vmatmul.f32.gmra.mxu0 %v641
  %v643 = vpop.f32.mrf.mxu0
  %v644 = vadd.f32 %v613, %v643
  %645 = vdwg.mxu0
  %646 = vmatpush.msra.mxu0 0.0
  %647 = vmatpush.msra.mxu0 0.0
  %648 = vmatpush.msra.mxu0 0.0
  %649 = vmatpush.msra.mxu0 0.0
  %650 = vmatpush.msra.mxu0 0.0
  %651 = vmatpush.msra.mxu0 0.0
  %652 = vmatpush.msra.mxu0 0.0
  %653 = vmatpush.msra.mxu0 0.0
  %654 = vmatpush.msra.mxu0 0.0
  %655 = vmatpush.msra.mxu0 0.0
  %656 = vmatpush.msra.mxu0 0.0
  %657 = vmatpush.msra.mxu0 0.0
  %658 = vmatpush.msra.mxu0 0.0
  %659 = vmatpush.msra.mxu0 0.0
  %v660 = vand.u32 %v481, 4294901760
  %661 = vmatpush.msra.mxu0 %v660
  %v662 = vand.u32 %v456, 4294901760
  %663 = vmatpush.msra.mxu0 %v662
  %v664 = vand.u32 %v474, 4294901760
  %665 = vmatmul.f32.gmra.mxu0 %v664
  %v666 = vpop.f32.mrf.mxu0
  %v667 = vadd.f32 %v640, %v666
  %v668 = vand.u32 %v477, 4294901760
  %669 = vmatmul.f32.gmra.mxu0 %v668
  %v670 = vpop.f32.mrf.mxu0
  %v671 = vadd.f32 %v644, %v670
  %672 = vdwg.mxu0
  %vm673 = vcmp.ge.f32.partialorder %v667, 0.0
  %vm674 = vcmp.ge.f32.partialorder %v671, 0.0
  %v675 = vmul.f32 %v667, 0.01
  %v676 = vmul.f32 %v671, 0.01
  %v677 = vsel %vm673, %v667, %v675
  %v678 = vsel %vm674, %v671, %v676
  %v679 = vld [vmem:[%s6] sm:$0xff]
  %v680 = vld [vmem:[%s6 + $0x8] sm:$0xff]
  %v681 = vld [vmem:[%s7] sm:$0xff]
  %v682 = vld [vmem:[%s7 + $0x8] sm:$0xff]
  %684 = vset.pattern.permute.xlu0 0
  %685 = vperm.xlu0 %684, %v681
  %v686 = vpop.permute.xlu0 %685
  %689 = vset.pattern.permute.xlu0 0
  %690 = vperm.xlu0 %689, %v682
  %v691 = vpop.permute.xlu0 %690
  %vm693 = vcmask 113664
  %v695 = vsel %vm693, %v679, 0
  %v698 = vsel %vm693, %v680, 0
  %vm700 = vcmask 1045504
  %v702 = vsel %vm700, %v678, 0
  %704 = vmatpush.msra.mxu0 0.0
  %705 = vmatpush.msra.mxu0 0.0
  %706 = vmatpush.msra.mxu0 0.0
  %707 = vmatpush.msra.mxu0 0.0
  %708 = vmatpush.msra.mxu0 0.0
  %709 = vmatpush.msra.mxu0 0.0
  %710 = vmatpush.msra.mxu0 0.0
  %711 = vmatpush.msra.mxu0 0.0
  %712 = vmatpush.msra.mxu0 0.0
  %713 = vmatpush.msra.mxu0 0.0
  %714 = vmatpush.msra.mxu0 0.0
  %715 = vmatpush.msra.mxu0 0.0
  %716 = vmatpush.msra.mxu0 0.0
  %717 = vmatpush.msra.mxu0 0.0
  %v718 = vand.u32 %v702, 4294901760
  %719 = vmatpush.msra.mxu0 %v718
  %v720 = vand.u32 %v677, 4294901760
  %721 = vmatpush.msra.mxu0 %v720
  %v722 = vand.u32 %v695, 4294901760
  %v723 = vsub.f32 %v695, %v722
  %v724 = vand.u32 %v723, 4294901760
  %v725 = vsub.f32 %v723, %v724
  %v726 = vand.u32 %v725, 4294901760
  %727 = vmatmul.f32.gmra.mxu0 %v726
  %v728 = vpop.f32.mrf.mxu0
  %v729 = vadd.f32 %v686, %v728
  %v730 = vand.u32 %v698, 4294901760
  %v731 = vsub.f32 %v698, %v730
  %v732 = vand.u32 %v731, 4294901760
  %v733 = vsub.f32 %v731, %v732
  %v734 = vand.u32 %v733, 4294901760
  %735 = vmatmul.f32.gmra.mxu0 %v734
  %v736 = vpop.f32.mrf.mxu0
  %v737 = vadd.f32 %v691, %v736
  %738 = vdwg.mxu0
  %739 = vmatpush.msra.mxu0 0.0
  %740 = vmatpush.msra.mxu0 0.0
  %741 = vmatpush.msra.mxu0 0.0
  %742 = vmatpush.msra.mxu0 0.0
  %743 = vmatpush.msra.mxu0 0.0
  %744 = vmatpush.msra.mxu0 0.0
  %745 = vmatpush.msra.mxu0 0.0
  %746 = vmatpush.msra.mxu0 0.0
  %747 = vmatpush.msra.mxu0 0.0
  %748 = vmatpush.msra.mxu0 0.0
  %749 = vmatpush.msra.mxu0 0.0
  %750 = vmatpush.msra.mxu0 0.0
  %751 = vmatpush.msra.mxu0 0.0
  %752 = vmatpush.msra.mxu0 0.0
  %v753 = vand.u32 %v702, 4294901760
  %v754 = vsub.f32 %v702, %v753
  %v755 = vand.u32 %v754, 4294901760
  %v756 = vsub.f32 %v754, %v755
  %v757 = vand.u32 %v756, 4294901760
  %758 = vmatpush.msra.mxu0 %v757
  %v759 = vand.u32 %v677, 4294901760
  %v760 = vsub.f32 %v677, %v759
  %v761 = vand.u32 %v760, 4294901760
  %v762 = vsub.f32 %v760, %v761
  %v763 = vand.u32 %v762, 4294901760
  %764 = vmatpush.msra.mxu0 %v763
  %v765 = vand.u32 %v695, 4294901760
  %766 = vmatmul.f32.gmra.mxu0 %v765
  %v767 = vpop.f32.mrf.mxu0
  %v768 = vadd.f32 %v729, %v767
  %v769 = vand.u32 %v698, 4294901760
  %770 = vmatmul.f32.gmra.mxu0 %v769
  %v771 = vpop.f32.mrf.mxu0
  %v772 = vadd.f32 %v737, %v771
  %773 = vdwg.mxu0
  %774 = vmatpush.msra.mxu0 0.0
  %775 = vmatpush.msra.mxu0 0.0
  %776 = vmatpush.msra.mxu0 0.0
  %777 = vmatpush.msra.mxu0 0.0
  %778 = vmatpush.msra.mxu0 0.0
  %779 = vmatpush.msra.mxu0 0.0
  %780 = vmatpush.msra.mxu0 0.0
  %781 = vmatpush.msra.mxu0 0.0
  %782 = vmatpush.msra.mxu0 0.0
  %783 = vmatpush.msra.mxu0 0.0
  %784 = vmatpush.msra.mxu0 0.0
  %785 = vmatpush.msra.mxu0 0.0
  %786 = vmatpush.msra.mxu0 0.0
  %787 = vmatpush.msra.mxu0 0.0
  %v788 = vand.u32 %v702, 4294901760
  %v789 = vsub.f32 %v702, %v788
  %790 = vmatpush.msra.mxu0 %v789
  %v791 = vand.u32 %v677, 4294901760
  %v792 = vsub.f32 %v677, %v791
  %793 = vmatpush.msra.mxu0 %v792
  %v794 = vand.u32 %v695, 4294901760
  %v795 = vsub.f32 %v695, %v794
  %796 = vmatmul.f32.gmra.mxu0 %v795
  %v797 = vpop.f32.mrf.mxu0
  %v798 = vadd.f32 %v768, %v797
  %v799 = vand.u32 %v698, 4294901760
  %v800 = vsub.f32 %v698, %v799
  %801 = vmatmul.f32.gmra.mxu0 %v800
  %v802 = vpop.f32.mrf.mxu0
  %v803 = vadd.f32 %v772, %v802
  %804 = vdwg.mxu0
  %805 = vmatpush.msra.mxu0 0.0
  %806 = vmatpush.msra.mxu0 0.0
  %807 = vmatpush.msra.mxu0 0.0
  %808 = vmatpush.msra.mxu0 0.0
  %809 = vmatpush.msra.mxu0 0.0
  %810 = vmatpush.msra.mxu0 0.0
  %811 = vmatpush.msra.mxu0 0.0
  %812 = vmatpush.msra.mxu0 0.0
  %813 = vmatpush.msra.mxu0 0.0
  %814 = vmatpush.msra.mxu0 0.0
  %815 = vmatpush.msra.mxu0 0.0
  %816 = vmatpush.msra.mxu0 0.0
  %817 = vmatpush.msra.mxu0 0.0
  %818 = vmatpush.msra.mxu0 0.0
  %v819 = vand.u32 %v702, 4294901760
  %820 = vmatpush.msra.mxu0 %v819
  %v821 = vand.u32 %v677, 4294901760
  %822 = vmatpush.msra.mxu0 %v821
  %v823 = vand.u32 %v695, 4294901760
  %v824 = vsub.f32 %v695, %v823
  %v825 = vand.u32 %v824, 4294901760
  %826 = vmatmul.f32.gmra.mxu0 %v825
  %v827 = vpop.f32.mrf.mxu0
  %v828 = vadd.f32 %v798, %v827
  %v829 = vand.u32 %v698, 4294901760
  %v830 = vsub.f32 %v698, %v829
  %v831 = vand.u32 %v830, 4294901760
  %832 = vmatmul.f32.gmra.mxu0 %v831
  %v833 = vpop.f32.mrf.mxu0
  %v834 = vadd.f32 %v803, %v833
  %835 = vdwg.mxu0
  %836 = vmatpush.msra.mxu0 0.0
  %837 = vmatpush.msra.mxu0 0.0
  %838 = vmatpush.msra.mxu0 0.0
  %839 = vmatpush.msra.mxu0 0.0
  %840 = vmatpush.msra.mxu0 0.0
  %841 = vmatpush.msra.mxu0 0.0
  %842 = vmatpush.msra.mxu0 0.0
  %843 = vmatpush.msra.mxu0 0.0
  %844 = vmatpush.msra.mxu0 0.0
  %845 = vmatpush.msra.mxu0 0.0
  %846 = vmatpush.msra.mxu0 0.0
  %847 = vmatpush.msra.mxu0 0.0
  %848 = vmatpush.msra.mxu0 0.0
  %849 = vmatpush.msra.mxu0 0.0
  %v850 = vand.u32 %v702, 4294901760
  %v851 = vsub.f32 %v702, %v850
  %v852 = vand.u32 %v851, 4294901760
  %853 = vmatpush.msra.mxu0 %v852
  %v854 = vand.u32 %v677, 4294901760
  %v855 = vsub.f32 %v677, %v854
  %v856 = vand.u32 %v855, 4294901760
  %857 = vmatpush.msra.mxu0 %v856
  %v858 = vand.u32 %v695, 4294901760
  %859 = vmatmul.f32.gmra.mxu0 %v858
  %v860 = vpop.f32.mrf.mxu0
  %v861 = vadd.f32 %v828, %v860
  %v862 = vand.u32 %v698, 4294901760
  %863 = vmatmul.f32.gmra.mxu0 %v862
  %v864 = vpop.f32.mrf.mxu0
  %v865 = vadd.f32 %v834, %v864
  %866 = vdwg.mxu0
  %867 = vmatpush.msra.mxu0 0.0
  %868 = vmatpush.msra.mxu0 0.0
  %869 = vmatpush.msra.mxu0 0.0
  %870 = vmatpush.msra.mxu0 0.0
  %871 = vmatpush.msra.mxu0 0.0
  %872 = vmatpush.msra.mxu0 0.0
  %873 = vmatpush.msra.mxu0 0.0
  %874 = vmatpush.msra.mxu0 0.0
  %875 = vmatpush.msra.mxu0 0.0
  %876 = vmatpush.msra.mxu0 0.0
  %877 = vmatpush.msra.mxu0 0.0
  %878 = vmatpush.msra.mxu0 0.0
  %879 = vmatpush.msra.mxu0 0.0
  %880 = vmatpush.msra.mxu0 0.0
  %v881 = vand.u32 %v702, 4294901760
  %882 = vmatpush.msra.mxu0 %v881
  %v883 = vand.u32 %v677, 4294901760
  %884 = vmatpush.msra.mxu0 %v883
  %v885 = vand.u32 %v695, 4294901760
  %886 = vmatmul.f32.gmra.mxu0 %v885
  %v887 = vpop.f32.mrf.mxu0
  %v888 = vadd.f32 %v861, %v887
  %v889 = vand.u32 %v698, 4294901760
  %890 = vmatmul.f32.gmra.mxu0 %v889
  %v891 = vpop.f32.mrf.mxu0
  %v892 = vadd.f32 %v865, %v891
  %893 = vdwg.mxu0
  %v894 = vmax.f32 %v888, 0.0
  %v895 = vmax.f32 %v892, 0.0
  %v896 = vmin.f32 %v894, 1.0
  %v897 = vmin.f32 %v895, 1.0
  %vm898 = vcmask 523264
  %899 = vst.msk [vmem:[%s9] sm:$0xff] %vm898, %v896
  %900 = vst.msk [vmem:[%s9 + $0x8] sm:$0xff] %vm898, %v897
  // Predicated region
  $region38: #{forward.10} parent=0 // pred_check
    _
  $region39: #{forward.10} parent=0 // pred_check_branch
    %902 = sbr.rel (0) target = $region41
  $region40: #{forward.10} parent=0 // pred_region
    _
  $region41: #{forward.10} parent=0 // pred_fallthru
    _
  // Predicated region
  $region42: #{forward.10} parent=0 // pred_check
    _
  $region43: #{forward.10} parent=0 // pred_check_branch
    %904 = sbr.rel (0) target = $region45
  $region44: #{forward.10} parent=0 // pred_region
    _
  $region45: #{forward.10} parent=0 // pred_fallthru
    _

</llo_original>
